<compile_context>
chip_gen: v5e
topology: v5e:2x2
jax: 0.10.0
libtpu: 0.0.40
codegen_flags: <defaults>
</compile_context>

<pallas_src>
import functools

import jax
import jax.numpy as jnp
from jax.experimental import pallas as pl
from jax.experimental.pallas import tpu as pltpu


def _self_attention_kernel(embed_size, heads, mask_heads, block_n, lk_chunk,
                           q_ref, k_ref, v_ref, mask_ref,
                           wq_ref, bq_ref, wk_ref, bk_ref, wv_ref, bv_ref,
                           wo_ref, bo_ref,
                           o_ref):
    E, H, Bt = embed_size, heads, block_n
    Lq = q_ref.shape[1]
    Lk = k_ref.shape[1]
    Lv = v_ref.shape[1]
    cdt = q_ref.dtype            # matmul operand dtype (bf16 by default, or f32)

    # Collapse the batch block into the sublane dim so the MXU sees (Bt*L, E)
    # operands (leading-dim collapse; layout no-op when L % 8 == 0).
    q2 = q_ref[...].reshape(Bt * Lq, E)
    k2 = k_ref[...].reshape(Bt * Lk, E)
    v2 = v_ref[...].reshape(Bt * Lv, E)

    # One projection per tensor for ALL heads (3 big matmuls, f32 accumulation),
    # then ONE bulk cast to the operand dtype (review: not per head slice).
    # NOTE: the 1/sqrt(E) attention scale is already folded into wq/bq.
    qp = ((jnp.dot(q2, wq_ref[...], preferred_element_type=jnp.float32)
           + bq_ref[...]).astype(cdt).reshape(Bt, Lq, H * E))
    kp = ((jnp.dot(k2, wk_ref[...], preferred_element_type=jnp.float32)
           + bk_ref[...]).astype(cdt).reshape(Bt, Lk, H * E))
    vp = ((jnp.dot(v2, wv_ref[...], preferred_element_type=jnp.float32)
           + bv_ref[...]).astype(cdt).reshape(Bt, Lv, H * E))

    # Mask converted ONCE (int8 -> {0,1} f32) outside the head loop.  Since the
    # masked_fill value is 0, masking is a single multiply per element.
    maskf = (mask_ref[...] != 0).astype(jnp.float32)   # (Bt, mask_heads, Lq, Lk)

    acc = jnp.zeros((Bt, Lq, E), jnp.float32)
    # H is a small static constant -> unrolled Python loop.
    # TODO(synk): for large H, collapse this loop into one batched dot_general
    # with (Bt, H) batch dims to cut MXU push/drain latency further.
    for h in range(H):
        lo = h * E
        qh = qp[:, :, lo:lo + E]                       # (Bt, Lq, E) in cdt
        mh = h if mask_heads == H else 0
        # Tile the key/value length so the (Bt, Lq, chunk) energy tile stays
        # bounded (matters for long sequences on v7x's 64 MiB VMEM).
        for c0 in range(0, Lk, lk_chunk):
            c1 = min(c0 + lk_chunk, Lk)
            kh = kp[:, c0:c1, lo:lo + E]               # (Bt, ck, E)
            vh = vp[:, c0:c1, lo:lo + E]               # (Bt, ck, E)

            # energy[b,q,k] = sum_d qh[b,q,d] * kh[b,k,d]  (no explicit transpose)
            energy = jax.lax.dot_general(
                qh, kh, (((2,), (2,)), ((0,), (0,))),
                preferred_element_type=jnp.float32)    # (Bt, Lq, ck) f32

            att = energy * maskf[:, mh, :, c0:c1]      # masked_fill(mask==0, 0.)

            # out_h = att @ vp_h, summed over heads (== out.sum(2) in reference)
            acc = acc + jax.lax.dot_general(
                att.astype(cdt), vh, (((2,), (1,)), ((0,), (0,))),
                preferred_element_type=jnp.float32)    # (Bt, Lq, E) f32

    out = (jnp.dot(acc.reshape(Bt * Lq, E).astype(cdt), wo_ref[...],
                   preferred_element_type=jnp.float32) + bo_ref[...])
    o_ref[...] = out.astype(o_ref.dtype)               # lane-dense (Bt*Lq, E) store


def _default_num_cores():
    """2 TensorCores per device on v7x / v4 / v5p (megacore); 1 on v5e / v6e."""
    try:
        kind = jax.devices()[0].device_kind.lower()
    except Exception:
        return 1
    if any(s in kind for s in ("v7", "7x", "v4", "v5p")):
        return 2
    return 1


def _pick_block_n(n, lq, num_cores, target_rows=256):
    """Largest divisor Bt of n with ~target_rows flattened MXU rows per step.
    On multi-TensorCore chips also require the step count to split evenly."""
    cap = max(1, min(n, target_rows // max(lq, 1)))

    def best(require_even_split):
        b = 0
        for bt in range(1, cap + 1):
            if n % bt:
                continue
            if require_even_split and (n // bt) % num_cores:
                continue
            b = bt
        return b

    if num_cores > 1:
        b = best(True)
        if b:
            return b
    return max(1, best(False))


def _physical_vmem_bytes():
    try:
        info = pltpu.get_tpu_info()
        return int(getattr(info, "vmem_capacity_bytes", 64 << 20))
    except Exception:
        return 64 << 20          # conservative (v7x per-TC VMEM)


def _estimate_vmem_bytes(Bt, Lq, Lk, Lv, E, H, mask_heads,
                         cdt_bytes, out_bytes, lk_chunk):
    io = 2 * Bt * (Lq + Lk + Lv) * E * cdt_bytes          # q/k/v (double buffered)
    io += 2 * Bt * mask_heads * Lq * Lk                   # int8 mask
    io += 2 * Bt * Lq * E * out_bytes                     # output
    w = 2 * ((3 * E * H * E + E * E) * cdt_bytes + (3 * H * E + E) * 4)
    inter = 3 * Bt * max(Lq, Lk, Lv) * H * E * (cdt_bytes + 4)   # qp/kp/vp (+f32 transient)
    inter += Bt * mask_heads * Lq * Lk * 4                       # f32 mask
    inter += 2 * Bt * Lq * lk_chunk * 4                          # energy + att
    inter += Bt * Lq * E * 4                                     # acc
    return io + w + inter


def self_attention_pallas(values, keys, query, mask, params, *,
                          embed_size, heads, block_n=None, use_bf16=True,
                          out_dtype=jnp.float32, lk_chunk=512):
    """values/keys/query: (N, L, E); mask: (N, 1 or H, Lq, Lk) int-like {0,1};
    returns (N, Lq, E) in `out_dtype` (set bf16 if consumers accept it).
    The PyTorch `pos` argument is unused by the reference computation."""
    N, Lq, E = query.shape
    Lk = keys.shape[1]
    Lv = values.shape[1]
    H = heads
    assert E == embed_size and Lk == Lv

    wq, bq, wk, bk, wv, bv, wo, bo = params

    # Fold the 1/sqrt(E) attention scale into the query projection (free; valid
    # because the masked fill value is 0).
    scale = 1.0 / (E ** 0.5)
    wq = wq * scale
    bq = bq * scale

    # Biases stay f32 rows (they add into f32 accumulators even on bf16 path).
    bq2 = bq.reshape(1, E * H).astype(jnp.float32)
    bk2 = bk.reshape(1, E * H).astype(jnp.float32)
    bv2 = bv.reshape(1, E * H).astype(jnp.float32)
    bo2 = bo.reshape(1, E).astype(jnp.float32)

    # Compact mask: int8, NOT pre-broadcast over heads.
    mask_heads = mask.shape[1]
    assert mask_heads in (1, H)
    mask_i8 = mask.astype(jnp.int8)

    cdt = jnp.bfloat16 if use_bf16 else jnp.float32
    q_in = query.astype(cdt)
    k_in = keys.astype(cdt)
    v_in = values.astype(cdt)
    wq_in, wk_in, wv_in, wo_in = (w.astype(cdt) for w in (wq, wk, wv, wo))

    num_cores = _default_num_cores()
    Bt = block_n if block_n is not None else _pick_block_n(N, Lq, num_cores)
    assert N % Bt == 0
    lk_eff = max(1, min(lk_chunk, Lk))

    cdt_bytes = jnp.dtype(cdt).itemsize
    out_bytes = jnp.dtype(out_dtype).itemsize
    est = _estimate_vmem_bytes(Bt, Lq, Lk, Lv, E, H, mask_heads,
                               cdt_bytes, out_bytes, lk_eff)
    phys = _physical_vmem_bytes()
    vmem_limit = int(min(0.75 * phys, max(32 << 20, 1.5 * est)))

    kernel = functools.partial(_self_attention_kernel, E, H, mask_heads, Bt, lk_eff)

    def build_call(weight_mode):
        def wspec(shape):
            nd = len(shape)
            imap = lambda n: (0,) * nd
            if weight_mode is None:
                return pl.BlockSpec(shape, imap)
            return pl.BlockSpec(shape, imap, pipeline_mode=weight_mode)

        grid_spec = pltpu.PrefetchScalarGridSpec(
            num_scalar_prefetch=0,
            grid=(N // Bt,),
            in_specs=[
                pl.BlockSpec((Bt, Lq, E), lambda n: (n, 0, 0)),                  # query
                pl.BlockSpec((Bt, Lk, E), lambda n: (n, 0, 0)),                  # keys
                pl.BlockSpec((Bt, Lv, E), lambda n: (n, 0, 0)),                  # values
                pl.BlockSpec((Bt, mask_heads, Lq, Lk), lambda n: (n, 0, 0, 0)),  # mask
                wspec((E, E * H)), wspec((1, E * H)),                            # Wq, bq
                wspec((E, E * H)), wspec((1, E * H)),                            # Wk, bk
                wspec((E, E * H)), wspec((1, E * H)),                            # Wv, bv
                wspec((E, E)), wspec((1, E)),                                    # Wo, bo
            ],
            # Lane-dense 2-D output slab: (N*Lq, E) with E = 128 in the demo.
            out_specs=pl.BlockSpec((Bt * Lq, E), lambda n: (n, 0)),
        )
        out = pl.pallas_call(
            kernel,
            out_shape=jax.ShapeDtypeStruct((N * Lq, E), out_dtype),
            grid_spec=grid_spec,
            compiler_params=pltpu.CompilerParams(
                dimension_semantics=("parallel",),
                vmem_limit_bytes=vmem_limit),
        )(q_in, k_in, v_in, mask_i8,
          wq_in, bq2, wk_in, bk2, wv_in, bv2, wo_in, bo2)
        return jax.block_until_ready(out)

    try:
        # Weights/biases have grid-constant block indices: single-buffer them to
        # free VMEM (lets Bt grow).  Fall back to default buffering if this
        # pipeline_mode is not supported by the installed JAX/Mosaic.
        out2d = build_call(pl.Buffered(1))
    except Exception:
        out2d = build_call(None)

    return out2d.reshape(N, Lq, E)


def self_attention_reference(values, keys, query, mask, params, *, embed_size, heads):
    """Pure-JAX transcription of the PyTorch forward (for verification)."""
    wq, bq, wk, bk, wv, bv, wo, bo = params
    N, Lq, E = query.shape
    Lk, Lv = keys.shape[1], values.shape[1]
    H = heads
    vp = (values @ wv + bv).reshape(N, Lv, H, E)
    kp = (keys @ wk + bk).reshape(N, Lk, H, E)
    qp = (query @ wq + bq).reshape(N, Lq, H, E)
    energy = jnp.einsum('nqhd,nkhd->nhqk', qp, kp)
    energy = jnp.where(mask == 0, 0.0, energy)
    att = energy / (E ** 0.5)
    out = jnp.einsum('nhql,nlhd->nqhd', att, vp)
    out = out.sum(2)
    return out @ wo + bo


if __name__ == "__main__":
    EMBED = 128     # head_dim == embed_size in this module; 128 = lane width
    HEADS = 2
    N = 8
    SEQ = 16

    key = jax.random.PRNGKey(0)
    ks = jax.random.split(key, 12)

    # Deterministic synthetic parameters (Linear weights stored as (in, out)).
    wscale = 1.0 / (EMBED ** 0.5)
    wq = jax.random.uniform(ks[0], (EMBED, EMBED * HEADS), jnp.float32, -wscale, wscale)
    bq = jax.random.uniform(ks[1], (EMBED * HEADS,), jnp.float32, -wscale, wscale)
    wk = jax.random.uniform(ks[2], (EMBED, EMBED * HEADS), jnp.float32, -wscale, wscale)
    bk = jax.random.uniform(ks[3], (EMBED * HEADS,), jnp.float32, -wscale, wscale)
    wv = jax.random.uniform(ks[4], (EMBED, EMBED * HEADS), jnp.float32, -wscale, wscale)
    bv = jax.random.uniform(ks[5], (EMBED * HEADS,), jnp.float32, -wscale, wscale)
    wo = jax.random.uniform(ks[6], (EMBED, EMBED), jnp.float32, -wscale, wscale)
    bo = jax.random.uniform(ks[7], (EMBED,), jnp.float32, -wscale, wscale)
    params = (wq, bq, wk, bk, wv, bv, wo, bo)

    values = jax.random.normal(ks[8], (N, SEQ, EMBED), jnp.float32)
    keys_in = jax.random.normal(ks[9], (N, SEQ, EMBED), jnp.float32)
    query = jax.random.normal(ks[10], (N, SEQ, EMBED), jnp.float32)
    # Mask NOT pre-broadcast over heads: (N, 1, Lq, Lk), int8 {0, 1}.
    mask = (jax.random.uniform(ks[11], (N, 1, SEQ, SEQ)) > 0.2).astype(jnp.int8)
    # `pos` argument of the PyTorch forward is unused by the computation.

    ref = self_attention_reference(values, keys_in, query, mask, params,
                                   embed_size=EMBED, heads=HEADS)

    # Default path: bf16 matmul operands (v5e/v6e/v7x MXU rate), f32 accumulation.
    out_bf16 = self_attention_pallas(values, keys_in, query, mask, params,
                                     embed_size=EMBED, heads=HEADS)
    out_bf16 = jax.block_until_ready(out_bf16)
    tol = 0.05 * float(jnp.max(jnp.abs(ref))) + 0.05
    if not jnp.allclose(out_bf16, ref, atol=tol, rtol=0.05):
        raise AssertionError("Pallas kernel (bf16 default) output does not match reference")

    # Full-f32 operand path: tight check against the pure-JAX reference.
    out_f32 = self_attention_pallas(values, keys_in, query, mask, params,
                                    embed_size=EMBED, heads=HEADS, use_bf16=False)
    out_f32 = jax.block_until_ready(out_f32)
    if not jnp.allclose(out_f32, ref, atol=2e-3, rtol=2e-3):
        raise AssertionError("Pallas kernel (f32) output does not match reference")

    print("KERNEL_OK")
</pallas_src>

<mosaic_0001>
module attributes {stable_mosaic.version = 11 : i64} {
  func.func @_self_attention_kernel(%arg0: i32, %arg1: memref<8x16x128xbf16, #tpu.memory_space<vmem>>, %arg2: memref<8x16x128xbf16, #tpu.memory_space<vmem>>, %arg3: memref<8x16x128xbf16, #tpu.memory_space<vmem>>, %arg4: memref<8x1x16x16xi8, #tpu.memory_space<vmem>>, %arg5: memref<128x256xbf16, #tpu.memory_space<vmem>>, %arg6: memref<1x256xf32, #tpu.memory_space<vmem>>, %arg7: memref<128x256xbf16, #tpu.memory_space<vmem>>, %arg8: memref<1x256xf32, #tpu.memory_space<vmem>>, %arg9: memref<128x256xbf16, #tpu.memory_space<vmem>>, %arg10: memref<1x256xf32, #tpu.memory_space<vmem>>, %arg11: memref<128x128xbf16, #tpu.memory_space<vmem>>, %arg12: memref<1x128xf32, #tpu.memory_space<vmem>>, %arg13: memref<128x128xf32, #tpu.memory_space<vmem>>) attributes {dimension_semantics = [#tpu.dimension_semantics<parallel>], iteration_bounds = array<i64: 1>, scalar_prefetch = 0 : i64, scratch_operands = 0 : i64, tpu.core_type = #tpu.core_type<tc>, window_params = [{transform_indices = @transform_0, window_bounds = array<i64: 8, 16, 128>}, {transform_indices = @transform_1, window_bounds = array<i64: 8, 16, 128>}, {transform_indices = @transform_2, window_bounds = array<i64: 8, 16, 128>}, {transform_indices = @transform_3, window_bounds = array<i64: 8, 1, 16, 16>}, {pipeline_mode = #tpu.pipeline_mode<synchronous>, transform_indices = @transform_4, window_bounds = array<i64: 128, 256>}, {pipeline_mode = #tpu.pipeline_mode<synchronous>, transform_indices = @transform_5, window_bounds = array<i64: 1, 256>}, {pipeline_mode = #tpu.pipeline_mode<synchronous>, transform_indices = @transform_6, window_bounds = array<i64: 128, 256>}, {pipeline_mode = #tpu.pipeline_mode<synchronous>, transform_indices = @transform_7, window_bounds = array<i64: 1, 256>}, {pipeline_mode = #tpu.pipeline_mode<synchronous>, transform_indices = @transform_8, window_bounds = array<i64: 128, 256>}, {pipeline_mode = #tpu.pipeline_mode<synchronous>, transform_indices = @transform_9, window_bounds = array<i64: 1, 256>}, {pipeline_mode = #tpu.pipeline_mode<synchronous>, transform_indices = @transform_10, window_bounds = array<i64: 128, 128>}, {pipeline_mode = #tpu.pipeline_mode<synchronous>, transform_indices = @transform_11, window_bounds = array<i64: 1, 128>}, {transform_indices = @transform_12, window_bounds = array<i64: 128, 128>}]} {
    %c0 = arith.constant 0 : index
    %c0_0 = arith.constant 0 : index
    %c0_1 = arith.constant 0 : index
    %0 = vector.load %arg1[%c0, %c0_0, %c0_1] : memref<8x16x128xbf16, #tpu.memory_space<vmem>>, vector<8x16x128xbf16>
    %1 = vector.shape_cast %0 : vector<8x16x128xbf16> to vector<128x128xbf16>
    %c0_2 = arith.constant 0 : index
    %c0_3 = arith.constant 0 : index
    %c0_4 = arith.constant 0 : index
    %2 = vector.load %arg2[%c0_2, %c0_3, %c0_4] : memref<8x16x128xbf16, #tpu.memory_space<vmem>>, vector<8x16x128xbf16>
    %3 = vector.shape_cast %2 : vector<8x16x128xbf16> to vector<128x128xbf16>
    %c0_5 = arith.constant 0 : index
    %c0_6 = arith.constant 0 : index
    %c0_7 = arith.constant 0 : index
    %4 = vector.load %arg3[%c0_5, %c0_6, %c0_7] : memref<8x16x128xbf16, #tpu.memory_space<vmem>>, vector<8x16x128xbf16>
    %5 = vector.shape_cast %4 : vector<8x16x128xbf16> to vector<128x128xbf16>
    %c0_8 = arith.constant 0 : index
    %c0_9 = arith.constant 0 : index
    %6 = vector.load %arg5[%c0_8, %c0_9] : memref<128x256xbf16, #tpu.memory_space<vmem>>, vector<128x256xbf16>
    %cst = arith.constant dense<0.000000e+00> : vector<128x256xf32>
    %7 = tpu.matmul %1, %6, %cst {dimension_numbers = #tpu.dot_dimension_numbers<[1], [0], [0], [1], [0, 0, 1, 1], [], []>} : vector<128x128xbf16>, vector<128x256xbf16>, vector<128x256xf32> -> vector<128x256xf32>
    %c0_10 = arith.constant 0 : index
    %c0_11 = arith.constant 0 : index
    %8 = vector.load %arg6[%c0_10, %c0_11] : memref<1x256xf32, #tpu.memory_space<vmem>>, vector<1x256xf32>
    %9 = vector.broadcast %8 : vector<1x256xf32> to vector<128x256xf32>
    %10 = arith.addf %7, %9 : vector<128x256xf32>
    %11 = arith.truncf %10 : vector<128x256xf32> to vector<128x256xbf16>
    %12 = vector.shape_cast %11 : vector<128x256xbf16> to vector<8x16x256xbf16>
    %c0_12 = arith.constant 0 : index
    %c0_13 = arith.constant 0 : index
    %13 = vector.load %arg7[%c0_12, %c0_13] : memref<128x256xbf16, #tpu.memory_space<vmem>>, vector<128x256xbf16>
    %cst_14 = arith.constant dense<0.000000e+00> : vector<128x256xf32>
    %14 = tpu.matmul %3, %13, %cst_14 {dimension_numbers = #tpu.dot_dimension_numbers<[1], [0], [0], [1], [0, 0, 1, 1], [], []>} : vector<128x128xbf16>, vector<128x256xbf16>, vector<128x256xf32> -> vector<128x256xf32>
    %c0_15 = arith.constant 0 : index
    %c0_16 = arith.constant 0 : index
    %15 = vector.load %arg8[%c0_15, %c0_16] : memref<1x256xf32, #tpu.memory_space<vmem>>, vector<1x256xf32>
    %16 = vector.broadcast %15 : vector<1x256xf32> to vector<128x256xf32>
    %17 = arith.addf %14, %16 : vector<128x256xf32>
    %18 = arith.truncf %17 : vector<128x256xf32> to vector<128x256xbf16>
    %19 = vector.shape_cast %18 : vector<128x256xbf16> to vector<8x16x256xbf16>
    %c0_17 = arith.constant 0 : index
    %c0_18 = arith.constant 0 : index
    %20 = vector.load %arg9[%c0_17, %c0_18] : memref<128x256xbf16, #tpu.memory_space<vmem>>, vector<128x256xbf16>
    %cst_19 = arith.constant dense<0.000000e+00> : vector<128x256xf32>
    %21 = tpu.matmul %5, %20, %cst_19 {dimension_numbers = #tpu.dot_dimension_numbers<[1], [0], [0], [1], [0, 0, 1, 1], [], []>} : vector<128x128xbf16>, vector<128x256xbf16>, vector<128x256xf32> -> vector<128x256xf32>
    %c0_20 = arith.constant 0 : index
    %c0_21 = arith.constant 0 : index
    %22 = vector.load %arg10[%c0_20, %c0_21] : memref<1x256xf32, #tpu.memory_space<vmem>>, vector<1x256xf32>
    %23 = vector.broadcast %22 : vector<1x256xf32> to vector<128x256xf32>
    %24 = arith.addf %21, %23 : vector<128x256xf32>
    %25 = arith.truncf %24 : vector<128x256xf32> to vector<128x256xbf16>
    %26 = vector.shape_cast %25 : vector<128x256xbf16> to vector<8x16x256xbf16>
    %c0_22 = arith.constant 0 : index
    %c0_23 = arith.constant 0 : index
    %c0_24 = arith.constant 0 : index
    %c0_25 = arith.constant 0 : index
    %27 = vector.load %arg4[%c0_22, %c0_23, %c0_24, %c0_25] : memref<8x1x16x16xi8, #tpu.memory_space<vmem>>, vector<8x1x16x16xi8>
    %c0_i8 = arith.constant 0 : i8
    %28 = vector.broadcast %c0_i8 : i8 to vector<8x1x16x16xi8>
    %29 = arith.cmpi ne, %27, %28 : vector<8x1x16x16xi8>
    %30 = arith.extui %29 : vector<8x1x16x16xi1> to vector<8x1x16x16xi32>
    %31 = arith.sitofp %30 : vector<8x1x16x16xi32> to vector<8x1x16x16xf32>
    %cst_26 = arith.constant 0.000000e+00 : f32
    %32 = vector.broadcast %cst_26 : f32 to vector<8x16x128xf32>
    %33 = vector.extract_strided_slice %12 {offsets = [0, 0, 0], sizes = [8, 16, 128], strides = [1, 1, 1]} : vector<8x16x256xbf16> to vector<8x16x128xbf16>
    %34 = vector.extract_strided_slice %19 {offsets = [0, 0, 0], sizes = [8, 16, 128], strides = [1, 1, 1]} : vector<8x16x256xbf16> to vector<8x16x128xbf16>
    %35 = vector.extract_strided_slice %26 {offsets = [0, 0, 0], sizes = [8, 16, 128], strides = [1, 1, 1]} : vector<8x16x256xbf16> to vector<8x16x128xbf16>
    %cst_27 = arith.constant dense<0.000000e+00> : vector<8x16x16xf32>
    %36 = tpu.matmul %33, %34, %cst_27 {dimension_numbers = #tpu.dot_dimension_numbers<[2], [2], [1], [1], [0, 0, 0, 1, 1, 1], [0], [0]>} : vector<8x16x128xbf16>, vector<8x16x128xbf16>, vector<8x16x16xf32> -> vector<8x16x16xf32>
    %37 = vector.shape_cast %31 : vector<8x1x16x16xf32> to vector<8x16x16xf32>
    %38 = arith.mulf %36, %37 : vector<8x16x16xf32>
    %39 = arith.truncf %38 : vector<8x16x16xf32> to vector<8x16x16xbf16>
    %cst_28 = arith.constant dense<0.000000e+00> : vector<8x16x128xf32>
    %40 = tpu.matmul %39, %35, %cst_28 {dimension_numbers = #tpu.dot_dimension_numbers<[2], [1], [1], [2], [0, 0, 0, 1, 1, 2], [0], [0]>} : vector<8x16x16xbf16>, vector<8x16x128xbf16>, vector<8x16x128xf32> -> vector<8x16x128xf32>
    %41 = arith.addf %32, %40 : vector<8x16x128xf32>
    %42 = vector.extract_strided_slice %12 {offsets = [0, 0, 128], sizes = [8, 16, 128], strides = [1, 1, 1]} : vector<8x16x256xbf16> to vector<8x16x128xbf16>
    %43 = vector.extract_strided_slice %19 {offsets = [0, 0, 128], sizes = [8, 16, 128], strides = [1, 1, 1]} : vector<8x16x256xbf16> to vector<8x16x128xbf16>
    %44 = vector.extract_strided_slice %26 {offsets = [0, 0, 128], sizes = [8, 16, 128], strides = [1, 1, 1]} : vector<8x16x256xbf16> to vector<8x16x128xbf16>
    %cst_29 = arith.constant dense<0.000000e+00> : vector<8x16x16xf32>
    %45 = tpu.matmul %42, %43, %cst_29 {dimension_numbers = #tpu.dot_dimension_numbers<[2], [2], [1], [1], [0, 0, 0, 1, 1, 1], [0], [0]>} : vector<8x16x128xbf16>, vector<8x16x128xbf16>, vector<8x16x16xf32> -> vector<8x16x16xf32>
    %46 = vector.shape_cast %31 : vector<8x1x16x16xf32> to vector<8x16x16xf32>
    %47 = arith.mulf %45, %46 : vector<8x16x16xf32>
    %48 = arith.truncf %47 : vector<8x16x16xf32> to vector<8x16x16xbf16>
    %cst_30 = arith.constant dense<0.000000e+00> : vector<8x16x128xf32>
    %49 = tpu.matmul %48, %44, %cst_30 {dimension_numbers = #tpu.dot_dimension_numbers<[2], [1], [1], [2], [0, 0, 0, 1, 1, 2], [0], [0]>} : vector<8x16x16xbf16>, vector<8x16x128xbf16>, vector<8x16x128xf32> -> vector<8x16x128xf32>
    %50 = arith.addf %41, %49 : vector<8x16x128xf32>
    %51 = vector.shape_cast %50 : vector<8x16x128xf32> to vector<128x128xf32>
    %52 = arith.truncf %51 : vector<128x128xf32> to vector<128x128xbf16>
    %c0_31 = arith.constant 0 : index
    %c0_32 = arith.constant 0 : index
    %53 = vector.load %arg11[%c0_31, %c0_32] : memref<128x128xbf16, #tpu.memory_space<vmem>>, vector<128x128xbf16>
    %cst_33 = arith.constant dense<0.000000e+00> : vector<128x128xf32>
    %54 = tpu.matmul %52, %53, %cst_33 {dimension_numbers = #tpu.dot_dimension_numbers<[1], [0], [0], [1], [0, 0, 1, 1], [], []>} : vector<128x128xbf16>, vector<128x128xbf16>, vector<128x128xf32> -> vector<128x128xf32>
    %c0_34 = arith.constant 0 : index
    %c0_35 = arith.constant 0 : index
    %55 = vector.load %arg12[%c0_34, %c0_35] : memref<1x128xf32, #tpu.memory_space<vmem>>, vector<1x128xf32>
    %56 = vector.broadcast %55 : vector<1x128xf32> to vector<128x128xf32>
    %57 = arith.addf %54, %56 : vector<128x128xf32>
    %c0_36 = arith.constant 0 : index
    %c0_37 = arith.constant 0 : index
    %58 = vector.load %arg13[%c0_36, %c0_37] : memref<128x128xf32, #tpu.memory_space<vmem>>, vector<128x128xf32>
    tpu.vector_store %arg13[%c0_36, %c0_37], %57 {strides = array<i32>} : memref<128x128xf32, #tpu.memory_space<vmem>>, vector<128x128xf32>,
    return
  }
  func.func @transform_0(%arg0: i32) -> (i32, i32, i32) {
    %c0_i32 = arith.constant 0 : i32
    %c0_i32_0 = arith.constant 0 : i32
    %c0_i32_1 = arith.constant 0 : i32
    return %arg0, %c0_i32, %c0_i32_0 : i32, i32, i32
  }
  func.func @transform_1(%arg0: i32) -> (i32, i32, i32) {
    %c0_i32 = arith.constant 0 : i32
    %c0_i32_0 = arith.constant 0 : i32
    %c0_i32_1 = arith.constant 0 : i32
    return %arg0, %c0_i32, %c0_i32_0 : i32, i32, i32
  }
  func.func @transform_2(%arg0: i32) -> (i32, i32, i32) {
    %c0_i32 = arith.constant 0 : i32
    %c0_i32_0 = arith.constant 0 : i32
    %c0_i32_1 = arith.constant 0 : i32
    return %arg0, %c0_i32, %c0_i32_0 : i32, i32, i32
  }
  func.func @transform_3(%arg0: i32) -> (i32, i32, i32, i32) {
    %c0_i32 = arith.constant 0 : i32
    %c0_i32_0 = arith.constant 0 : i32
    %c0_i32_1 = arith.constant 0 : i32
    %c0_i32_2 = arith.constant 0 : i32
    return %arg0, %c0_i32, %c0_i32_0, %c0_i32_1 : i32, i32, i32, i32
  }
  func.func @transform_4(%arg0: i32) -> (i32, i32) {
    %c0_i32 = arith.constant 0 : i32
    %c0_i32_0 = arith.constant 0 : i32
    %c0_i32_1 = arith.constant 0 : i32
    return %c0_i32, %c0_i32_0 : i32, i32
  }
  func.func @transform_5(%arg0: i32) -> (i32, i32) {
    %c0_i32 = arith.constant 0 : i32
    %c0_i32_0 = arith.constant 0 : i32
    %c0_i32_1 = arith.constant 0 : i32
    return %c0_i32, %c0_i32_0 : i32, i32
  }
  func.func @transform_6(%arg0: i32) -> (i32, i32) {
    %c0_i32 = arith.constant 0 : i32
    %c0_i32_0 = arith.constant 0 : i32
    %c0_i32_1 = arith.constant 0 : i32
    return %c0_i32, %c0_i32_0 : i32, i32
  }
  func.func @transform_7(%arg0: i32) -> (i32, i32) {
    %c0_i32 = arith.constant 0 : i32
    %c0_i32_0 = arith.constant 0 : i32
    %c0_i32_1 = arith.constant 0 : i32
    return %c0_i32, %c0_i32_0 : i32, i32
  }
  func.func @transform_8(%arg0: i32) -> (i32, i32) {
    %c0_i32 = arith.constant 0 : i32
    %c0_i32_0 = arith.constant 0 : i32
    %c0_i32_1 = arith.constant 0 : i32
    return %c0_i32, %c0_i32_0 : i32, i32
  }
  func.func @transform_9(%arg0: i32) -> (i32, i32) {
    %c0_i32 = arith.constant 0 : i32
    %c0_i32_0 = arith.constant 0 : i32
    %c0_i32_1 = arith.constant 0 : i32
    return %c0_i32, %c0_i32_0 : i32, i32
  }
  func.func @transform_10(%arg0: i32) -> (i32, i32) {
    %c0_i32 = arith.constant 0 : i32
    %c0_i32_0 = arith.constant 0 : i32
    %c0_i32_1 = arith.constant 0 : i32
    return %c0_i32, %c0_i32_0 : i32, i32
  }
  func.func @transform_11(%arg0: i32) -> (i32, i32) {
    %c0_i32 = arith.constant 0 : i32
    %c0_i32_0 = arith.constant 0 : i32
    %c0_i32_1 = arith.constant 0 : i32
    return %c0_i32, %c0_i32_0 : i32, i32
  }
  func.func @transform_12(%arg0: i32) -> (i32, i32) {
    %c0_i32 = arith.constant 0 : i32
    %c0_i32_0 = arith.constant 0 : i32
    return %arg0, %c0_i32 : i32, i32
  }
}

module attributes {stable_mosaic.version = 11 : i64} {
  func.func @_self_attention_kernel(%arg0: i32, %arg1: memref<8x16x128xbf16, #tpu.memory_space<vmem>>, %arg2: memref<8x16x128xbf16, #tpu.memory_space<vmem>>, %arg3: memref<8x16x128xbf16, #tpu.memory_space<vmem>>, %arg4: memref<8x1x16x16xi8, #tpu.memory_space<vmem>>, %arg5: memref<128x256xbf16, #tpu.memory_space<vmem>>, %arg6: memref<1x256xf32, #tpu.memory_space<vmem>>, %arg7: memref<128x256xbf16, #tpu.memory_space<vmem>>, %arg8: memref<1x256xf32, #tpu.memory_space<vmem>>, %arg9: memref<128x256xbf16, #tpu.memory_space<vmem>>, %arg10: memref<1x256xf32, #tpu.memory_space<vmem>>, %arg11: memref<128x128xbf16, #tpu.memory_space<vmem>>, %arg12: memref<1x128xf32, #tpu.memory_space<vmem>>, %arg13: memref<128x128xf32, #tpu.memory_space<vmem>>) attributes {dimension_semantics = [#tpu.dimension_semantics<parallel>], iteration_bounds = array<i64: 1>, scalar_prefetch = 0 : i64, scratch_operands = 0 : i64, tpu.core_type = #tpu.core_type<tc>, window_params = [{transform_indices = @transform_0, window_bounds = array<i64: 8, 16, 128>}, {transform_indices = @transform_1, window_bounds = array<i64: 8, 16, 128>}, {transform_indices = @transform_2, window_bounds = array<i64: 8, 16, 128>}, {transform_indices = @transform_3, window_bounds = array<i64: 8, 1, 16, 16>}, {pipeline_mode = #tpu.pipeline_mode<synchronous>, transform_indices = @transform_4, window_bounds = array<i64: 128, 256>}, {pipeline_mode = #tpu.pipeline_mode<synchronous>, transform_indices = @transform_5, window_bounds = array<i64: 1, 256>}, {pipeline_mode = #tpu.pipeline_mode<synchronous>, transform_indices = @transform_6, window_bounds = array<i64: 128, 256>}, {pipeline_mode = #tpu.pipeline_mode<synchronous>, transform_indices = @transform_7, window_bounds = array<i64: 1, 256>}, {pipeline_mode = #tpu.pipeline_mode<synchronous>, transform_indices = @transform_8, window_bounds = array<i64: 128, 256>}, {pipeline_mode = #tpu.pipeline_mode<synchronous>, transform_indices = @transform_9, window_bounds = array<i64: 1, 256>}, {pipeline_mode = #tpu.pipeline_mode<synchronous>, transform_indices = @transform_10, window_bounds = array<i64: 128, 128>}, {pipeline_mode = #tpu.pipeline_mode<synchronous>, transform_indices = @transform_11, window_bounds = array<i64: 1, 128>}, {transform_indices = @transform_12, window_bounds = array<i64: 128, 128>}]} {
    %c0 = arith.constant 0 : index
    %c0_0 = arith.constant 0 : index
    %c0_1 = arith.constant 0 : index
    %0 = vector.load %arg1[%c0, %c0_0, %c0_1] : memref<8x16x128xbf16, #tpu.memory_space<vmem>>, vector<8x16x128xbf16>
    %1 = vector.shape_cast %0 : vector<8x16x128xbf16> to vector<128x128xbf16>
    %c0_2 = arith.constant 0 : index
    %c0_3 = arith.constant 0 : index
    %c0_4 = arith.constant 0 : index
    %2 = vector.load %arg2[%c0_2, %c0_3, %c0_4] : memref<8x16x128xbf16, #tpu.memory_space<vmem>>, vector<8x16x128xbf16>
    %3 = vector.shape_cast %2 : vector<8x16x128xbf16> to vector<128x128xbf16>
    %c0_5 = arith.constant 0 : index
    %c0_6 = arith.constant 0 : index
    %c0_7 = arith.constant 0 : index
    %4 = vector.load %arg3[%c0_5, %c0_6, %c0_7] : memref<8x16x128xbf16, #tpu.memory_space<vmem>>, vector<8x16x128xbf16>
    %5 = vector.shape_cast %4 : vector<8x16x128xbf16> to vector<128x128xbf16>
    %c0_8 = arith.constant 0 : index
    %c0_9 = arith.constant 0 : index
    %6 = vector.load %arg5[%c0_8, %c0_9] : memref<128x256xbf16, #tpu.memory_space<vmem>>, vector<128x256xbf16>
    %cst = arith.constant dense<0.000000e+00> : vector<128x256xf32>
    %7 = tpu.matmul %1, %6, %cst {dimension_numbers = #tpu.dot_dimension_numbers<[1], [0], [0], [1], [0, 0, 1, 1], [], []>} : vector<128x128xbf16>, vector<128x256xbf16>, vector<128x256xf32> -> vector<128x256xf32>
    %c0_10 = arith.constant 0 : index
    %c0_11 = arith.constant 0 : index
    %8 = vector.load %arg6[%c0_10, %c0_11] : memref<1x256xf32, #tpu.memory_space<vmem>>, vector<1x256xf32>
    %9 = vector.broadcast %8 : vector<1x256xf32> to vector<128x256xf32>
    %10 = arith.addf %7, %9 : vector<128x256xf32>
    %11 = arith.truncf %10 : vector<128x256xf32> to vector<128x256xbf16>
    %12 = vector.shape_cast %11 : vector<128x256xbf16> to vector<8x16x256xbf16>
    %c0_12 = arith.constant 0 : index
    %c0_13 = arith.constant 0 : index
    %13 = vector.load %arg7[%c0_12, %c0_13] : memref<128x256xbf16, #tpu.memory_space<vmem>>, vector<128x256xbf16>
    %cst_14 = arith.constant dense<0.000000e+00> : vector<128x256xf32>
    %14 = tpu.matmul %3, %13, %cst_14 {dimension_numbers = #tpu.dot_dimension_numbers<[1], [0], [0], [1], [0, 0, 1, 1], [], []>} : vector<128x128xbf16>, vector<128x256xbf16>, vector<128x256xf32> -> vector<128x256xf32>
    %c0_15 = arith.constant 0 : index
    %c0_16 = arith.constant 0 : index
    %15 = vector.load %arg8[%c0_15, %c0_16] : memref<1x256xf32, #tpu.memory_space<vmem>>, vector<1x256xf32>
    %16 = vector.broadcast %15 : vector<1x256xf32> to vector<128x256xf32>
    %17 = arith.addf %14, %16 : vector<128x256xf32>
    %18 = arith.truncf %17 : vector<128x256xf32> to vector<128x256xbf16>
    %19 = vector.shape_cast %18 : vector<128x256xbf16> to vector<8x16x256xbf16>
    %c0_17 = arith.constant 0 : index
    %c0_18 = arith.constant 0 : index
    %20 = vector.load %arg9[%c0_17, %c0_18] : memref<128x256xbf16, #tpu.memory_space<vmem>>, vector<128x256xbf16>
    %cst_19 = arith.constant dense<0.000000e+00> : vector<128x256xf32>
    %21 = tpu.matmul %5, %20, %cst_19 {dimension_numbers = #tpu.dot_dimension_numbers<[1], [0], [0], [1], [0, 0, 1, 1], [], []>} : vector<128x128xbf16>, vector<128x256xbf16>, vector<128x256xf32> -> vector<128x256xf32>
    %c0_20 = arith.constant 0 : index
    %c0_21 = arith.constant 0 : index
    %22 = vector.load %arg10[%c0_20, %c0_21] : memref<1x256xf32, #tpu.memory_space<vmem>>, vector<1x256xf32>
    %23 = vector.broadcast %22 : vector<1x256xf32> to vector<128x256xf32>
    %24 = arith.addf %21, %23 : vector<128x256xf32>
    %25 = arith.truncf %24 : vector<128x256xf32> to vector<128x256xbf16>
    %26 = vector.shape_cast %25 : vector<128x256xbf16> to vector<8x16x256xbf16>
    %c0_22 = arith.constant 0 : index
    %c0_23 = arith.constant 0 : index
    %c0_24 = arith.constant 0 : index
    %c0_25 = arith.constant 0 : index
    %27 = vector.load %arg4[%c0_22, %c0_23, %c0_24, %c0_25] : memref<8x1x16x16xi8, #tpu.memory_space<vmem>>, vector<8x1x16x16xi8>
    %c0_i8 = arith.constant 0 : i8
    %28 = vector.broadcast %c0_i8 : i8 to vector<8x1x16x16xi8>
    %29 = arith.cmpi ne, %27, %28 : vector<8x1x16x16xi8>
    %30 = arith.extui %29 : vector<8x1x16x16xi1> to vector<8x1x16x16xi32>
    %31 = arith.sitofp %30 : vector<8x1x16x16xi32> to vector<8x1x16x16xf32>
    %cst_26 = arith.constant 0.000000e+00 : f32
    %32 = vector.broadcast %cst_26 : f32 to vector<8x16x128xf32>
    %33 = vector.extract_strided_slice %12 {offsets = [0, 0, 0], sizes = [8, 16, 128], strides = [1, 1, 1]} : vector<8x16x256xbf16> to vector<8x16x128xbf16>
    %34 = vector.extract_strided_slice %19 {offsets = [0, 0, 0], sizes = [8, 16, 128], strides = [1, 1, 1]} : vector<8x16x256xbf16> to vector<8x16x128xbf16>
    %35 = vector.extract_strided_slice %26 {offsets = [0, 0, 0], sizes = [8, 16, 128], strides = [1, 1, 1]} : vector<8x16x256xbf16> to vector<8x16x128xbf16>
    %cst_27 = arith.constant dense<0.000000e+00> : vector<8x16x16xf32>
    %36 = tpu.matmul %33, %34, %cst_27 {dimension_numbers = #tpu.dot_dimension_numbers<[2], [2], [1], [1], [0, 0, 0, 1, 1, 1], [0], [0]>} : vector<8x16x128xbf16>, vector<8x16x128xbf16>, vector<8x16x16xf32> -> vector<8x16x16xf32>
    %37 = vector.shape_cast %31 : vector<8x1x16x16xf32> to vector<8x16x16xf32>
    %38 = arith.mulf %36, %37 : vector<8x16x16xf32>
    %39 = arith.truncf %38 : vector<8x16x16xf32> to vector<8x16x16xbf16>
    %cst_28 = arith.constant dense<0.000000e+00> : vector<8x16x128xf32>
    %40 = tpu.matmul %39, %35, %cst_28 {dimension_numbers = #tpu.dot_dimension_numbers<[2], [1], [1], [2], [0, 0, 0, 1, 1, 2], [0], [0]>} : vector<8x16x16xbf16>, vector<8x16x128xbf16>, vector<8x16x128xf32> -> vector<8x16x128xf32>
    %41 = arith.addf %32, %40 : vector<8x16x128xf32>
    %42 = vector.extract_strided_slice %12 {offsets = [0, 0, 128], sizes = [8, 16, 128], strides = [1, 1, 1]} : vector<8x16x256xbf16> to vector<8x16x128xbf16>
    %43 = vector.extract_strided_slice %19 {offsets = [0, 0, 128], sizes = [8, 16, 128], strides = [1, 1, 1]} : vector<8x16x256xbf16> to vector<8x16x128xbf16>
    %44 = vector.extract_strided_slice %26 {offsets = [0, 0, 128], sizes = [8, 16, 128], strides = [1, 1, 1]} : vector<8x16x256xbf16> to vector<8x16x128xbf16>
    %cst_29 = arith.constant dense<0.000000e+00> : vector<8x16x16xf32>
    %45 = tpu.matmul %42, %43, %cst_29 {dimension_numbers = #tpu.dot_dimension_numbers<[2], [2], [1], [1], [0, 0, 0, 1, 1, 1], [0], [0]>} : vector<8x16x128xbf16>, vector<8x16x128xbf16>, vector<8x16x16xf32> -> vector<8x16x16xf32>
    %46 = vector.shape_cast %31 : vector<8x1x16x16xf32> to vector<8x16x16xf32>
    %47 = arith.mulf %45, %46 : vector<8x16x16xf32>
    %48 = arith.truncf %47 : vector<8x16x16xf32> to vector<8x16x16xbf16>
    %cst_30 = arith.constant dense<0.000000e+00> : vector<8x16x128xf32>
    %49 = tpu.matmul %48, %44, %cst_30 {dimension_numbers = #tpu.dot_dimension_numbers<[2], [1], [1], [2], [0, 0, 0, 1, 1, 2], [0], [0]>} : vector<8x16x16xbf16>, vector<8x16x128xbf16>, vector<8x16x128xf32> -> vector<8x16x128xf32>
    %50 = arith.addf %41, %49 : vector<8x16x128xf32>
    %51 = vector.shape_cast %50 : vector<8x16x128xf32> to vector<128x128xf32>
    %52 = arith.truncf %51 : vector<128x128xf32> to vector<128x128xbf16>
    %c0_31 = arith.constant 0 : index
    %c0_32 = arith.constant 0 : index
    %53 = vector.load %arg11[%c0_31, %c0_32] : memref<128x128xbf16, #tpu.memory_space<vmem>>, vector<128x128xbf16>
    %cst_33 = arith.constant dense<0.000000e+00> : vector<128x128xf32>
    %54 = tpu.matmul %52, %53, %cst_33 {dimension_numbers = #tpu.dot_dimension_numbers<[1], [0], [0], [1], [0, 0, 1, 1], [], []>} : vector<128x128xbf16>, vector<128x128xbf16>, vector<128x128xf32> -> vector<128x128xf32>
    %c0_34 = arith.constant 0 : index
    %c0_35 = arith.constant 0 : index
    %55 = vector.load %arg12[%c0_34, %c0_35] : memref<1x128xf32, #tpu.memory_space<vmem>>, vector<1x128xf32>
    %56 = vector.broadcast %55 : vector<1x128xf32> to vector<128x128xf32>
    %57 = arith.addf %54, %56 : vector<128x128xf32>
    %c0_36 = arith.constant 0 : index
    %c0_37 = arith.constant 0 : index
    %58 = vector.load %arg13[%c0_36, %c0_37] : memref<128x128xf32, #tpu.memory_space<vmem>>, vector<128x128xf32>
    tpu.vector_store %arg13[%c0_36, %c0_37], %57 {strides = array<i32>} : memref<128x128xf32, #tpu.memory_space<vmem>>, vector<128x128xf32>,
    return
  }
  func.func @transform_0(%arg0: i32) -> (i32, i32, i32) {
    %c0_i32 = arith.constant 0 : i32
    %c0_i32_0 = arith.constant 0 : i32
    %c0_i32_1 = arith.constant 0 : i32
    return %arg0, %c0_i32, %c0_i32_0 : i32, i32, i32
  }
  func.func @transform_1(%arg0: i32) -> (i32, i32, i32) {
    %c0_i32 = arith.constant 0 : i32
    %c0_i32_0 = arith.constant 0 : i32
    %c0_i32_1 = arith.constant 0 : i32
    return %arg0, %c0_i32, %c0_i32_0 : i32, i32, i32
  }
  func.func @transform_2(%arg0: i32) -> (i32, i32, i32) {
    %c0_i32 = arith.constant 0 : i32
    %c0_i32_0 = arith.constant 0 : i32
    %c0_i32_1 = arith.constant 0 : i32
    return %arg0, %c0_i32, %c0_i32_0 : i32, i32, i32
  }
  func.func @transform_3(%arg0: i32) -> (i32, i32, i32, i32) {
    %c0_i32 = arith.constant 0 : i32
    %c0_i32_0 = arith.constant 0 : i32
    %c0_i32_1 = arith.constant 0 : i32
    %c0_i32_2 = arith.constant 0 : i32
    return %arg0, %c0_i32, %c0_i32_0, %c0_i32_1 : i32, i32, i32, i32
  }
  func.func @transform_4(%arg0: i32) -> (i32, i32) {
    %c0_i32 = arith.constant 0 : i32
    %c0_i32_0 = arith.constant 0 : i32
    %c0_i32_1 = arith.constant 0 : i32
    return %c0_i32, %c0_i32_0 : i32, i32
  }
  func.func @transform_5(%arg0: i32) -> (i32, i32) {
    %c0_i32 = arith.constant 0 : i32
    %c0_i32_0 = arith.constant 0 : i32
    %c0_i32_1 = arith.constant 0 : i32
    return %c0_i32, %c0_i32_0 : i32, i32
  }
  func.func @transform_6(%arg0: i32) -> (i32, i32) {
    %c0_i32 = arith.constant 0 : i32
    %c0_i32_0 = arith.constant 0 : i32
    %c0_i32_1 = arith.constant 0 : i32
    return %c0_i32, %c0_i32_0 : i32, i32
  }
  func.func @transform_7(%arg0: i32) -> (i32, i32) {
    %c0_i32 = arith.constant 0 : i32
    %c0_i32_0 = arith.constant 0 : i32
    %c0_i32_1 = arith.constant 0 : i32
    return %c0_i32, %c0_i32_0 : i32, i32
  }
  func.func @transform_8(%arg0: i32) -> (i32, i32) {
    %c0_i32 = arith.constant 0 : i32
    %c0_i32_0 = arith.constant 0 : i32
    %c0_i32_1 = arith.constant 0 : i32
    return %c0_i32, %c0_i32_0 : i32, i32
  }
  func.func @transform_9(%arg0: i32) -> (i32, i32) {
    %c0_i32 = arith.constant 0 : i32
    %c0_i32_0 = arith.constant 0 : i32
    %c0_i32_1 = arith.constant 0 : i32
    return %c0_i32, %c0_i32_0 : i32, i32
  }
  func.func @transform_10(%arg0: i32) -> (i32, i32) {
    %c0_i32 = arith.constant 0 : i32
    %c0_i32_0 = arith.constant 0 : i32
    %c0_i32_1 = arith.constant 0 : i32
    return %c0_i32, %c0_i32_0 : i32, i32
  }
  func.func @transform_11(%arg0: i32) -> (i32, i32) {
    %c0_i32 = arith.constant 0 : i32
    %c0_i32_0 = arith.constant 0 : i32
    %c0_i32_1 = arith.constant 0 : i32
    return %c0_i32, %c0_i32_0 : i32, i32
  }
  func.func @transform_12(%arg0: i32) -> (i32, i32) {
    %c0_i32 = arith.constant 0 : i32
    %c0_i32_0 = arith.constant 0 : i32
    return %arg0, %c0_i32 : i32, i32
  }
}

</mosaic_0001>

<llo_original>
// kernel: tpu_custom_call.1
$region0: #{tpu_custom_call.1}
  #allocation0 [shape = 'u32[]', space=smem, size = 0x4, offset = 0x4, fixed_abs, tag = 'smem constant byte address 0x4 - core index']
  #allocation1 [shape = 'u32[72,128]{1,0:T(1,128)}', space=vmem, size = 0x9000, scoped, tag = 'internal scratch']
  %s0 = inlined_call_operand.hbm [shape: bf16[8,16,128], index: 0, kind: input, shape index: {}]
  %s1 = inlined_call_operand.hbm [shape: bf16[8,16,128], index: 1, kind: input, shape index: {}]
  %s2 = inlined_call_operand.hbm [shape: bf16[8,16,128], index: 2, kind: input, shape index: {}]
  %s3 = inlined_call_operand.hbm [shape: s8[8,1,16,16], index: 3, kind: input, shape index: {}]
  %s4 = inlined_call_operand.hbm [shape: bf16[128,256], index: 4, kind: input, shape index: {}]
  %s5 = inlined_call_operand.vmem [shape: f32[1,256], index: 5, kind: input, shape index: {}]
  %s6 = inlined_call_operand.hbm [shape: bf16[128,256], index: 6, kind: input, shape index: {}]
  %s7 = inlined_call_operand.vmem [shape: f32[1,256], index: 7, kind: input, shape index: {}]
  %s8 = inlined_call_operand.hbm [shape: bf16[128,256], index: 8, kind: input, shape index: {}]
  %s9 = inlined_call_operand.vmem [shape: f32[1,256], index: 9, kind: input, shape index: {}]
  %s10 = inlined_call_operand.hbm [shape: bf16[128,128], index: 10, kind: input, shape index: {}]
  %s11 = inlined_call_operand.vmem [shape: f32[1,128], index: 11, kind: input, shape index: {}]
  %s12 = inlined_call_operand.hbm [shape: f32[128,128], index: 12, kind: output, shape index: {}]
  %s13 = sld [smem:[#allocation0]]
  $region90: #{tpu_custom_call.1} parent=0
    _
  %s15 = ssub.s32 1, %s13
  %s16 = scalar_select 0, %s15, %s13
  $region1: #{tpu_custom_call.1} parent=0
    #allocation2 [shape = 'u8[32768]{0}', space=vmem, size = 0x8000, scoped, tag = 'input window, operand 0, single buffered']
    #allocation3 [shape = 's32[1]{0}', space=sflag, size = 0x4, scoped, tag = 'scoped memory for tpu_custom_call.1']
    #allocation4 [shape = 's32[1]{0}', space=sflag, size = 0x4, scoped, tag = 'scoped memory for tpu_custom_call.1']
    #allocation5 [shape = 'u8[32768]{0}', space=vmem, size = 0x8000, scoped, tag = 'input window, operand 1, single buffered']
    #allocation6 [shape = 's32[1]{0}', space=sflag, size = 0x4, scoped, tag = 'scoped memory for tpu_custom_call.1']
    #allocation7 [shape = 'u8[32768]{0}', space=vmem, size = 0x8000, scoped, tag = 'input window, operand 2, single buffered']
    #allocation8 [shape = 'u8[16384]{0}', space=vmem, size = 0x4000, scoped, tag = 'input window, operand 3, single buffered']
    #allocation9 [shape = 's32[1]{0}', space=sflag, size = 0x4, scoped, tag = 'scoped memory for tpu_custom_call.1']
    #allocation10 [shape = 'u8[65536]{0}', space=vmem, size = 0x10000, scoped, tag = 'input window, operand 4, single buffered']
    #allocation11 [shape = 'u8[65536]{0}', space=vmem, size = 0x10000, scoped, tag = 'input window, operand 6, single buffered']
    #allocation12 [shape = 's32[1]{0}', space=sflag, size = 0x4, scoped, tag = 'scoped memory for tpu_custom_call.1']
    #allocation13 [shape = 'u8[65536]{0}', space=vmem, size = 0x10000, scoped, tag = 'input window, operand 8, single buffered']
    #allocation14 [shape = 'u8[32768]{0}', space=vmem, size = 0x8000, scoped, tag = 'input window, operand 10, single buffered']
    #allocation15 [shape = 's32[1]{0}', space=sflag, size = 0x4, scoped, tag = 'scoped memory for tpu_custom_call.1']
    #allocation16 [shape = 'u8[65536]{0}', space=vmem, size = 0x10000, scoped, tag = 'output window, operand 0, single buffered']
    %17 = vsyncpa [#allocation3], 0
    %18 = vsyncpa [#allocation6], 0
    %19 = vsyncpa [#allocation9], 0
    %20 = vsyncpa [#allocation12], 0
    %21 = vsyncpa [#allocation15], 0
    %22 = vsyncpa [#allocation4], 0
    // Predicated region
    $region2: #{tpu_custom_call.1} parent=1 // pred_check
      _
    $region3: #{tpu_custom_call.1} parent=1 // pred_check_branch
      %24 = sbr.rel (0) target = $region5
    $region4: #{tpu_custom_call.1} parent=1 // pred_region
      %26 = vsyncadd [#allocation3], 0
      %s27 = sshll.u32 %s0, 4
      %s28 = int_to_ptr.hbm [resolvable:$true] %s27
      %s29 = sshll.u32 [#allocation2], 4
      %s30 = int_to_ptr.vmem [resolvable:$true] %s29
      %35 = dma.hbm_to_vmem [thread:$0]  %s28, 1024, %s30, [#allocation3], 64, 64, 4
    $region5: #{tpu_custom_call.1} parent=1 // pred_fallthru
      _
    // Predicated region
    $region6: #{tpu_custom_call.1} parent=1 // pred_check
      _
    $region7: #{tpu_custom_call.1} parent=1 // pred_check_branch
      %37 = sbr.rel (0) target = $region9
    $region8: #{tpu_custom_call.1} parent=1 // pred_region
      %39 = vsyncadd [#allocation6], 0
      %s40 = sshll.u32 %s1, 4
      %s41 = int_to_ptr.hbm [resolvable:$true] %s40
      %s42 = sshll.u32 [#allocation5], 4
      %s43 = int_to_ptr.vmem [resolvable:$true] %s42
      %48 = dma.hbm_to_vmem [thread:$0]  %s41, 1024, %s43, [#allocation6], 64, 64, 4
    $region9: #{tpu_custom_call.1} parent=1 // pred_fallthru
      _
    // Predicated region
    $region10: #{tpu_custom_call.1} parent=1 // pred_check
      _
    $region11: #{tpu_custom_call.1} parent=1 // pred_check_branch
      %50 = sbr.rel (0) target = $region13
    $region12: #{tpu_custom_call.1} parent=1 // pred_region
      %52 = vsyncadd [#allocation6], 0
      %s53 = sshll.u32 %s2, 4
      %s54 = int_to_ptr.hbm [resolvable:$true] %s53
      %s55 = sshll.u32 [#allocation7], 4
      %s56 = int_to_ptr.vmem [resolvable:$true] %s55
      %61 = dma.hbm_to_vmem [thread:$0]  %s54, 1024, %s56, [#allocation6], 64, 64, 4
    $region13: #{tpu_custom_call.1} parent=1 // pred_fallthru
      _
    // Predicated region
    $region14: #{tpu_custom_call.1} parent=1 // pred_check
      _
    $region15: #{tpu_custom_call.1} parent=1 // pred_check_branch
      %63 = sbr.rel (0) target = $region17
    $region16: #{tpu_custom_call.1} parent=1 // pred_region
      %65 = vsyncadd [#allocation9], 0
      %s66 = sshll.u32 %s3, 4
      %s67 = int_to_ptr.hbm [resolvable:$true] %s66
      %s68 = sshll.u32 [#allocation8], 4
      %s69 = int_to_ptr.vmem [resolvable:$true] %s68
      %74 = dma.hbm_to_vmem [thread:$0]  %s67, 512, %s69, [#allocation9], 32, 32, 2
    $region17: #{tpu_custom_call.1} parent=1 // pred_fallthru
      _
    // Predicated region
    $region18: #{tpu_custom_call.1} parent=1 // pred_check
      _
    $region19: #{tpu_custom_call.1} parent=1 // pred_check_branch
      %76 = sbr.rel (0) target = $region21
    $region20: #{tpu_custom_call.1} parent=1 // pred_region
      %78 = vsyncadd [#allocation9], 0
      %s79 = sshll.u32 %s4, 4
      %s80 = int_to_ptr.hbm [resolvable:$true] %s79
      %s81 = sshll.u32 [#allocation10], 4
      %s82 = int_to_ptr.vmem [resolvable:$true] %s81
      %87 = dma.hbm_to_vmem [thread:$0]  %s80, 2048, %s82, [#allocation9], 128, 128, 8
    $region21: #{tpu_custom_call.1} parent=1 // pred_fallthru
      _
    // Predicated region
    $region22: #{tpu_custom_call.1} parent=1 // pred_check
      _
    $region23: #{tpu_custom_call.1} parent=1 // pred_check_branch
      %89 = sbr.rel (0) target = $region25
    $region24: #{tpu_custom_call.1} parent=1 // pred_region
      _
    $region25: #{tpu_custom_call.1} parent=1 // pred_fallthru
      _
    // Predicated region
    $region26: #{tpu_custom_call.1} parent=1 // pred_check
      _
    $region27: #{tpu_custom_call.1} parent=1 // pred_check_branch
      %91 = sbr.rel (0) target = $region29
    $region28: #{tpu_custom_call.1} parent=1 // pred_region
      %93 = vsyncadd [#allocation12], 0
      %s94 = sshll.u32 %s6, 4
      %s95 = int_to_ptr.hbm [resolvable:$true] %s94
      %s96 = sshll.u32 [#allocation11], 4
      %s97 = int_to_ptr.vmem [resolvable:$true] %s96
      %102 = dma.hbm_to_vmem [thread:$0]  %s95, 2048, %s97, [#allocation12], 128, 128, 8
    $region29: #{tpu_custom_call.1} parent=1 // pred_fallthru
      _
    // Predicated region
    $region30: #{tpu_custom_call.1} parent=1 // pred_check
      _
    $region31: #{tpu_custom_call.1} parent=1 // pred_check_branch
      %104 = sbr.rel (0) target = $region33
    $region32: #{tpu_custom_call.1} parent=1 // pred_region
      _
    $region33: #{tpu_custom_call.1} parent=1 // pred_fallthru
      _
    // Predicated region
    $region34: #{tpu_custom_call.1} parent=1 // pred_check
      _
    $region35: #{tpu_custom_call.1} parent=1 // pred_check_branch
      %106 = sbr.rel (0) target = $region37
    $region36: #{tpu_custom_call.1} parent=1 // pred_region
      %108 = vsyncadd [#allocation12], 0
      %s109 = sshll.u32 %s8, 4
      %s110 = int_to_ptr.hbm [resolvable:$true] %s109
      %s111 = sshll.u32 [#allocation13], 4
      %s112 = int_to_ptr.vmem [resolvable:$true] %s111
      %117 = dma.hbm_to_vmem [thread:$0]  %s110, 2048, %s112, [#allocation12], 128, 128, 8
    $region37: #{tpu_custom_call.1} parent=1 // pred_fallthru
      _
    // Predicated region
    $region38: #{tpu_custom_call.1} parent=1 // pred_check
      _
    $region39: #{tpu_custom_call.1} parent=1 // pred_check_branch
      %119 = sbr.rel (0) target = $region41
    $region40: #{tpu_custom_call.1} parent=1 // pred_region
      _
    $region41: #{tpu_custom_call.1} parent=1 // pred_fallthru
      _
    // Predicated region
    $region42: #{tpu_custom_call.1} parent=1 // pred_check
      _
    $region43: #{tpu_custom_call.1} parent=1 // pred_check_branch
      %121 = sbr.rel (0) target = $region45
    $region44: #{tpu_custom_call.1} parent=1 // pred_region
      %123 = vsyncadd [#allocation15], 0
      %s124 = sshll.u32 %s10, 4
      %s125 = int_to_ptr.hbm [resolvable:$true] %s124
      %s126 = sshll.u32 [#allocation14], 4
      %s127 = int_to_ptr.vmem [resolvable:$true] %s126
      %132 = dma.hbm_to_vmem [thread:$0]  %s125, 1024, %s127, [#allocation15], 64, 64, 4
    $region45: #{tpu_custom_call.1} parent=1 // pred_fallthru
      _
    // Predicated region
    $region46: #{tpu_custom_call.1} parent=1 // pred_check
      _
    $region47: #{tpu_custom_call.1} parent=1 // pred_check_branch
      %134 = sbr.rel (0) target = $region49
    $region48: #{tpu_custom_call.1} parent=1 // pred_region
      _
    $region49: #{tpu_custom_call.1} parent=1 // pred_fallthru
      _
    // Predicated region
    $region50: #{tpu_custom_call.1} parent=1 // pred_check
      _
    $region51: #{tpu_custom_call.1} parent=1 // pred_check_branch
      %136 = sbr.rel (0) target = $region53
    $region52: #{tpu_custom_call.1} parent=1 // pred_region
      %138 = dma.done [#allocation3], 1024
    $region53: #{tpu_custom_call.1} parent=1 // pred_fallthru
      _
    // Predicated region
    $region54: #{tpu_custom_call.1} parent=1 // pred_check
      _
    $region55: #{tpu_custom_call.1} parent=1 // pred_check_branch
      %140 = sbr.rel (0) target = $region57
    $region56: #{tpu_custom_call.1} parent=1 // pred_region
      %142 = dma.done [#allocation6], 1024
    $region57: #{tpu_custom_call.1} parent=1 // pred_fallthru
      _
    // Predicated region
    $region58: #{tpu_custom_call.1} parent=1 // pred_check
      _
    $region59: #{tpu_custom_call.1} parent=1 // pred_check_branch
      %144 = sbr.rel (0) target = $region61
    $region60: #{tpu_custom_call.1} parent=1 // pred_region
      %146 = dma.done [#allocation6], 1024
    $region61: #{tpu_custom_call.1} parent=1 // pred_fallthru
      _
    // Predicated region
    $region62: #{tpu_custom_call.1} parent=1 // pred_check
      _
    $region63: #{tpu_custom_call.1} parent=1 // pred_check_branch
      %148 = sbr.rel (0) target = $region65
    $region64: #{tpu_custom_call.1} parent=1 // pred_region
      %150 = dma.done [#allocation9], 512
    $region65: #{tpu_custom_call.1} parent=1 // pred_fallthru
      _
    // Predicated region
    $region66: #{tpu_custom_call.1} parent=1 // pred_check
      _
    $region67: #{tpu_custom_call.1} parent=1 // pred_check_branch
      %152 = sbr.rel (0) target = $region69
    $region68: #{tpu_custom_call.1} parent=1 // pred_region
      %154 = dma.done [#allocation9], 2048
    $region69: #{tpu_custom_call.1} parent=1 // pred_fallthru
      _
    // Predicated region
    $region70: #{tpu_custom_call.1} parent=1 // pred_check
      _
    $region71: #{tpu_custom_call.1} parent=1 // pred_check_branch
      %156 = sbr.rel (0) target = $region73
    $region72: #{tpu_custom_call.1} parent=1 // pred_region
      %158 = dma.done [#allocation12], 2048
    $region73: #{tpu_custom_call.1} parent=1 // pred_fallthru
      _
    // Predicated region
    $region74: #{tpu_custom_call.1} parent=1 // pred_check
      _
    $region75: #{tpu_custom_call.1} parent=1 // pred_check_branch
      %160 = sbr.rel (0) target = $region77
    $region76: #{tpu_custom_call.1} parent=1 // pred_region
      %162 = dma.done [#allocation12], 2048
    $region77: #{tpu_custom_call.1} parent=1 // pred_fallthru
      _
    // Predicated region
    $region78: #{tpu_custom_call.1} parent=1 // pred_check
      _
    $region79: #{tpu_custom_call.1} parent=1 // pred_check_branch
      %164 = sbr.rel (0) target = $region81
    $region80: #{tpu_custom_call.1} parent=1 // pred_region
      %166 = dma.done [#allocation15], 1024
    $region81: #{tpu_custom_call.1} parent=1 // pred_fallthru
      _
    %v170 = vld [vmem:[#allocation2] sm:$0xf]
    %v171 = vld [vmem:[#allocation2 + $0x4] sm:$0xf]
    %v172 = vld [vmem:[#allocation2 + $0x8] sm:$0xf]
    %v173 = vld [vmem:[#allocation2 + $0xc] sm:$0xf]
    %v174 = vld [vmem:[#allocation2 + $0x10] sm:$0xf]
    %v175 = vld [vmem:[#allocation2 + $0x14] sm:$0xf]
    %v176 = vld [vmem:[#allocation2 + $0x18] sm:$0xf]
    %v177 = vld [vmem:[#allocation2 + $0x1c] sm:$0xf]
    %v178 = vld [vmem:[#allocation2 + $0x20] sm:$0xf]
    %v179 = vld [vmem:[#allocation2 + $0x24] sm:$0xf]
    %v180 = vld [vmem:[#allocation2 + $0x28] sm:$0xf]
    %v181 = vld [vmem:[#allocation2 + $0x2c] sm:$0xf]
    %v182 = vld [vmem:[#allocation2 + $0x30] sm:$0xf]
    %v183 = vld [vmem:[#allocation2 + $0x34] sm:$0xf]
    %v184 = vld [vmem:[#allocation2 + $0x38] sm:$0xf]
    %v185 = vld [vmem:[#allocation2 + $0x3c] sm:$0xf]
    %v186 = vld [vmem:[#allocation5] sm:$0xf]
    %v187 = vld [vmem:[#allocation5 + $0x4] sm:$0xf]
    %v188 = vld [vmem:[#allocation5 + $0x8] sm:$0xf]
    %v189 = vld [vmem:[#allocation5 + $0xc] sm:$0xf]
    %v190 = vld [vmem:[#allocation5 + $0x10] sm:$0xf]
    %v191 = vld [vmem:[#allocation5 + $0x14] sm:$0xf]
    %v192 = vld [vmem:[#allocation5 + $0x18] sm:$0xf]
    %v193 = vld [vmem:[#allocation5 + $0x1c] sm:$0xf]
    %v194 = vld [vmem:[#allocation5 + $0x20] sm:$0xf]
    %v195 = vld [vmem:[#allocation5 + $0x24] sm:$0xf]
    %v196 = vld [vmem:[#allocation5 + $0x28] sm:$0xf]
    %v197 = vld [vmem:[#allocation5 + $0x2c] sm:$0xf]
    %v198 = vld [vmem:[#allocation5 + $0x30] sm:$0xf]
    %v199 = vld [vmem:[#allocation5 + $0x34] sm:$0xf]
    %v200 = vld [vmem:[#allocation5 + $0x38] sm:$0xf]
    %v201 = vld [vmem:[#allocation5 + $0x3c] sm:$0xf]
    %v202 = vld [vmem:[#allocation7] sm:$0xf]
    %v203 = vld [vmem:[#allocation7 + $0x4] sm:$0xf]
    %v204 = vld [vmem:[#allocation7 + $0x8] sm:$0xf]
    %v205 = vld [vmem:[#allocation7 + $0xc] sm:$0xf]
    %v206 = vld [vmem:[#allocation7 + $0x10] sm:$0xf]
    %v207 = vld [vmem:[#allocation7 + $0x14] sm:$0xf]
    %v208 = vld [vmem:[#allocation7 + $0x18] sm:$0xf]
    %v209 = vld [vmem:[#allocation7 + $0x1c] sm:$0xf]
    %v210 = vld [vmem:[#allocation7 + $0x20] sm:$0xf]
    %v211 = vld [vmem:[#allocation7 + $0x24] sm:$0xf]
    %v212 = vld [vmem:[#allocation7 + $0x28] sm:$0xf]
    %v213 = vld [vmem:[#allocation7 + $0x2c] sm:$0xf]
    %v214 = vld [vmem:[#allocation7 + $0x30] sm:$0xf]
    %v215 = vld [vmem:[#allocation7 + $0x34] sm:$0xf]
    %v216 = vld [vmem:[#allocation7 + $0x38] sm:$0xf]
    %v217 = vld [vmem:[#allocation7 + $0x3c] sm:$0xf]
    %v218 = vld [vmem:[#allocation10] sm:$0xff]
    %v219 = vld [vmem:[#allocation10 + $0x8] sm:$0xff]
    %v220 = vld [vmem:[#allocation10 + $0x10] sm:$0xff]
    %v221 = vld [vmem:[#allocation10 + $0x18] sm:$0xff]
    %v222 = vld [vmem:[#allocation10 + $0x20] sm:$0xff]
    %v223 = vld [vmem:[#allocation10 + $0x28] sm:$0xff]
    %v224 = vld [vmem:[#allocation10 + $0x30] sm:$0xff]
    %v225 = vld [vmem:[#allocation10 + $0x38] sm:$0xff]
    %v226 = vld [vmem:[#allocation10 + $0x40] sm:$0xff]
    %v227 = vld [vmem:[#allocation10 + $0x48] sm:$0xff]
    %v228 = vld [vmem:[#allocation10 + $0x50] sm:$0xff]
    %v229 = vld [vmem:[#allocation10 + $0x58] sm:$0xff]
    %v230 = vld [vmem:[#allocation10 + $0x60] sm:$0xff]
    %v231 = vld [vmem:[#allocation10 + $0x68] sm:$0xff]
    %v232 = vld [vmem:[#allocation10 + $0x70] sm:$0xff]
    %v233 = vld [vmem:[#allocation10 + $0x78] sm:$0xff]
    %v234 = vld [vmem:[%s5] sm:$0x3]
    %v236 = vperm.slane %v234, 0
    %v237 = vperm.slane %v234, 1
    %v256 = vunpack.c.l.b16 %v170
    %v257 = vunpack.c.l.b16 %v171
    %v258 = vunpack.c.l.b16 %v172
    %v259 = vunpack.c.l.b16 %v173
    %v260 = vunpack.c.l.b16 %v174
    %v261 = vunpack.c.l.b16 %v175
    %v262 = vunpack.c.l.b16 %v176
    %v263 = vunpack.c.l.b16 %v177
    %v264 = vunpack.c.l.b16 %v178
    %v265 = vunpack.c.l.b16 %v179
    %v266 = vunpack.c.l.b16 %v180
    %v267 = vunpack.c.l.b16 %v181
    %v268 = vunpack.c.l.b16 %v182
    %v269 = vunpack.c.l.b16 %v183
    %v270 = vunpack.c.l.b16 %v184
    %v271 = vunpack.c.l.b16 %v185
    %v272 = vpack.c.b16 %v257, %v256
    %v273 = vpack.c.b16 %v259, %v258
    %v274 = vpack.c.b16 %v261, %v260
    %v275 = vpack.c.b16 %v263, %v262
    %v276 = vpack.c.b16 %v265, %v264
    %v277 = vpack.c.b16 %v267, %v266
    %v278 = vpack.c.b16 %v269, %v268
    %v279 = vpack.c.b16 %v271, %v270
    %v304 = vunpack.c.l.b16 %v218
    %v305 = vunpack.c.h.b16 %v218
    %v306 = vunpack.c.l.b16 %v219
    %v307 = vunpack.c.h.b16 %v219
    %v308 = vunpack.c.l.b16 %v220
    %v309 = vunpack.c.h.b16 %v220
    %v310 = vunpack.c.l.b16 %v221
    %v311 = vunpack.c.h.b16 %v221
    %v312 = vunpack.c.l.b16 %v222
    %v313 = vunpack.c.h.b16 %v222
    %v314 = vunpack.c.l.b16 %v223
    %v315 = vunpack.c.h.b16 %v223
    %v316 = vunpack.c.l.b16 %v224
    %v317 = vunpack.c.h.b16 %v224
    %v318 = vunpack.c.l.b16 %v225
    %v319 = vunpack.c.h.b16 %v225
    %v320 = vunpack.c.l.b16 %v226
    %v321 = vunpack.c.h.b16 %v226
    %v322 = vunpack.c.l.b16 %v227
    %v323 = vunpack.c.h.b16 %v227
    %v324 = vunpack.c.l.b16 %v228
    %v325 = vunpack.c.h.b16 %v228
    %v326 = vunpack.c.l.b16 %v229
    %v327 = vunpack.c.h.b16 %v229
    %v328 = vunpack.c.l.b16 %v230
    %v329 = vunpack.c.h.b16 %v230
    %v330 = vunpack.c.l.b16 %v231
    %v331 = vunpack.c.h.b16 %v231
    %v332 = vunpack.c.l.b16 %v232
    %v333 = vunpack.c.h.b16 %v232
    %v334 = vunpack.c.l.b16 %v233
    %v335 = vunpack.c.h.b16 %v233
    %v336 = vpack.c.b16 %v306, %v304
    %v337 = vpack.c.b16 %v307, %v305
    %v338 = vpack.c.b16 %v310, %v308
    %v339 = vpack.c.b16 %v311, %v309
    %v340 = vpack.c.b16 %v314, %v312
    %v341 = vpack.c.b16 %v315, %v313
    %v342 = vpack.c.b16 %v318, %v316
    %v343 = vpack.c.b16 %v319, %v317
    %v344 = vpack.c.b16 %v322, %v320
    %v345 = vpack.c.b16 %v323, %v321
    %v346 = vpack.c.b16 %v326, %v324
    %v347 = vpack.c.b16 %v327, %v325
    %v348 = vpack.c.b16 %v330, %v328
    %v349 = vpack.c.b16 %v331, %v329
    %v350 = vpack.c.b16 %v334, %v332
    %v351 = vpack.c.b16 %v335, %v333
    %368 = vmatpush.bf16.msra.mxu0 %v350
    %369 = vmatpush.bf16.msra.mxu0 %v348
    %370 = vmatpush.bf16.msra.mxu0 %v346
    %371 = vmatpush.bf16.msra.mxu0 %v344
    %372 = vmatpush.bf16.msra.mxu0 %v342
    %373 = vmatpush.bf16.msra.mxu0 %v340
    %374 = vmatpush.bf16.msra.mxu0 %v338
    %375 = vmatpush.bf16.msra.mxu0 %v336
    %376 = vmatmul.bf16.gmra.mxu0 %v272
    %v377 = vpop.f32.mrf.mxu0
    %v378 = vadd.f32 %v236, %v377
    %v379 = vpop.f32.mrf.mxu0
    %v380 = vadd.f32 %v236, %v379
    %381 = vmatmul.bf16.gmra.mxu0 %v273
    %v382 = vpop.f32.mrf.mxu0
    %v383 = vadd.f32 %v236, %v382
    %v384 = vpop.f32.mrf.mxu0
    %v385 = vadd.f32 %v236, %v384
    %386 = vmatmul.bf16.gmra.mxu0 %v274
    %v387 = vpop.f32.mrf.mxu0
    %v388 = vadd.f32 %v236, %v387
    %v389 = vpop.f32.mrf.mxu0
    %v390 = vadd.f32 %v236, %v389
    %391 = vmatmul.bf16.gmra.mxu0 %v275
    %v392 = vpop.f32.mrf.mxu0
    %v393 = vadd.f32 %v236, %v392
    %v394 = vpop.f32.mrf.mxu0
    %v395 = vadd.f32 %v236, %v394
    %396 = vmatmul.bf16.gmra.mxu0 %v276
    %v397 = vpop.f32.mrf.mxu0
    %v398 = vadd.f32 %v236, %v397
    %v399 = vpop.f32.mrf.mxu0
    %v400 = vadd.f32 %v236, %v399
    %401 = vmatmul.bf16.gmra.mxu0 %v277
    %v402 = vpop.f32.mrf.mxu0
    %v403 = vadd.f32 %v236, %v402
    %v404 = vpop.f32.mrf.mxu0
    %v405 = vadd.f32 %v236, %v404
    %406 = vmatmul.bf16.gmra.mxu0 %v278
    %v407 = vpop.f32.mrf.mxu0
    %v408 = vadd.f32 %v236, %v407
    %v409 = vpop.f32.mrf.mxu0
    %v410 = vadd.f32 %v236, %v409
    %411 = vmatmul.bf16.gmra.mxu0 %v279
    %v412 = vpop.f32.mrf.mxu0
    %v413 = vadd.f32 %v236, %v412
    %v414 = vpop.f32.mrf.mxu0
    %v415 = vadd.f32 %v236, %v414
    %416 = vdwg.mxu0
    %417 = vmatpush.bf16.msra.mxu0 %v351
    %418 = vmatpush.bf16.msra.mxu0 %v349
    %419 = vmatpush.bf16.msra.mxu0 %v347
    %420 = vmatpush.bf16.msra.mxu0 %v345
    %421 = vmatpush.bf16.msra.mxu0 %v343
    %422 = vmatpush.bf16.msra.mxu0 %v341
    %423 = vmatpush.bf16.msra.mxu0 %v339
    %424 = vmatpush.bf16.msra.mxu0 %v337
    %425 = vmatmul.bf16.gmra.mxu0 %v272
    %v426 = vpop.f32.mrf.mxu0
    %v427 = vadd.f32 %v237, %v426
    %v428 = vpop.f32.mrf.mxu0
    %v429 = vadd.f32 %v237, %v428
    %430 = vmatmul.bf16.gmra.mxu0 %v273
    %v431 = vpop.f32.mrf.mxu0
    %v432 = vadd.f32 %v237, %v431
    %v433 = vpop.f32.mrf.mxu0
    %v434 = vadd.f32 %v237, %v433
    %435 = vmatmul.bf16.gmra.mxu0 %v274
    %v436 = vpop.f32.mrf.mxu0
    %v437 = vadd.f32 %v237, %v436
    %v438 = vpop.f32.mrf.mxu0
    %v439 = vadd.f32 %v237, %v438
    %440 = vmatmul.bf16.gmra.mxu0 %v275
    %v441 = vpop.f32.mrf.mxu0
    %v442 = vadd.f32 %v237, %v441
    %v443 = vpop.f32.mrf.mxu0
    %v444 = vadd.f32 %v237, %v443
    %445 = vmatmul.bf16.gmra.mxu0 %v276
    %v446 = vpop.f32.mrf.mxu0
    %v447 = vadd.f32 %v237, %v446
    %v448 = vpop.f32.mrf.mxu0
    %v449 = vadd.f32 %v237, %v448
    %450 = vmatmul.bf16.gmra.mxu0 %v277
    %v451 = vpop.f32.mrf.mxu0
    %v452 = vadd.f32 %v237, %v451
    %v453 = vpop.f32.mrf.mxu0
    %v454 = vadd.f32 %v237, %v453
    %455 = vmatmul.bf16.gmra.mxu0 %v278
    %v456 = vpop.f32.mrf.mxu0
    %v457 = vadd.f32 %v237, %v456
    %v458 = vpop.f32.mrf.mxu0
    %v459 = vadd.f32 %v237, %v458
    %460 = vmatmul.bf16.gmra.mxu0 %v279
    %v461 = vpop.f32.mrf.mxu0
    %v462 = vadd.f32 %v237, %v461
    %v463 = vpop.f32.mrf.mxu0
    %v464 = vadd.f32 %v237, %v463
    %465 = vdwg.mxu0
    %v466 = vpack.c.bf16 %v427, %v378
    %v467 = vpack.c.bf16 %v429, %v380
    %v468 = vpack.c.bf16 %v432, %v383
    %v469 = vpack.c.bf16 %v434, %v385
    %v470 = vpack.c.bf16 %v437, %v388
    %v471 = vpack.c.bf16 %v439, %v390
    %v472 = vpack.c.bf16 %v442, %v393
    %v473 = vpack.c.bf16 %v444, %v395
    %v474 = vpack.c.bf16 %v447, %v398
    %v475 = vpack.c.bf16 %v449, %v400
    %v476 = vpack.c.bf16 %v452, %v403
    %v477 = vpack.c.bf16 %v454, %v405
    %v478 = vpack.c.bf16 %v457, %v408
    %v479 = vpack.c.bf16 %v459, %v410
    %v480 = vpack.c.bf16 %v462, %v413
    %v481 = vpack.c.bf16 %v464, %v415
    %v482 = vld [vmem:[#allocation11] sm:$0xff]
    %v483 = vld [vmem:[#allocation11 + $0x8] sm:$0xff]
    %v484 = vld [vmem:[#allocation11 + $0x10] sm:$0xff]
    %v485 = vld [vmem:[#allocation11 + $0x18] sm:$0xff]
    %v486 = vld [vmem:[#allocation11 + $0x20] sm:$0xff]
    %v487 = vld [vmem:[#allocation11 + $0x28] sm:$0xff]
    %v488 = vld [vmem:[#allocation11 + $0x30] sm:$0xff]
    %v489 = vld [vmem:[#allocation11 + $0x38] sm:$0xff]
    %v490 = vld [vmem:[#allocation11 + $0x40] sm:$0xff]
    %v491 = vld [vmem:[#allocation11 + $0x48] sm:$0xff]
    %v492 = vld [vmem:[#allocation11 + $0x50] sm:$0xff]
    %v493 = vld [vmem:[#allocation11 + $0x58] sm:$0xff]
    %v494 = vld [vmem:[#allocation11 + $0x60] sm:$0xff]
    %v495 = vld [vmem:[#allocation11 + $0x68] sm:$0xff]
    %v496 = vld [vmem:[#allocation11 + $0x70] sm:$0xff]
    %v497 = vld [vmem:[#allocation11 + $0x78] sm:$0xff]
    %v498 = vld [vmem:[%s7] sm:$0x3]
    %v500 = vperm.slane %v498, 0
    %v501 = vperm.slane %v498, 1
    %v520 = vunpack.c.l.b16 %v186
    %v521 = vunpack.c.l.b16 %v187
    %v522 = vunpack.c.l.b16 %v188
    %v523 = vunpack.c.l.b16 %v189
    %v524 = vunpack.c.l.b16 %v190
    %v525 = vunpack.c.l.b16 %v191
    %v526 = vunpack.c.l.b16 %v192
    %v527 = vunpack.c.l.b16 %v193
    %v528 = vunpack.c.l.b16 %v194
    %v529 = vunpack.c.l.b16 %v195
    %v530 = vunpack.c.l.b16 %v196
    %v531 = vunpack.c.l.b16 %v197
    %v532 = vunpack.c.l.b16 %v198
    %v533 = vunpack.c.l.b16 %v199
    %v534 = vunpack.c.l.b16 %v200
    %v535 = vunpack.c.l.b16 %v201
    %v536 = vpack.c.b16 %v521, %v520
    %v537 = vpack.c.b16 %v523, %v522
    %v538 = vpack.c.b16 %v525, %v524
    %v539 = vpack.c.b16 %v527, %v526
    %v540 = vpack.c.b16 %v529, %v528
    %v541 = vpack.c.b16 %v531, %v530
    %v542 = vpack.c.b16 %v533, %v532
    %v543 = vpack.c.b16 %v535, %v534
    %v568 = vunpack.c.l.b16 %v482
    %v569 = vunpack.c.h.b16 %v482
    %v570 = vunpack.c.l.b16 %v483
    %v571 = vunpack.c.h.b16 %v483
    %v572 = vunpack.c.l.b16 %v484
    %v573 = vunpack.c.h.b16 %v484
    %v574 = vunpack.c.l.b16 %v485
    %v575 = vunpack.c.h.b16 %v485
    %v576 = vunpack.c.l.b16 %v486
    %v577 = vunpack.c.h.b16 %v486
    %v578 = vunpack.c.l.b16 %v487
    %v579 = vunpack.c.h.b16 %v487
    %v580 = vunpack.c.l.b16 %v488
    %v581 = vunpack.c.h.b16 %v488
    %v582 = vunpack.c.l.b16 %v489
    %v583 = vunpack.c.h.b16 %v489
    %v584 = vunpack.c.l.b16 %v490
    %v585 = vunpack.c.h.b16 %v490
    %v586 = vunpack.c.l.b16 %v491
    %v587 = vunpack.c.h.b16 %v491
    %v588 = vunpack.c.l.b16 %v492
    %v589 = vunpack.c.h.b16 %v492
    %v590 = vunpack.c.l.b16 %v493
    %v591 = vunpack.c.h.b16 %v493
    %v592 = vunpack.c.l.b16 %v494
    %v593 = vunpack.c.h.b16 %v494
    %v594 = vunpack.c.l.b16 %v495
    %v595 = vunpack.c.h.b16 %v495
    %v596 = vunpack.c.l.b16 %v496
    %v597 = vunpack.c.h.b16 %v496
    %v598 = vunpack.c.l.b16 %v497
    %v599 = vunpack.c.h.b16 %v497
    %v600 = vpack.c.b16 %v570, %v568
    %v601 = vpack.c.b16 %v571, %v569
    %v602 = vpack.c.b16 %v574, %v572
    %v603 = vpack.c.b16 %v575, %v573
    %v604 = vpack.c.b16 %v578, %v576
    %v605 = vpack.c.b16 %v579, %v577
    %v606 = vpack.c.b16 %v582, %v580
    %v607 = vpack.c.b16 %v583, %v581
    %v608 = vpack.c.b16 %v586, %v584
    %v609 = vpack.c.b16 %v587, %v585
    %v610 = vpack.c.b16 %v590, %v588
    %v611 = vpack.c.b16 %v591, %v589
    %v612 = vpack.c.b16 %v594, %v592
    %v613 = vpack.c.b16 %v595, %v593
    %v614 = vpack.c.b16 %v598, %v596
    %v615 = vpack.c.b16 %v599, %v597
    %632 = vmatpush.bf16.msra.mxu0 %v614
    %633 = vmatpush.bf16.msra.mxu0 %v612
    %634 = vmatpush.bf16.msra.mxu0 %v610
    %635 = vmatpush.bf16.msra.mxu0 %v608
    %636 = vmatpush.bf16.msra.mxu0 %v606
    %637 = vmatpush.bf16.msra.mxu0 %v604
    %638 = vmatpush.bf16.msra.mxu0 %v602
    %639 = vmatpush.bf16.msra.mxu0 %v600
    %640 = vmatmul.bf16.gmra.mxu0 %v536
    %v641 = vpop.f32.mrf.mxu0
    %v642 = vadd.f32 %v500, %v641
    %v643 = vpop.f32.mrf.mxu0
    %v644 = vadd.f32 %v500, %v643
    %645 = vmatmul.bf16.gmra.mxu0 %v537
    %v646 = vpop.f32.mrf.mxu0
    %v647 = vadd.f32 %v500, %v646
    %v648 = vpop.f32.mrf.mxu0
    %v649 = vadd.f32 %v500, %v648
    %650 = vmatmul.bf16.gmra.mxu0 %v538
    %v651 = vpop.f32.mrf.mxu0
    %v652 = vadd.f32 %v500, %v651
    %v653 = vpop.f32.mrf.mxu0
    %v654 = vadd.f32 %v500, %v653
    %655 = vmatmul.bf16.gmra.mxu0 %v539
    %v656 = vpop.f32.mrf.mxu0
    %v657 = vadd.f32 %v500, %v656
    %v658 = vpop.f32.mrf.mxu0
    %v659 = vadd.f32 %v500, %v658
    %660 = vmatmul.bf16.gmra.mxu0 %v540
    %v661 = vpop.f32.mrf.mxu0
    %v662 = vadd.f32 %v500, %v661
    %v663 = vpop.f32.mrf.mxu0
    %v664 = vadd.f32 %v500, %v663
    %665 = vmatmul.bf16.gmra.mxu0 %v541
    %v666 = vpop.f32.mrf.mxu0
    %v667 = vadd.f32 %v500, %v666
    %v668 = vpop.f32.mrf.mxu0
    %v669 = vadd.f32 %v500, %v668
    %670 = vmatmul.bf16.gmra.mxu0 %v542
    %v671 = vpop.f32.mrf.mxu0
    %v672 = vadd.f32 %v500, %v671
    %v673 = vpop.f32.mrf.mxu0
    %v674 = vadd.f32 %v500, %v673
    %675 = vmatmul.bf16.gmra.mxu0 %v543
    %v676 = vpop.f32.mrf.mxu0
    %v677 = vadd.f32 %v500, %v676
    %v678 = vpop.f32.mrf.mxu0
    %v679 = vadd.f32 %v500, %v678
    %680 = vdwg.mxu0
    %681 = vmatpush.bf16.msra.mxu0 %v615
    %682 = vmatpush.bf16.msra.mxu0 %v613
    %683 = vmatpush.bf16.msra.mxu0 %v611
    %684 = vmatpush.bf16.msra.mxu0 %v609
    %685 = vmatpush.bf16.msra.mxu0 %v607
    %686 = vmatpush.bf16.msra.mxu0 %v605
    %687 = vmatpush.bf16.msra.mxu0 %v603
    %688 = vmatpush.bf16.msra.mxu0 %v601
    %689 = vmatmul.bf16.gmra.mxu0 %v536
    %v690 = vpop.f32.mrf.mxu0
    %v691 = vadd.f32 %v501, %v690
    %v692 = vpop.f32.mrf.mxu0
    %v693 = vadd.f32 %v501, %v692
    %694 = vmatmul.bf16.gmra.mxu0 %v537
    %v695 = vpop.f32.mrf.mxu0
    %v696 = vadd.f32 %v501, %v695
    %v697 = vpop.f32.mrf.mxu0
    %v698 = vadd.f32 %v501, %v697
    %699 = vmatmul.bf16.gmra.mxu0 %v538
    %v700 = vpop.f32.mrf.mxu0
    %v701 = vadd.f32 %v501, %v700
    %v702 = vpop.f32.mrf.mxu0
    %v703 = vadd.f32 %v501, %v702
    %704 = vmatmul.bf16.gmra.mxu0 %v539
    %v705 = vpop.f32.mrf.mxu0
    %v706 = vadd.f32 %v501, %v705
    %v707 = vpop.f32.mrf.mxu0
    %v708 = vadd.f32 %v501, %v707
    %709 = vmatmul.bf16.gmra.mxu0 %v540
    %v710 = vpop.f32.mrf.mxu0
    %v711 = vadd.f32 %v501, %v710
    %v712 = vpop.f32.mrf.mxu0
    %v713 = vadd.f32 %v501, %v712
    %714 = vmatmul.bf16.gmra.mxu0 %v541
    %v715 = vpop.f32.mrf.mxu0
    %v716 = vadd.f32 %v501, %v715
    %v717 = vpop.f32.mrf.mxu0
    %v718 = vadd.f32 %v501, %v717
    %719 = vmatmul.bf16.gmra.mxu0 %v542
    %v720 = vpop.f32.mrf.mxu0
    %v721 = vadd.f32 %v501, %v720
    %v722 = vpop.f32.mrf.mxu0
    %v723 = vadd.f32 %v501, %v722
    %724 = vmatmul.bf16.gmra.mxu0 %v543
    %v725 = vpop.f32.mrf.mxu0
    %v726 = vadd.f32 %v501, %v725
    %v727 = vpop.f32.mrf.mxu0
    %v728 = vadd.f32 %v501, %v727
    %729 = vdwg.mxu0
    %v730 = vpack.c.bf16 %v691, %v642
    %v731 = vpack.c.bf16 %v693, %v644
    %v732 = vpack.c.bf16 %v696, %v647
    %v733 = vpack.c.bf16 %v698, %v649
    %v734 = vpack.c.bf16 %v701, %v652
    %v735 = vpack.c.bf16 %v703, %v654
    %v736 = vpack.c.bf16 %v706, %v657
    %v737 = vpack.c.bf16 %v708, %v659
    %v738 = vpack.c.bf16 %v711, %v662
    %v739 = vpack.c.bf16 %v713, %v664
    %v740 = vpack.c.bf16 %v716, %v667
    %v741 = vpack.c.bf16 %v718, %v669
    %v742 = vpack.c.bf16 %v721, %v672
    %v743 = vpack.c.bf16 %v723, %v674
    %v744 = vpack.c.bf16 %v726, %v677
    %v745 = vpack.c.bf16 %v728, %v679
    %v746 = vld [vmem:[#allocation13] sm:$0xff]
    %v747 = vld [vmem:[#allocation13 + $0x8] sm:$0xff]
    %v748 = vld [vmem:[#allocation13 + $0x10] sm:$0xff]
    %v749 = vld [vmem:[#allocation13 + $0x18] sm:$0xff]
    %v750 = vld [vmem:[#allocation13 + $0x20] sm:$0xff]
    %v751 = vld [vmem:[#allocation13 + $0x28] sm:$0xff]
    %v752 = vld [vmem:[#allocation13 + $0x30] sm:$0xff]
    %v753 = vld [vmem:[#allocation13 + $0x38] sm:$0xff]
    %v754 = vld [vmem:[#allocation13 + $0x40] sm:$0xff]
    %v755 = vld [vmem:[#allocation13 + $0x48] sm:$0xff]
    %v756 = vld [vmem:[#allocation13 + $0x50] sm:$0xff]
    %v757 = vld [vmem:[#allocation13 + $0x58] sm:$0xff]
    %v758 = vld [vmem:[#allocation13 + $0x60] sm:$0xff]
    %v759 = vld [vmem:[#allocation13 + $0x68] sm:$0xff]
    %v760 = vld [vmem:[#allocation13 + $0x70] sm:$0xff]
    %v761 = vld [vmem:[#allocation13 + $0x78] sm:$0xff]
    %v762 = vld [vmem:[%s9] sm:$0x3]
    %v764 = vperm.slane %v762, 0
    %v765 = vperm.slane %v762, 1
    %v784 = vunpack.c.l.b16 %v202
    %v785 = vunpack.c.l.b16 %v203
    %v786 = vunpack.c.l.b16 %v204
    %v787 = vunpack.c.l.b16 %v205
    %v788 = vunpack.c.l.b16 %v206
    %v789 = vunpack.c.l.b16 %v207
    %v790 = vunpack.c.l.b16 %v208
    %v791 = vunpack.c.l.b16 %v209
    %v792 = vunpack.c.l.b16 %v210
    %v793 = vunpack.c.l.b16 %v211
    %v794 = vunpack.c.l.b16 %v212
    %v795 = vunpack.c.l.b16 %v213
    %v796 = vunpack.c.l.b16 %v214
    %v797 = vunpack.c.l.b16 %v215
    %v798 = vunpack.c.l.b16 %v216
    %v799 = vunpack.c.l.b16 %v217
    %v800 = vpack.c.b16 %v785, %v784
    %v801 = vpack.c.b16 %v787, %v786
    %v802 = vpack.c.b16 %v789, %v788
    %v803 = vpack.c.b16 %v791, %v790
    %v804 = vpack.c.b16 %v793, %v792
    %v805 = vpack.c.b16 %v795, %v794
    %v806 = vpack.c.b16 %v797, %v796
    %v807 = vpack.c.b16 %v799, %v798
    %v832 = vunpack.c.l.b16 %v746
    %v833 = vunpack.c.h.b16 %v746
    %v834 = vunpack.c.l.b16 %v747
    %v835 = vunpack.c.h.b16 %v747
    %v836 = vunpack.c.l.b16 %v748
    %v837 = vunpack.c.h.b16 %v748
    %v838 = vunpack.c.l.b16 %v749
    %v839 = vunpack.c.h.b16 %v749
    %v840 = vunpack.c.l.b16 %v750
    %v841 = vunpack.c.h.b16 %v750
    %v842 = vunpack.c.l.b16 %v751
    %v843 = vunpack.c.h.b16 %v751
    %v844 = vunpack.c.l.b16 %v752
    %v845 = vunpack.c.h.b16 %v752
    %v846 = vunpack.c.l.b16 %v753
    %v847 = vunpack.c.h.b16 %v753
    %v848 = vunpack.c.l.b16 %v754
    %v849 = vunpack.c.h.b16 %v754
    %v850 = vunpack.c.l.b16 %v755
    %v851 = vunpack.c.h.b16 %v755
    %v852 = vunpack.c.l.b16 %v756
    %v853 = vunpack.c.h.b16 %v756
    %v854 = vunpack.c.l.b16 %v757
    %v855 = vunpack.c.h.b16 %v757
    %v856 = vunpack.c.l.b16 %v758
    %v857 = vunpack.c.h.b16 %v758
    %v858 = vunpack.c.l.b16 %v759
    %v859 = vunpack.c.h.b16 %v759
    %v860 = vunpack.c.l.b16 %v760
    %v861 = vunpack.c.h.b16 %v760
    %v862 = vunpack.c.l.b16 %v761
    %v863 = vunpack.c.h.b16 %v761
    %v864 = vpack.c.b16 %v834, %v832
    %v865 = vpack.c.b16 %v835, %v833
    %v866 = vpack.c.b16 %v838, %v836
    %v867 = vpack.c.b16 %v839, %v837
    %v868 = vpack.c.b16 %v842, %v840
    %v869 = vpack.c.b16 %v843, %v841
    %v870 = vpack.c.b16 %v846, %v844
    %v871 = vpack.c.b16 %v847, %v845
    %v872 = vpack.c.b16 %v850, %v848
    %v873 = vpack.c.b16 %v851, %v849
    %v874 = vpack.c.b16 %v854, %v852
    %v875 = vpack.c.b16 %v855, %v853
    %v876 = vpack.c.b16 %v858, %v856
    %v877 = vpack.c.b16 %v859, %v857
    %v878 = vpack.c.b16 %v862, %v860
    %v879 = vpack.c.b16 %v863, %v861
    %896 = vmatpush.bf16.msra.mxu0 %v878
    %897 = vmatpush.bf16.msra.mxu0 %v876
    %898 = vmatpush.bf16.msra.mxu0 %v874
    %899 = vmatpush.bf16.msra.mxu0 %v872
    %900 = vmatpush.bf16.msra.mxu0 %v870
    %901 = vmatpush.bf16.msra.mxu0 %v868
    %902 = vmatpush.bf16.msra.mxu0 %v866
    %903 = vmatpush.bf16.msra.mxu0 %v864
    %904 = vmatmul.bf16.gmra.mxu0 %v800
    %v905 = vpop.f32.mrf.mxu0
    %v906 = vadd.f32 %v764, %v905
    %v907 = vpop.f32.mrf.mxu0
    %v908 = vadd.f32 %v764, %v907
    %909 = vmatmul.bf16.gmra.mxu0 %v801
    %v910 = vpop.f32.mrf.mxu0
    %v911 = vadd.f32 %v764, %v910
    %v912 = vpop.f32.mrf.mxu0
    %v913 = vadd.f32 %v764, %v912
    %914 = vmatmul.bf16.gmra.mxu0 %v802
    %v915 = vpop.f32.mrf.mxu0
    %v916 = vadd.f32 %v764, %v915
    %v917 = vpop.f32.mrf.mxu0
    %v918 = vadd.f32 %v764, %v917
    %919 = vmatmul.bf16.gmra.mxu0 %v803
    %v920 = vpop.f32.mrf.mxu0
    %v921 = vadd.f32 %v764, %v920
    %v922 = vpop.f32.mrf.mxu0
    %v923 = vadd.f32 %v764, %v922
    %924 = vmatmul.bf16.gmra.mxu0 %v804
    %v925 = vpop.f32.mrf.mxu0
    %v926 = vadd.f32 %v764, %v925
    %v927 = vpop.f32.mrf.mxu0
    %v928 = vadd.f32 %v764, %v927
    %929 = vmatmul.bf16.gmra.mxu0 %v805
    %v930 = vpop.f32.mrf.mxu0
    %v931 = vadd.f32 %v764, %v930
    %v932 = vpop.f32.mrf.mxu0
    %v933 = vadd.f32 %v764, %v932
    %934 = vmatmul.bf16.gmra.mxu0 %v806
    %v935 = vpop.f32.mrf.mxu0
    %v936 = vadd.f32 %v764, %v935
    %v937 = vpop.f32.mrf.mxu0
    %v938 = vadd.f32 %v764, %v937
    %939 = vmatmul.bf16.gmra.mxu0 %v807
    %v940 = vpop.f32.mrf.mxu0
    %v941 = vadd.f32 %v764, %v940
    %v942 = vpop.f32.mrf.mxu0
    %v943 = vadd.f32 %v764, %v942
    %944 = vdwg.mxu0
    %945 = vmatpush.bf16.msra.mxu0 %v879
    %946 = vmatpush.bf16.msra.mxu0 %v877
    %947 = vmatpush.bf16.msra.mxu0 %v875
    %948 = vmatpush.bf16.msra.mxu0 %v873
    %949 = vmatpush.bf16.msra.mxu0 %v871
    %950 = vmatpush.bf16.msra.mxu0 %v869
    %951 = vmatpush.bf16.msra.mxu0 %v867
    %952 = vmatpush.bf16.msra.mxu0 %v865
    %953 = vmatmul.bf16.gmra.mxu0 %v800
    %v954 = vpop.f32.mrf.mxu0
    %v955 = vadd.f32 %v765, %v954
    %v956 = vpop.f32.mrf.mxu0
    %v957 = vadd.f32 %v765, %v956
    %958 = vmatmul.bf16.gmra.mxu0 %v801
    %v959 = vpop.f32.mrf.mxu0
    %v960 = vadd.f32 %v765, %v959
    %v961 = vpop.f32.mrf.mxu0
    %v962 = vadd.f32 %v765, %v961
    %963 = vmatmul.bf16.gmra.mxu0 %v802
    %v964 = vpop.f32.mrf.mxu0
    %v965 = vadd.f32 %v765, %v964
    %v966 = vpop.f32.mrf.mxu0
    %v967 = vadd.f32 %v765, %v966
    %968 = vmatmul.bf16.gmra.mxu0 %v803
    %v969 = vpop.f32.mrf.mxu0
    %v970 = vadd.f32 %v765, %v969
    %v971 = vpop.f32.mrf.mxu0
    %v972 = vadd.f32 %v765, %v971
    %973 = vmatmul.bf16.gmra.mxu0 %v804
    %v974 = vpop.f32.mrf.mxu0
    %v975 = vadd.f32 %v765, %v974
    %v976 = vpop.f32.mrf.mxu0
    %v977 = vadd.f32 %v765, %v976
    %978 = vmatmul.bf16.gmra.mxu0 %v805
    %v979 = vpop.f32.mrf.mxu0
    %v980 = vadd.f32 %v765, %v979
    %v981 = vpop.f32.mrf.mxu0
    %v982 = vadd.f32 %v765, %v981
    %983 = vmatmul.bf16.gmra.mxu0 %v806
    %v984 = vpop.f32.mrf.mxu0
    %v985 = vadd.f32 %v765, %v984
    %v986 = vpop.f32.mrf.mxu0
    %v987 = vadd.f32 %v765, %v986
    %988 = vmatmul.bf16.gmra.mxu0 %v807
    %v989 = vpop.f32.mrf.mxu0
    %v990 = vadd.f32 %v765, %v989
    %v991 = vpop.f32.mrf.mxu0
    %v992 = vadd.f32 %v765, %v991
    %993 = vdwg.mxu0
    %v994 = vpack.c.bf16 %v955, %v906
    %v995 = vpack.c.bf16 %v957, %v908
    %v996 = vpack.c.bf16 %v960, %v911
    %v997 = vpack.c.bf16 %v962, %v913
    %v998 = vpack.c.bf16 %v965, %v916
    %v999 = vpack.c.bf16 %v967, %v918
    %v1000 = vpack.c.bf16 %v970, %v921
    %v1001 = vpack.c.bf16 %v972, %v923
    %v1002 = vpack.c.bf16 %v975, %v926
    %v1003 = vpack.c.bf16 %v977, %v928
    %v1004 = vpack.c.bf16 %v980, %v931
    %v1005 = vpack.c.bf16 %v982, %v933
    %v1006 = vpack.c.bf16 %v985, %v936
    %v1007 = vpack.c.bf16 %v987, %v938
    %v1008 = vpack.c.bf16 %v990, %v941
    %v1009 = vpack.c.bf16 %v992, %v943
    %v1010 = vld [vmem:[#allocation8] sm:$0x3]
    %v1011 = vld [vmem:[#allocation8 + $0x2] sm:$0x3]
    %v1012 = vld [vmem:[#allocation8 + $0x4] sm:$0x3]
    %v1013 = vld [vmem:[#allocation8 + $0x6] sm:$0x3]
    %v1014 = vld [vmem:[#allocation8 + $0x8] sm:$0x3]
    %v1015 = vld [vmem:[#allocation8 + $0xa] sm:$0x3]
    %v1016 = vld [vmem:[#allocation8 + $0xc] sm:$0x3]
    %v1017 = vld [vmem:[#allocation8 + $0xe] sm:$0x3]
    %v1018 = vld [vmem:[#allocation8 + $0x10] sm:$0x3]
    %v1019 = vld [vmem:[#allocation8 + $0x12] sm:$0x3]
    %v1020 = vld [vmem:[#allocation8 + $0x14] sm:$0x3]
    %v1021 = vld [vmem:[#allocation8 + $0x16] sm:$0x3]
    %v1022 = vld [vmem:[#allocation8 + $0x18] sm:$0x3]
    %v1023 = vld [vmem:[#allocation8 + $0x1a] sm:$0x3]
    %v1024 = vld [vmem:[#allocation8 + $0x1c] sm:$0x3]
    %v1025 = vld [vmem:[#allocation8 + $0x1e] sm:$0x3]
    %vm1026 = vnez %v1010
    %vm1027 = vnez %v1011
    %vm1028 = vnez %v1012
    %vm1029 = vnez %v1013
    %vm1030 = vnez %v1014
    %vm1031 = vnez %v1015
    %vm1032 = vnez %v1016
    %vm1033 = vnez %v1017
    %vm1034 = vnez %v1018
    %vm1035 = vnez %v1019
    %vm1036 = vnez %v1020
    %vm1037 = vnez %v1021
    %vm1038 = vnez %v1022
    %vm1039 = vnez %v1023
    %vm1040 = vnez %v1024
    %vm1041 = vnez %v1025
    %v1042 = vsel %vm1026, 16843009, 0
    %v1043 = vsel %vm1027, 16843009, 0
    %v1044 = vsel %vm1028, 16843009, 0
    %v1045 = vsel %vm1029, 16843009, 0
    %v1046 = vsel %vm1030, 16843009, 0
    %v1047 = vsel %vm1031, 16843009, 0
    %v1048 = vsel %vm1032, 16843009, 0
    %v1049 = vsel %vm1033, 16843009, 0
    %v1050 = vsel %vm1034, 16843009, 0
    %v1051 = vsel %vm1035, 16843009, 0
    %v1052 = vsel %vm1036, 16843009, 0
    %v1053 = vsel %vm1037, 16843009, 0
    %v1054 = vsel %vm1038, 16843009, 0
    %v1055 = vsel %vm1039, 16843009, 0
    %v1056 = vsel %vm1040, 16843009, 0
    %v1057 = vsel %vm1041, 16843009, 0
    %v1058 = vunpack.c.0.s8 %v1042
    %v1059 = vunpack.c.0.s8 %v1043
    %v1060 = vunpack.c.0.s8 %v1044
    %v1061 = vunpack.c.0.s8 %v1045
    %v1062 = vunpack.c.0.s8 %v1046
    %v1063 = vunpack.c.0.s8 %v1047
    %v1064 = vunpack.c.0.s8 %v1048
    %v1065 = vunpack.c.0.s8 %v1049
    %v1066 = vunpack.c.0.s8 %v1050
    %v1067 = vunpack.c.0.s8 %v1051
    %v1068 = vunpack.c.0.s8 %v1052
    %v1069 = vunpack.c.0.s8 %v1053
    %v1070 = vunpack.c.0.s8 %v1054
    %v1071 = vunpack.c.0.s8 %v1055
    %v1072 = vunpack.c.0.s8 %v1056
    %v1073 = vunpack.c.0.s8 %v1057
    %vm1074 = vcmp.ne.s32.totalorder %v1058, 0
    %vm1075 = vcmp.ne.s32.totalorder %v1059, 0
    %vm1076 = vcmp.ne.s32.totalorder %v1060, 0
    %vm1077 = vcmp.ne.s32.totalorder %v1061, 0
    %vm1078 = vcmp.ne.s32.totalorder %v1062, 0
    %vm1079 = vcmp.ne.s32.totalorder %v1063, 0
    %vm1080 = vcmp.ne.s32.totalorder %v1064, 0
    %vm1081 = vcmp.ne.s32.totalorder %v1065, 0
    %vm1082 = vcmp.ne.s32.totalorder %v1066, 0
    %vm1083 = vcmp.ne.s32.totalorder %v1067, 0
    %vm1084 = vcmp.ne.s32.totalorder %v1068, 0
    %vm1085 = vcmp.ne.s32.totalorder %v1069, 0
    %vm1086 = vcmp.ne.s32.totalorder %v1070, 0
    %vm1087 = vcmp.ne.s32.totalorder %v1071, 0
    %vm1088 = vcmp.ne.s32.totalorder %v1072, 0
    %vm1089 = vcmp.ne.s32.totalorder %v1073, 0
    %v1090 = vsel %vm1074, 1, 0
    %v1091 = vsel %vm1075, 1, 0
    %v1092 = vsel %vm1076, 1, 0
    %v1093 = vsel %vm1077, 1, 0
    %v1094 = vsel %vm1078, 1, 0
    %v1095 = vsel %vm1079, 1, 0
    %v1096 = vsel %vm1080, 1, 0
    %v1097 = vsel %vm1081, 1, 0
    %v1098 = vsel %vm1082, 1, 0
    %v1099 = vsel %vm1083, 1, 0
    %v1100 = vsel %vm1084, 1, 0
    %v1101 = vsel %vm1085, 1, 0
    %v1102 = vsel %vm1086, 1, 0
    %v1103 = vsel %vm1087, 1, 0
    %v1104 = vsel %vm1088, 1, 0
    %v1105 = vsel %vm1089, 1, 0
    %v1106 = vcvt.s32.f32 %v1090
    %v1107 = vcvt.s32.f32 %v1091
    %v1108 = vcvt.s32.f32 %v1092
    %v1109 = vcvt.s32.f32 %v1093
    %v1110 = vcvt.s32.f32 %v1094
    %v1111 = vcvt.s32.f32 %v1095
    %v1112 = vcvt.s32.f32 %v1096
    %v1113 = vcvt.s32.f32 %v1097
    %v1114 = vcvt.s32.f32 %v1098
    %v1115 = vcvt.s32.f32 %v1099
    %v1116 = vcvt.s32.f32 %v1100
    %v1117 = vcvt.s32.f32 %v1101
    %v1118 = vcvt.s32.f32 %v1102
    %v1119 = vcvt.s32.f32 %v1103
    %v1120 = vcvt.s32.f32 %v1104
    %v1121 = vcvt.s32.f32 %v1105
    %v1124 = vunpack.c.l.b16 %v466
    %v1125 = vunpack.c.l.b16 %v467
    %v1126 = vpack.c.b16 %v1125, %v1124
    %v1130 = vunpack.c.l.b16 %v730
    %v1131 = vunpack.c.l.b16 %v731
    %v1132 = vpack.c.b16 %v1131, %v1130
    %1134 = vmatpush.bf16.xpose.msra.mxu0 0
    %1135 = vmatpush.bf16.xpose.msra.mxu0 0
    %1136 = vmatpush.bf16.xpose.msra.mxu0 0
    %1137 = vmatpush.bf16.xpose.msra.mxu0 0
    %1138 = vmatpush.bf16.xpose.msra.mxu0 0
    %1139 = vmatpush.bf16.xpose.msra.mxu0 0
    %1140 = vmatpush.bf16.xpose.msra.mxu0 0
    %1141 = vmatpush.bf16.xpose.msra.mxu0 %v1132
    %1142 = vmatmul.bf16.gmra.mxu0 %v1126
    %v1143 = vpop.f32.mrf.mxu0
    %v1144 = vadd.f32 0.0, %v1143
    %v1145 = vpop.f32.mrf.mxu0
    %v1146 = vadd.f32 0.0, %v1145
    %1147 = vdwg.mxu0
    %v1150 = vunpack.c.l.b16 %v468
    %v1151 = vunpack.c.l.b16 %v469
    %v1152 = vpack.c.b16 %v1151, %v1150
    %v1156 = vunpack.c.l.b16 %v732
    %v1157 = vunpack.c.l.b16 %v733
    %v1158 = vpack.c.b16 %v1157, %v1156
    %1160 = vmatpush.bf16.xpose.msra.mxu0 0
    %1161 = vmatpush.bf16.xpose.msra.mxu0 0
    %1162 = vmatpush.bf16.xpose.msra.mxu0 0
    %1163 = vmatpush.bf16.xpose.msra.mxu0 0
    %1164 = vmatpush.bf16.xpose.msra.mxu0 0
    %1165 = vmatpush.bf16.xpose.msra.mxu0 0
    %1166 = vmatpush.bf16.xpose.msra.mxu0 0
    %1167 = vmatpush.bf16.xpose.msra.mxu0 %v1158
    %1168 = vmatmul.bf16.gmra.mxu0 %v1152
    %v1169 = vpop.f32.mrf.mxu0
    %v1170 = vadd.f32 0.0, %v1169
    %v1171 = vpop.f32.mrf.mxu0
    %v1172 = vadd.f32 0.0, %v1171
    %1173 = vdwg.mxu0
    %v1176 = vunpack.c.l.b16 %v470
    %v1177 = vunpack.c.l.b16 %v471
    %v1178 = vpack.c.b16 %v1177, %v1176
    %v1182 = vunpack.c.l.b16 %v734
    %v1183 = vunpack.c.l.b16 %v735
    %v1184 = vpack.c.b16 %v1183, %v1182
    %1186 = vmatpush.bf16.xpose.msra.mxu0 0
    %1187 = vmatpush.bf16.xpose.msra.mxu0 0
    %1188 = vmatpush.bf16.xpose.msra.mxu0 0
    %1189 = vmatpush.bf16.xpose.msra.mxu0 0
    %1190 = vmatpush.bf16.xpose.msra.mxu0 0
    %1191 = vmatpush.bf16.xpose.msra.mxu0 0
    %1192 = vmatpush.bf16.xpose.msra.mxu0 0
    %1193 = vmatpush.bf16.xpose.msra.mxu0 %v1184
    %1194 = vmatmul.bf16.gmra.mxu0 %v1178
    %v1195 = vpop.f32.mrf.mxu0
    %v1196 = vadd.f32 0.0, %v1195
    %v1197 = vpop.f32.mrf.mxu0
    %v1198 = vadd.f32 0.0, %v1197
    %1199 = vdwg.mxu0
    %v1202 = vunpack.c.l.b16 %v472
    %v1203 = vunpack.c.l.b16 %v473
    %v1204 = vpack.c.b16 %v1203, %v1202
    %v1208 = vunpack.c.l.b16 %v736
    %v1209 = vunpack.c.l.b16 %v737
    %v1210 = vpack.c.b16 %v1209, %v1208
    %1212 = vmatpush.bf16.xpose.msra.mxu0 0
    %1213 = vmatpush.bf16.xpose.msra.mxu0 0
    %1214 = vmatpush.bf16.xpose.msra.mxu0 0
    %1215 = vmatpush.bf16.xpose.msra.mxu0 0
    %1216 = vmatpush.bf16.xpose.msra.mxu0 0
    %1217 = vmatpush.bf16.xpose.msra.mxu0 0
    %1218 = vmatpush.bf16.xpose.msra.mxu0 0
    %1219 = vmatpush.bf16.xpose.msra.mxu0 %v1210
    %1220 = vmatmul.bf16.gmra.mxu0 %v1204
    %v1221 = vpop.f32.mrf.mxu0
    %v1222 = vadd.f32 0.0, %v1221
    %v1223 = vpop.f32.mrf.mxu0
    %v1224 = vadd.f32 0.0, %v1223
    %1225 = vdwg.mxu0
    %v1228 = vunpack.c.l.b16 %v474
    %v1229 = vunpack.c.l.b16 %v475
    %v1230 = vpack.c.b16 %v1229, %v1228
    %v1234 = vunpack.c.l.b16 %v738
    %v1235 = vunpack.c.l.b16 %v739
    %v1236 = vpack.c.b16 %v1235, %v1234
    %1238 = vmatpush.bf16.xpose.msra.mxu0 0
    %1239 = vmatpush.bf16.xpose.msra.mxu0 0
    %1240 = vmatpush.bf16.xpose.msra.mxu0 0
    %1241 = vmatpush.bf16.xpose.msra.mxu0 0
    %1242 = vmatpush.bf16.xpose.msra.mxu0 0
    %1243 = vmatpush.bf16.xpose.msra.mxu0 0
    %1244 = vmatpush.bf16.xpose.msra.mxu0 0
    %1245 = vmatpush.bf16.xpose.msra.mxu0 %v1236
    %1246 = vmatmul.bf16.gmra.mxu0 %v1230
    %v1247 = vpop.f32.mrf.mxu0
    %v1248 = vadd.f32 0.0, %v1247
    %v1249 = vpop.f32.mrf.mxu0
    %v1250 = vadd.f32 0.0, %v1249
    %1251 = vdwg.mxu0
    %v1254 = vunpack.c.l.b16 %v476
    %v1255 = vunpack.c.l.b16 %v477
    %v1256 = vpack.c.b16 %v1255, %v1254
    %v1260 = vunpack.c.l.b16 %v740
    %v1261 = vunpack.c.l.b16 %v741
    %v1262 = vpack.c.b16 %v1261, %v1260
    %1264 = vmatpush.bf16.xpose.msra.mxu0 0
    %1265 = vmatpush.bf16.xpose.msra.mxu0 0
    %1266 = vmatpush.bf16.xpose.msra.mxu0 0
    %1267 = vmatpush.bf16.xpose.msra.mxu0 0
    %1268 = vmatpush.bf16.xpose.msra.mxu0 0
    %1269 = vmatpush.bf16.xpose.msra.mxu0 0
    %1270 = vmatpush.bf16.xpose.msra.mxu0 0
    %1271 = vmatpush.bf16.xpose.msra.mxu0 %v1262
    %1272 = vmatmul.bf16.gmra.mxu0 %v1256
    %v1273 = vpop.f32.mrf.mxu0
    %v1274 = vadd.f32 0.0, %v1273
    %v1275 = vpop.f32.mrf.mxu0
    %v1276 = vadd.f32 0.0, %v1275
    %1277 = vdwg.mxu0
    %v1280 = vunpack.c.l.b16 %v478
    %v1281 = vunpack.c.l.b16 %v479
    %v1282 = vpack.c.b16 %v1281, %v1280
    %v1286 = vunpack.c.l.b16 %v742
    %v1287 = vunpack.c.l.b16 %v743
    %v1288 = vpack.c.b16 %v1287, %v1286
    %1290 = vmatpush.bf16.xpose.msra.mxu0 0
    %1291 = vmatpush.bf16.xpose.msra.mxu0 0
    %1292 = vmatpush.bf16.xpose.msra.mxu0 0
    %1293 = vmatpush.bf16.xpose.msra.mxu0 0
    %1294 = vmatpush.bf16.xpose.msra.mxu0 0
    %1295 = vmatpush.bf16.xpose.msra.mxu0 0
    %1296 = vmatpush.bf16.xpose.msra.mxu0 0
    %1297 = vmatpush.bf16.xpose.msra.mxu0 %v1288
    %1298 = vmatmul.bf16.gmra.mxu0 %v1282
    %v1299 = vpop.f32.mrf.mxu0
    %v1300 = vadd.f32 0.0, %v1299
    %v1301 = vpop.f32.mrf.mxu0
    %v1302 = vadd.f32 0.0, %v1301
    %1303 = vdwg.mxu0
    %v1306 = vunpack.c.l.b16 %v480
    %v1307 = vunpack.c.l.b16 %v481
    %v1308 = vpack.c.b16 %v1307, %v1306
    %v1312 = vunpack.c.l.b16 %v744
    %v1313 = vunpack.c.l.b16 %v745
    %v1314 = vpack.c.b16 %v1313, %v1312
    %1316 = vmatpush.bf16.xpose.msra.mxu0 0
    %1317 = vmatpush.bf16.xpose.msra.mxu0 0
    %1318 = vmatpush.bf16.xpose.msra.mxu0 0
    %1319 = vmatpush.bf16.xpose.msra.mxu0 0
    %1320 = vmatpush.bf16.xpose.msra.mxu0 0
    %1321 = vmatpush.bf16.xpose.msra.mxu0 0
    %1322 = vmatpush.bf16.xpose.msra.mxu0 0
    %1323 = vmatpush.bf16.xpose.msra.mxu0 %v1314
    %1324 = vmatmul.bf16.gmra.mxu0 %v1308
    %v1325 = vpop.f32.mrf.mxu0
    %v1326 = vadd.f32 0.0, %v1325
    %v1327 = vpop.f32.mrf.mxu0
    %v1328 = vadd.f32 0.0, %v1327
    %1329 = vdwg.mxu0
    %v1330 = vmul.f32 %v1144, %v1106
    %v1331 = vmul.f32 %v1146, %v1107
    %v1332 = vmul.f32 %v1170, %v1108
    %v1333 = vmul.f32 %v1172, %v1109
    %v1334 = vmul.f32 %v1196, %v1110
    %v1335 = vmul.f32 %v1198, %v1111
    %v1336 = vmul.f32 %v1222, %v1112
    %v1337 = vmul.f32 %v1224, %v1113
    %v1338 = vmul.f32 %v1248, %v1114
    %v1339 = vmul.f32 %v1250, %v1115
    %v1340 = vmul.f32 %v1274, %v1116
    %v1341 = vmul.f32 %v1276, %v1117
    %v1342 = vmul.f32 %v1300, %v1118
    %v1343 = vmul.f32 %v1302, %v1119
    %v1344 = vmul.f32 %v1326, %v1120
    %v1345 = vmul.f32 %v1328, %v1121
    %v1346 = vpack.c.bf16 %v1330, %v1330
    %v1347 = vpack.c.bf16 %v1331, %v1331
    %v1348 = vpack.c.bf16 %v1332, %v1332
    %v1349 = vpack.c.bf16 %v1333, %v1333
    %v1350 = vpack.c.bf16 %v1334, %v1334
    %v1351 = vpack.c.bf16 %v1335, %v1335
    %v1352 = vpack.c.bf16 %v1336, %v1336
    %v1353 = vpack.c.bf16 %v1337, %v1337
    %v1354 = vpack.c.bf16 %v1338, %v1338
    %v1355 = vpack.c.bf16 %v1339, %v1339
    %v1356 = vpack.c.bf16 %v1340, %v1340
    %v1357 = vpack.c.bf16 %v1341, %v1341
    %v1358 = vpack.c.bf16 %v1342, %v1342
    %v1359 = vpack.c.bf16 %v1343, %v1343
    %v1360 = vpack.c.bf16 %v1344, %v1344
    %v1361 = vpack.c.bf16 %v1345, %v1345
    %v1362 = vrot.slane %v466, 4
    %v1363 = vrot.slane %v467, 4
    %v1364 = vrot.slane %v730, 4
    %v1365 = vrot.slane %v731, 4
    %v1366 = vunpack.c.l.b16 %v1362
    %v1367 = vunpack.c.l.b16 %v1363
    %v1368 = vpack.c.b16 %v1367, %v1366
    %v1370 = vunpack.c.l.b16 %v1364
    %v1371 = vunpack.c.l.b16 %v1365
    %v1372 = vpack.c.b16 %v1371, %v1370
    %1374 = vmatpush.bf16.xpose.msra.mxu0 0
    %1375 = vmatpush.bf16.xpose.msra.mxu0 0
    %1376 = vmatpush.bf16.xpose.msra.mxu0 0
    %1377 = vmatpush.bf16.xpose.msra.mxu0 0
    %1378 = vmatpush.bf16.xpose.msra.mxu0 0
    %1379 = vmatpush.bf16.xpose.msra.mxu0 0
    %1380 = vmatpush.bf16.xpose.msra.mxu0 0
    %1381 = vmatpush.bf16.xpose.msra.mxu0 %v1372
    %1382 = vmatmul.bf16.gmra.mxu0 %v1368
    %v1383 = vpop.f32.mrf.mxu0
    %v1384 = vadd.f32 0.0, %v1383
    %v1385 = vpop.f32.mrf.mxu0
    %v1386 = vadd.f32 0.0, %v1385
    %1387 = vdwg.mxu0
    %v1388 = vrot.slane %v468, 4
    %v1389 = vrot.slane %v469, 4
    %v1390 = vrot.slane %v732, 4
    %v1391 = vrot.slane %v733, 4
    %v1392 = vunpack.c.l.b16 %v1388
    %v1393 = vunpack.c.l.b16 %v1389
    %v1394 = vpack.c.b16 %v1393, %v1392
    %v1396 = vunpack.c.l.b16 %v1390
    %v1397 = vunpack.c.l.b16 %v1391
    %v1398 = vpack.c.b16 %v1397, %v1396
    %1400 = vmatpush.bf16.xpose.msra.mxu0 0
    %1401 = vmatpush.bf16.xpose.msra.mxu0 0
    %1402 = vmatpush.bf16.xpose.msra.mxu0 0
    %1403 = vmatpush.bf16.xpose.msra.mxu0 0
    %1404 = vmatpush.bf16.xpose.msra.mxu0 0
    %1405 = vmatpush.bf16.xpose.msra.mxu0 0
    %1406 = vmatpush.bf16.xpose.msra.mxu0 0
    %1407 = vmatpush.bf16.xpose.msra.mxu0 %v1398
    %1408 = vmatmul.bf16.gmra.mxu0 %v1394
    %v1409 = vpop.f32.mrf.mxu0
    %v1410 = vadd.f32 0.0, %v1409
    %v1411 = vpop.f32.mrf.mxu0
    %v1412 = vadd.f32 0.0, %v1411
    %1413 = vdwg.mxu0
    %v1414 = vrot.slane %v470, 4
    %v1415 = vrot.slane %v471, 4
    %v1416 = vrot.slane %v734, 4
    %v1417 = vrot.slane %v735, 4
    %v1418 = vunpack.c.l.b16 %v1414
    %v1419 = vunpack.c.l.b16 %v1415
    %v1420 = vpack.c.b16 %v1419, %v1418
    %v1422 = vunpack.c.l.b16 %v1416
    %v1423 = vunpack.c.l.b16 %v1417
    %v1424 = vpack.c.b16 %v1423, %v1422
    %1426 = vmatpush.bf16.xpose.msra.mxu0 0
    %1427 = vmatpush.bf16.xpose.msra.mxu0 0
    %1428 = vmatpush.bf16.xpose.msra.mxu0 0
    %1429 = vmatpush.bf16.xpose.msra.mxu0 0
    %1430 = vmatpush.bf16.xpose.msra.mxu0 0
    %1431 = vmatpush.bf16.xpose.msra.mxu0 0
    %1432 = vmatpush.bf16.xpose.msra.mxu0 0
    %1433 = vmatpush.bf16.xpose.msra.mxu0 %v1424
    %1434 = vmatmul.bf16.gmra.mxu0 %v1420
    %v1435 = vpop.f32.mrf.mxu0
    %v1436 = vadd.f32 0.0, %v1435
    %v1437 = vpop.f32.mrf.mxu0
    %v1438 = vadd.f32 0.0, %v1437
    %1439 = vdwg.mxu0
    %v1440 = vrot.slane %v472, 4
    %v1441 = vrot.slane %v473, 4
    %v1442 = vrot.slane %v736, 4
    %v1443 = vrot.slane %v737, 4
    %v1444 = vunpack.c.l.b16 %v1440
    %v1445 = vunpack.c.l.b16 %v1441
    %v1446 = vpack.c.b16 %v1445, %v1444
    %v1448 = vunpack.c.l.b16 %v1442
    %v1449 = vunpack.c.l.b16 %v1443
    %v1450 = vpack.c.b16 %v1449, %v1448
    %1452 = vmatpush.bf16.xpose.msra.mxu0 0
    %1453 = vmatpush.bf16.xpose.msra.mxu0 0
    %1454 = vmatpush.bf16.xpose.msra.mxu0 0
    %1455 = vmatpush.bf16.xpose.msra.mxu0 0
    %1456 = vmatpush.bf16.xpose.msra.mxu0 0
    %1457 = vmatpush.bf16.xpose.msra.mxu0 0
    %1458 = vmatpush.bf16.xpose.msra.mxu0 0
    %1459 = vmatpush.bf16.xpose.msra.mxu0 %v1450
    %1460 = vmatmul.bf16.gmra.mxu0 %v1446
    %v1461 = vpop.f32.mrf.mxu0
    %v1462 = vadd.f32 0.0, %v1461
    %v1463 = vpop.f32.mrf.mxu0
    %v1464 = vadd.f32 0.0, %v1463
    %1465 = vdwg.mxu0
    %v1466 = vrot.slane %v474, 4
    %v1467 = vrot.slane %v475, 4
    %v1468 = vrot.slane %v738, 4
    %v1469 = vrot.slane %v739, 4
    %v1470 = vunpack.c.l.b16 %v1466
    %v1471 = vunpack.c.l.b16 %v1467
    %v1472 = vpack.c.b16 %v1471, %v1470
    %v1474 = vunpack.c.l.b16 %v1468
    %v1475 = vunpack.c.l.b16 %v1469
    %v1476 = vpack.c.b16 %v1475, %v1474
    %1478 = vmatpush.bf16.xpose.msra.mxu0 0
    %1479 = vmatpush.bf16.xpose.msra.mxu0 0
    %1480 = vmatpush.bf16.xpose.msra.mxu0 0
    %1481 = vmatpush.bf16.xpose.msra.mxu0 0
    %1482 = vmatpush.bf16.xpose.msra.mxu0 0
    %1483 = vmatpush.bf16.xpose.msra.mxu0 0
    %1484 = vmatpush.bf16.xpose.msra.mxu0 0
    %1485 = vmatpush.bf16.xpose.msra.mxu0 %v1476
    %1486 = vmatmul.bf16.gmra.mxu0 %v1472
    %v1487 = vpop.f32.mrf.mxu0
    %v1488 = vadd.f32 0.0, %v1487
    %v1489 = vpop.f32.mrf.mxu0
    %v1490 = vadd.f32 0.0, %v1489
    %1491 = vdwg.mxu0
    %v1492 = vrot.slane %v476, 4
    %v1493 = vrot.slane %v477, 4
    %v1494 = vrot.slane %v740, 4
    %v1495 = vrot.slane %v741, 4
    %v1496 = vunpack.c.l.b16 %v1492
    %v1497 = vunpack.c.l.b16 %v1493
    %v1498 = vpack.c.b16 %v1497, %v1496
    %v1500 = vunpack.c.l.b16 %v1494
    %v1501 = vunpack.c.l.b16 %v1495
    %v1502 = vpack.c.b16 %v1501, %v1500
    %1504 = vmatpush.bf16.xpose.msra.mxu0 0
    %1505 = vmatpush.bf16.xpose.msra.mxu0 0
    %1506 = vmatpush.bf16.xpose.msra.mxu0 0
    %1507 = vmatpush.bf16.xpose.msra.mxu0 0
    %1508 = vmatpush.bf16.xpose.msra.mxu0 0
    %1509 = vmatpush.bf16.xpose.msra.mxu0 0
    %1510 = vmatpush.bf16.xpose.msra.mxu0 0
    %1511 = vmatpush.bf16.xpose.msra.mxu0 %v1502
    %1512 = vmatmul.bf16.gmra.mxu0 %v1498
    %v1513 = vpop.f32.mrf.mxu0
    %v1514 = vadd.f32 0.0, %v1513
    %v1515 = vpop.f32.mrf.mxu0
    %v1516 = vadd.f32 0.0, %v1515
    %1517 = vdwg.mxu0
    %v1518 = vrot.slane %v478, 4
    %v1519 = vrot.slane %v479, 4
    %v1520 = vrot.slane %v742, 4
    %v1521 = vrot.slane %v743, 4
    %v1522 = vunpack.c.l.b16 %v1518
    %v1523 = vunpack.c.l.b16 %v1519
    %v1524 = vpack.c.b16 %v1523, %v1522
    %v1526 = vunpack.c.l.b16 %v1520
    %v1527 = vunpack.c.l.b16 %v1521
    %v1528 = vpack.c.b16 %v1527, %v1526
    %1530 = vmatpush.bf16.xpose.msra.mxu0 0
    %1531 = vmatpush.bf16.xpose.msra.mxu0 0
    %1532 = vmatpush.bf16.xpose.msra.mxu0 0
    %1533 = vmatpush.bf16.xpose.msra.mxu0 0
    %1534 = vmatpush.bf16.xpose.msra.mxu0 0
    %1535 = vmatpush.bf16.xpose.msra.mxu0 0
    %1536 = vmatpush.bf16.xpose.msra.mxu0 0
    %1537 = vmatpush.bf16.xpose.msra.mxu0 %v1528
    %1538 = vmatmul.bf16.gmra.mxu0 %v1524
    %v1539 = vpop.f32.mrf.mxu0
    %v1540 = vadd.f32 0.0, %v1539
    %v1541 = vpop.f32.mrf.mxu0
    %v1542 = vadd.f32 0.0, %v1541
    %1543 = vdwg.mxu0
    %v1544 = vrot.slane %v480, 4
    %v1545 = vrot.slane %v481, 4
    %v1546 = vrot.slane %v744, 4
    %v1547 = vrot.slane %v745, 4
    %v1548 = vunpack.c.l.b16 %v1544
    %v1549 = vunpack.c.l.b16 %v1545
    %v1550 = vpack.c.b16 %v1549, %v1548
    %v1552 = vunpack.c.l.b16 %v1546
    %v1553 = vunpack.c.l.b16 %v1547
    %v1554 = vpack.c.b16 %v1553, %v1552
    %1556 = vmatpush.bf16.xpose.msra.mxu0 0
    %1557 = vmatpush.bf16.xpose.msra.mxu0 0
    %1558 = vmatpush.bf16.xpose.msra.mxu0 0
    %1559 = vmatpush.bf16.xpose.msra.mxu0 0
    %1560 = vmatpush.bf16.xpose.msra.mxu0 0
    %1561 = vmatpush.bf16.xpose.msra.mxu0 0
    %1562 = vmatpush.bf16.xpose.msra.mxu0 0
    %1563 = vmatpush.bf16.xpose.msra.mxu0 %v1554
    %1564 = vmatmul.bf16.gmra.mxu0 %v1550
    %v1565 = vpop.f32.mrf.mxu0
    %v1566 = vadd.f32 0.0, %v1565
    %v1567 = vpop.f32.mrf.mxu0
    %v1568 = vadd.f32 0.0, %v1567
    %1569 = vdwg.mxu0
    %v1570 = vmul.f32 %v1384, %v1106
    %v1571 = vmul.f32 %v1386, %v1107
    %v1572 = vmul.f32 %v1410, %v1108
    %v1573 = vmul.f32 %v1412, %v1109
    %v1574 = vmul.f32 %v1436, %v1110
    %v1575 = vmul.f32 %v1438, %v1111
    %v1576 = vmul.f32 %v1462, %v1112
    %v1577 = vmul.f32 %v1464, %v1113
    %v1578 = vmul.f32 %v1488, %v1114
    %v1579 = vmul.f32 %v1490, %v1115
    %v1580 = vmul.f32 %v1514, %v1116
    %v1581 = vmul.f32 %v1516, %v1117
    %v1582 = vmul.f32 %v1540, %v1118
    %v1583 = vmul.f32 %v1542, %v1119
    %v1584 = vmul.f32 %v1566, %v1120
    %v1585 = vmul.f32 %v1568, %v1121
    %v1586 = vpack.c.bf16 %v1570, %v1570
    %v1587 = vpack.c.bf16 %v1571, %v1571
    %v1588 = vpack.c.bf16 %v1572, %v1572
    %v1589 = vpack.c.bf16 %v1573, %v1573
    %v1590 = vpack.c.bf16 %v1574, %v1574
    %v1591 = vpack.c.bf16 %v1575, %v1575
    %v1592 = vpack.c.bf16 %v1576, %v1576
    %v1593 = vpack.c.bf16 %v1577, %v1577
    %v1594 = vpack.c.bf16 %v1578, %v1578
    %v1595 = vpack.c.bf16 %v1579, %v1579
    %v1596 = vpack.c.bf16 %v1580, %v1580
    %v1597 = vpack.c.bf16 %v1581, %v1581
    %v1598 = vpack.c.bf16 %v1582, %v1582
    %v1599 = vpack.c.bf16 %v1583, %v1583
    %v1600 = vpack.c.bf16 %v1584, %v1584
    %v1601 = vpack.c.bf16 %v1585, %v1585
    %v1604 = vrot.slane %v994, 4
    %v1605 = vrot.slane %v995, 4
    %v1608 = vunpack.c.l.b16 %v1586
    %v1609 = vunpack.c.l.b16 %v1587
    %v1610 = vpack.c.b16 %v1609, %v1608
    %v1611 = vunpack.c.l.b16 %v1604
    %v1612 = vunpack.c.l.b16 %v1605
    %v1613 = vpack.c.b16 %v1612, %v1611
    %vm1615 = vcmask 130048
    %v1617 = vsel %vm1615, %v1610, 0
    %1619 = vmatpush.bf16.msra.mxu0 0
    %1620 = vmatpush.bf16.msra.mxu0 0
    %1621 = vmatpush.bf16.msra.mxu0 0
    %1622 = vmatpush.bf16.msra.mxu0 0
    %1623 = vmatpush.bf16.msra.mxu0 0
    %1624 = vmatpush.bf16.msra.mxu0 0
    %1625 = vmatpush.bf16.msra.mxu0 0
    %1626 = vmatpush.bf16.msra.mxu0 %v1613
    %1627 = vmatmul.bf16.gmra.mxu0 %v1617
    %v1628 = vpop.f32.mrf.mxu0
    %v1629 = vadd.f32 0.0, %v1628
    %v1630 = vpop.f32.mrf.mxu0
    %v1631 = vadd.f32 0.0, %v1630
    %1632 = vdwg.mxu0
    %v1635 = vrot.slane %v996, 4
    %v1636 = vrot.slane %v997, 4
    %v1639 = vunpack.c.l.b16 %v1588
    %v1640 = vunpack.c.l.b16 %v1589
    %v1641 = vpack.c.b16 %v1640, %v1639
    %v1642 = vunpack.c.l.b16 %v1635
    %v1643 = vunpack.c.l.b16 %v1636
    %v1644 = vpack.c.b16 %v1643, %v1642
    %v1647 = vsel %vm1615, %v1641, 0
    %1649 = vmatpush.bf16.msra.mxu0 0
    %1650 = vmatpush.bf16.msra.mxu0 0
    %1651 = vmatpush.bf16.msra.mxu0 0
    %1652 = vmatpush.bf16.msra.mxu0 0
    %1653 = vmatpush.bf16.msra.mxu0 0
    %1654 = vmatpush.bf16.msra.mxu0 0
    %1655 = vmatpush.bf16.msra.mxu0 0
    %1656 = vmatpush.bf16.msra.mxu0 %v1644
    %1657 = vmatmul.bf16.gmra.mxu0 %v1647
    %v1658 = vpop.f32.mrf.mxu0
    %v1659 = vadd.f32 0.0, %v1658
    %v1660 = vpop.f32.mrf.mxu0
    %v1661 = vadd.f32 0.0, %v1660
    %1662 = vdwg.mxu0
    %v1665 = vrot.slane %v998, 4
    %v1666 = vrot.slane %v999, 4
    %v1669 = vunpack.c.l.b16 %v1590
    %v1670 = vunpack.c.l.b16 %v1591
    %v1671 = vpack.c.b16 %v1670, %v1669
    %v1672 = vunpack.c.l.b16 %v1665
    %v1673 = vunpack.c.l.b16 %v1666
    %v1674 = vpack.c.b16 %v1673, %v1672
    %v1677 = vsel %vm1615, %v1671, 0
    %1679 = vmatpush.bf16.msra.mxu0 0
    %1680 = vmatpush.bf16.msra.mxu0 0
    %1681 = vmatpush.bf16.msra.mxu0 0
    %1682 = vmatpush.bf16.msra.mxu0 0
    %1683 = vmatpush.bf16.msra.mxu0 0
    %1684 = vmatpush.bf16.msra.mxu0 0
    %1685 = vmatpush.bf16.msra.mxu0 0
    %1686 = vmatpush.bf16.msra.mxu0 %v1674
    %1687 = vmatmul.bf16.gmra.mxu0 %v1677
    %v1688 = vpop.f32.mrf.mxu0
    %v1689 = vadd.f32 0.0, %v1688
    %v1690 = vpop.f32.mrf.mxu0
    %v1691 = vadd.f32 0.0, %v1690
    %1692 = vdwg.mxu0
    %v1695 = vrot.slane %v1000, 4
    %v1696 = vrot.slane %v1001, 4
    %v1699 = vunpack.c.l.b16 %v1592
    %v1700 = vunpack.c.l.b16 %v1593
    %v1701 = vpack.c.b16 %v1700, %v1699
    %v1702 = vunpack.c.l.b16 %v1695
    %v1703 = vunpack.c.l.b16 %v1696
    %v1704 = vpack.c.b16 %v1703, %v1702
    %v1707 = vsel %vm1615, %v1701, 0
    %1709 = vmatpush.bf16.msra.mxu0 0
    %1710 = vmatpush.bf16.msra.mxu0 0
    %1711 = vmatpush.bf16.msra.mxu0 0
    %1712 = vmatpush.bf16.msra.mxu0 0
    %1713 = vmatpush.bf16.msra.mxu0 0
    %1714 = vmatpush.bf16.msra.mxu0 0
    %1715 = vmatpush.bf16.msra.mxu0 0
    %1716 = vmatpush.bf16.msra.mxu0 %v1704
    %1717 = vmatmul.bf16.gmra.mxu0 %v1707
    %v1718 = vpop.f32.mrf.mxu0
    %v1719 = vadd.f32 0.0, %v1718
    %v1720 = vpop.f32.mrf.mxu0
    %v1721 = vadd.f32 0.0, %v1720
    %1722 = vdwg.mxu0
    %v1725 = vrot.slane %v1002, 4
    %v1726 = vrot.slane %v1003, 4
    %v1729 = vunpack.c.l.b16 %v1594
    %v1730 = vunpack.c.l.b16 %v1595
    %v1731 = vpack.c.b16 %v1730, %v1729
    %v1732 = vunpack.c.l.b16 %v1725
    %v1733 = vunpack.c.l.b16 %v1726
    %v1734 = vpack.c.b16 %v1733, %v1732
    %v1737 = vsel %vm1615, %v1731, 0
    %1739 = vmatpush.bf16.msra.mxu0 0
    %1740 = vmatpush.bf16.msra.mxu0 0
    %1741 = vmatpush.bf16.msra.mxu0 0
    %1742 = vmatpush.bf16.msra.mxu0 0
    %1743 = vmatpush.bf16.msra.mxu0 0
    %1744 = vmatpush.bf16.msra.mxu0 0
    %1745 = vmatpush.bf16.msra.mxu0 0
    %1746 = vmatpush.bf16.msra.mxu0 %v1734
    %1747 = vmatmul.bf16.gmra.mxu0 %v1737
    %v1748 = vpop.f32.mrf.mxu0
    %v1749 = vadd.f32 0.0, %v1748
    %v1750 = vpop.f32.mrf.mxu0
    %v1751 = vadd.f32 0.0, %v1750
    %1752 = vdwg.mxu0
    %v1755 = vrot.slane %v1004, 4
    %v1756 = vrot.slane %v1005, 4
    %v1759 = vunpack.c.l.b16 %v1596
    %v1760 = vunpack.c.l.b16 %v1597
    %v1761 = vpack.c.b16 %v1760, %v1759
    %v1762 = vunpack.c.l.b16 %v1755
    %v1763 = vunpack.c.l.b16 %v1756
    %v1764 = vpack.c.b16 %v1763, %v1762
    %v1767 = vsel %vm1615, %v1761, 0
    %1769 = vmatpush.bf16.msra.mxu0 0
    %1770 = vmatpush.bf16.msra.mxu0 0
    %1771 = vmatpush.bf16.msra.mxu0 0
    %1772 = vmatpush.bf16.msra.mxu0 0
    %1773 = vmatpush.bf16.msra.mxu0 0
    %1774 = vmatpush.bf16.msra.mxu0 0
    %1775 = vmatpush.bf16.msra.mxu0 0
    %1776 = vmatpush.bf16.msra.mxu0 %v1764
    %1777 = vmatmul.bf16.gmra.mxu0 %v1767
    %v1778 = vpop.f32.mrf.mxu0
    %v1779 = vadd.f32 0.0, %v1778
    %v1780 = vpop.f32.mrf.mxu0
    %v1781 = vadd.f32 0.0, %v1780
    %1782 = vdwg.mxu0
    %v1785 = vrot.slane %v1006, 4
    %v1786 = vrot.slane %v1007, 4
    %v1789 = vunpack.c.l.b16 %v1598
    %v1790 = vunpack.c.l.b16 %v1599
    %v1791 = vpack.c.b16 %v1790, %v1789
    %v1792 = vunpack.c.l.b16 %v1785
    %v1793 = vunpack.c.l.b16 %v1786
    %v1794 = vpack.c.b16 %v1793, %v1792
    %v1797 = vsel %vm1615, %v1791, 0
    %1799 = vmatpush.bf16.msra.mxu0 0
    %1800 = vmatpush.bf16.msra.mxu0 0
    %1801 = vmatpush.bf16.msra.mxu0 0
    %1802 = vmatpush.bf16.msra.mxu0 0
    %1803 = vmatpush.bf16.msra.mxu0 0
    %1804 = vmatpush.bf16.msra.mxu0 0
    %1805 = vmatpush.bf16.msra.mxu0 0
    %1806 = vmatpush.bf16.msra.mxu0 %v1794
    %1807 = vmatmul.bf16.gmra.mxu0 %v1797
    %v1808 = vpop.f32.mrf.mxu0
    %v1809 = vadd.f32 0.0, %v1808
    %v1810 = vpop.f32.mrf.mxu0
    %v1811 = vadd.f32 0.0, %v1810
    %1812 = vdwg.mxu0
    %v1815 = vrot.slane %v1008, 4
    %v1816 = vrot.slane %v1009, 4
    %v1819 = vunpack.c.l.b16 %v1600
    %v1820 = vunpack.c.l.b16 %v1601
    %v1821 = vpack.c.b16 %v1820, %v1819
    %v1822 = vunpack.c.l.b16 %v1815
    %v1823 = vunpack.c.l.b16 %v1816
    %v1824 = vpack.c.b16 %v1823, %v1822
    %v1827 = vsel %vm1615, %v1821, 0
    %1829 = vmatpush.bf16.msra.mxu0 0
    %1830 = vmatpush.bf16.msra.mxu0 0
    %1831 = vmatpush.bf16.msra.mxu0 0
    %1832 = vmatpush.bf16.msra.mxu0 0
    %1833 = vmatpush.bf16.msra.mxu0 0
    %1834 = vmatpush.bf16.msra.mxu0 0
    %1835 = vmatpush.bf16.msra.mxu0 0
    %1836 = vmatpush.bf16.msra.mxu0 %v1824
    %1837 = vmatmul.bf16.gmra.mxu0 %v1827
    %v1838 = vpop.f32.mrf.mxu0
    %v1839 = vadd.f32 0.0, %v1838
    %v1840 = vpop.f32.mrf.mxu0
    %v1841 = vadd.f32 0.0, %v1840
    %1842 = vdwg.mxu0
    %v1845 = vunpack.c.l.b16 %v1346
    %v1846 = vunpack.c.l.b16 %v1347
    %v1847 = vpack.c.b16 %v1846, %v1845
    %v1848 = vunpack.c.l.b16 %v994
    %v1849 = vunpack.c.l.b16 %v995
    %v1850 = vpack.c.b16 %v1849, %v1848
    %v1853 = vsel %vm1615, %v1847, 0
    %1855 = vmatpush.bf16.msra.mxu0 0
    %1856 = vmatpush.bf16.msra.mxu0 0
    %1857 = vmatpush.bf16.msra.mxu0 0
    %1858 = vmatpush.bf16.msra.mxu0 0
    %1859 = vmatpush.bf16.msra.mxu0 0
    %1860 = vmatpush.bf16.msra.mxu0 0
    %1861 = vmatpush.bf16.msra.mxu0 0
    %1862 = vmatpush.bf16.msra.mxu0 %v1850
    %1863 = vmatmul.bf16.gmra.mxu0 %v1853
    %v1864 = vpop.f32.mrf.mxu0
    %v1865 = vadd.f32 %v1629, %v1864
    %v1866 = vpop.f32.mrf.mxu0
    %v1867 = vadd.f32 %v1631, %v1866
    %1868 = vdwg.mxu0
    %v1871 = vunpack.c.l.b16 %v1348
    %v1872 = vunpack.c.l.b16 %v1349
    %v1873 = vpack.c.b16 %v1872, %v1871
    %v1874 = vunpack.c.l.b16 %v996
    %v1875 = vunpack.c.l.b16 %v997
    %v1876 = vpack.c.b16 %v1875, %v1874
    %v1879 = vsel %vm1615, %v1873, 0
    %1881 = vmatpush.bf16.msra.mxu0 0
    %1882 = vmatpush.bf16.msra.mxu0 0
    %1883 = vmatpush.bf16.msra.mxu0 0
    %1884 = vmatpush.bf16.msra.mxu0 0
    %1885 = vmatpush.bf16.msra.mxu0 0
    %1886 = vmatpush.bf16.msra.mxu0 0
    %1887 = vmatpush.bf16.msra.mxu0 0
    %1888 = vmatpush.bf16.msra.mxu0 %v1876
    %1889 = vmatmul.bf16.gmra.mxu0 %v1879
    %v1890 = vpop.f32.mrf.mxu0
    %v1891 = vadd.f32 %v1659, %v1890
    %v1892 = vpop.f32.mrf.mxu0
    %v1893 = vadd.f32 %v1661, %v1892
    %1894 = vdwg.mxu0
    %v1897 = vunpack.c.l.b16 %v1350
    %v1898 = vunpack.c.l.b16 %v1351
    %v1899 = vpack.c.b16 %v1898, %v1897
    %v1900 = vunpack.c.l.b16 %v998
    %v1901 = vunpack.c.l.b16 %v999
    %v1902 = vpack.c.b16 %v1901, %v1900
    %v1905 = vsel %vm1615, %v1899, 0
    %1907 = vmatpush.bf16.msra.mxu0 0
    %1908 = vmatpush.bf16.msra.mxu0 0
    %1909 = vmatpush.bf16.msra.mxu0 0
    %1910 = vmatpush.bf16.msra.mxu0 0
    %1911 = vmatpush.bf16.msra.mxu0 0
    %1912 = vmatpush.bf16.msra.mxu0 0
    %1913 = vmatpush.bf16.msra.mxu0 0
    %1914 = vmatpush.bf16.msra.mxu0 %v1902
    %1915 = vmatmul.bf16.gmra.mxu0 %v1905
    %v1916 = vpop.f32.mrf.mxu0
    %v1917 = vadd.f32 %v1689, %v1916
    %v1918 = vpop.f32.mrf.mxu0
    %v1919 = vadd.f32 %v1691, %v1918
    %1920 = vdwg.mxu0
    %v1923 = vunpack.c.l.b16 %v1352
    %v1924 = vunpack.c.l.b16 %v1353
    %v1925 = vpack.c.b16 %v1924, %v1923
    %v1926 = vunpack.c.l.b16 %v1000
    %v1927 = vunpack.c.l.b16 %v1001
    %v1928 = vpack.c.b16 %v1927, %v1926
    %v1931 = vsel %vm1615, %v1925, 0
    %1933 = vmatpush.bf16.msra.mxu0 0
    %1934 = vmatpush.bf16.msra.mxu0 0
    %1935 = vmatpush.bf16.msra.mxu0 0
    %1936 = vmatpush.bf16.msra.mxu0 0
    %1937 = vmatpush.bf16.msra.mxu0 0
    %1938 = vmatpush.bf16.msra.mxu0 0
    %1939 = vmatpush.bf16.msra.mxu0 0
    %1940 = vmatpush.bf16.msra.mxu0 %v1928
    %1941 = vmatmul.bf16.gmra.mxu0 %v1931
    %v1942 = vpop.f32.mrf.mxu0
    %v1943 = vadd.f32 %v1719, %v1942
    %v1944 = vpop.f32.mrf.mxu0
    %v1945 = vadd.f32 %v1721, %v1944
    %1946 = vdwg.mxu0
    %v1949 = vunpack.c.l.b16 %v1354
    %v1950 = vunpack.c.l.b16 %v1355
    %v1951 = vpack.c.b16 %v1950, %v1949
    %v1952 = vunpack.c.l.b16 %v1002
    %v1953 = vunpack.c.l.b16 %v1003
    %v1954 = vpack.c.b16 %v1953, %v1952
    %v1957 = vsel %vm1615, %v1951, 0
    %1959 = vmatpush.bf16.msra.mxu0 0
    %1960 = vmatpush.bf16.msra.mxu0 0
    %1961 = vmatpush.bf16.msra.mxu0 0
    %1962 = vmatpush.bf16.msra.mxu0 0
    %1963 = vmatpush.bf16.msra.mxu0 0
    %1964 = vmatpush.bf16.msra.mxu0 0
    %1965 = vmatpush.bf16.msra.mxu0 0
    %1966 = vmatpush.bf16.msra.mxu0 %v1954
    %1967 = vmatmul.bf16.gmra.mxu0 %v1957
    %v1968 = vpop.f32.mrf.mxu0
    %v1969 = vadd.f32 %v1749, %v1968
    %v1970 = vpop.f32.mrf.mxu0
    %v1971 = vadd.f32 %v1751, %v1970
    %1972 = vdwg.mxu0
    %v1975 = vunpack.c.l.b16 %v1356
    %v1976 = vunpack.c.l.b16 %v1357
    %v1977 = vpack.c.b16 %v1976, %v1975
    %v1978 = vunpack.c.l.b16 %v1004
    %v1979 = vunpack.c.l.b16 %v1005
    %v1980 = vpack.c.b16 %v1979, %v1978
    %v1983 = vsel %vm1615, %v1977, 0
    %1985 = vmatpush.bf16.msra.mxu0 0
    %1986 = vmatpush.bf16.msra.mxu0 0
    %1987 = vmatpush.bf16.msra.mxu0 0
    %1988 = vmatpush.bf16.msra.mxu0 0
    %1989 = vmatpush.bf16.msra.mxu0 0
    %1990 = vmatpush.bf16.msra.mxu0 0
    %1991 = vmatpush.bf16.msra.mxu0 0
    %1992 = vmatpush.bf16.msra.mxu0 %v1980
    %1993 = vmatmul.bf16.gmra.mxu0 %v1983
    %v1994 = vpop.f32.mrf.mxu0
    %v1995 = vadd.f32 %v1779, %v1994
    %v1996 = vpop.f32.mrf.mxu0
    %v1997 = vadd.f32 %v1781, %v1996
    %1998 = vdwg.mxu0
    %v2001 = vunpack.c.l.b16 %v1358
    %v2002 = vunpack.c.l.b16 %v1359
    %v2003 = vpack.c.b16 %v2002, %v2001
    %v2004 = vunpack.c.l.b16 %v1006
    %v2005 = vunpack.c.l.b16 %v1007
    %v2006 = vpack.c.b16 %v2005, %v2004
    %v2009 = vsel %vm1615, %v2003, 0
    %2011 = vmatpush.bf16.msra.mxu0 0
    %2012 = vmatpush.bf16.msra.mxu0 0
    %2013 = vmatpush.bf16.msra.mxu0 0
    %2014 = vmatpush.bf16.msra.mxu0 0
    %2015 = vmatpush.bf16.msra.mxu0 0
    %2016 = vmatpush.bf16.msra.mxu0 0
    %2017 = vmatpush.bf16.msra.mxu0 0
    %2018 = vmatpush.bf16.msra.mxu0 %v2006
    %2019 = vmatmul.bf16.gmra.mxu0 %v2009
    %v2020 = vpop.f32.mrf.mxu0
    %v2021 = vadd.f32 %v1809, %v2020
    %v2022 = vpop.f32.mrf.mxu0
    %v2023 = vadd.f32 %v1811, %v2022
    %2024 = vdwg.mxu0
    %v2027 = vunpack.c.l.b16 %v1360
    %v2028 = vunpack.c.l.b16 %v1361
    %v2029 = vpack.c.b16 %v2028, %v2027
    %v2030 = vunpack.c.l.b16 %v1008
    %v2031 = vunpack.c.l.b16 %v1009
    %v2032 = vpack.c.b16 %v2031, %v2030
    %v2035 = vsel %vm1615, %v2029, 0
    %2037 = vmatpush.bf16.msra.mxu0 0
    %2038 = vmatpush.bf16.msra.mxu0 0
    %2039 = vmatpush.bf16.msra.mxu0 0
    %2040 = vmatpush.bf16.msra.mxu0 0
    %2041 = vmatpush.bf16.msra.mxu0 0
    %2042 = vmatpush.bf16.msra.mxu0 0
    %2043 = vmatpush.bf16.msra.mxu0 0
    %2044 = vmatpush.bf16.msra.mxu0 %v2032
    %2045 = vmatmul.bf16.gmra.mxu0 %v2035
    %v2046 = vpop.f32.mrf.mxu0
    %v2047 = vadd.f32 %v1839, %v2046
    %v2048 = vpop.f32.mrf.mxu0
    %v2049 = vadd.f32 %v1841, %v2048
    %2050 = vdwg.mxu0
    %v2051 = vpack.c.bf16 %v1867, %v1865
    %v2052 = vpack.c.bf16 %v1893, %v1891
    %v2053 = vpack.c.bf16 %v1919, %v1917
    %v2054 = vpack.c.bf16 %v1945, %v1943
    %v2055 = vpack.c.bf16 %v1971, %v1969
    %v2056 = vpack.c.bf16 %v1997, %v1995
    %v2057 = vpack.c.bf16 %v2023, %v2021
    %v2058 = vpack.c.bf16 %v2049, %v2047
    %v2059 = vld [vmem:[#allocation14] sm:$0xf]
    %v2060 = vld [vmem:[#allocation14 + $0x4] sm:$0xf]
    %v2061 = vld [vmem:[#allocation14 + $0x8] sm:$0xf]
    %v2062 = vld [vmem:[#allocation14 + $0xc] sm:$0xf]
    %v2063 = vld [vmem:[#allocation14 + $0x10] sm:$0xf]
    %v2064 = vld [vmem:[#allocation14 + $0x14] sm:$0xf]
    %v2065 = vld [vmem:[#allocation14 + $0x18] sm:$0xf]
    %v2066 = vld [vmem:[#allocation14 + $0x1c] sm:$0xf]
    %v2067 = vld [vmem:[#allocation14 + $0x20] sm:$0xf]
    %v2068 = vld [vmem:[#allocation14 + $0x24] sm:$0xf]
    %v2069 = vld [vmem:[#allocation14 + $0x28] sm:$0xf]
    %v2070 = vld [vmem:[#allocation14 + $0x2c] sm:$0xf]
    %v2071 = vld [vmem:[#allocation14 + $0x30] sm:$0xf]
    %v2072 = vld [vmem:[#allocation14 + $0x34] sm:$0xf]
    %v2073 = vld [vmem:[#allocation14 + $0x38] sm:$0xf]
    %v2074 = vld [vmem:[#allocation14 + $0x3c] sm:$0xf]
    %v2075 = vld [vmem:[%s11] sm:$0x1]
    %v2077 = vperm.slane %v2075, 0
    %v2095 = vunpack.c.l.b16 %v2059
    %v2096 = vunpack.c.l.b16 %v2060
    %v2097 = vunpack.c.l.b16 %v2061
    %v2098 = vunpack.c.l.b16 %v2062
    %v2099 = vunpack.c.l.b16 %v2063
    %v2100 = vunpack.c.l.b16 %v2064
    %v2101 = vunpack.c.l.b16 %v2065
    %v2102 = vunpack.c.l.b16 %v2066
    %v2103 = vunpack.c.l.b16 %v2067
    %v2104 = vunpack.c.l.b16 %v2068
    %v2105 = vunpack.c.l.b16 %v2069
    %v2106 = vunpack.c.l.b16 %v2070
    %v2107 = vunpack.c.l.b16 %v2071
    %v2108 = vunpack.c.l.b16 %v2072
    %v2109 = vunpack.c.l.b16 %v2073
    %v2110 = vunpack.c.l.b16 %v2074
    %v2111 = vpack.c.b16 %v2096, %v2095
    %v2112 = vpack.c.b16 %v2098, %v2097
    %v2113 = vpack.c.b16 %v2100, %v2099
    %v2114 = vpack.c.b16 %v2102, %v2101
    %v2115 = vpack.c.b16 %v2104, %v2103
    %v2116 = vpack.c.b16 %v2106, %v2105
    %v2117 = vpack.c.b16 %v2108, %v2107
    %v2118 = vpack.c.b16 %v2110, %v2109
    %2127 = vmatpush.bf16.msra.mxu0 %v2118
    %2128 = vmatpush.bf16.msra.mxu0 %v2117
    %2129 = vmatpush.bf16.msra.mxu0 %v2116
    %2130 = vmatpush.bf16.msra.mxu0 %v2115
    %2131 = vmatpush.bf16.msra.mxu0 %v2114
    %2132 = vmatpush.bf16.msra.mxu0 %v2113
    %2133 = vmatpush.bf16.msra.mxu0 %v2112
    %2134 = vmatpush.bf16.msra.mxu0 %v2111
    %2135 = vmatmul.bf16.gmra.mxu0 %v2051
    %v2136 = vpop.f32.mrf.mxu0
    %v2137 = vadd.f32 %v2077, %v2136
    %v2138 = vpop.f32.mrf.mxu0
    %v2139 = vadd.f32 %v2077, %v2138
    %2140 = vmatmul.bf16.gmra.mxu0 %v2052
    %v2141 = vpop.f32.mrf.mxu0
    %v2142 = vadd.f32 %v2077, %v2141
    %v2143 = vpop.f32.mrf.mxu0
    %v2144 = vadd.f32 %v2077, %v2143
    %2145 = vmatmul.bf16.gmra.mxu0 %v2053
    %v2146 = vpop.f32.mrf.mxu0
    %v2147 = vadd.f32 %v2077, %v2146
    %v2148 = vpop.f32.mrf.mxu0
    %v2149 = vadd.f32 %v2077, %v2148
    %2150 = vmatmul.bf16.gmra.mxu0 %v2054
    %v2151 = vpop.f32.mrf.mxu0
    %v2152 = vadd.f32 %v2077, %v2151
    %v2153 = vpop.f32.mrf.mxu0
    %v2154 = vadd.f32 %v2077, %v2153
    %2155 = vmatmul.bf16.gmra.mxu0 %v2055
    %v2156 = vpop.f32.mrf.mxu0
    %v2157 = vadd.f32 %v2077, %v2156
    %v2158 = vpop.f32.mrf.mxu0
    %v2159 = vadd.f32 %v2077, %v2158
    %2160 = vmatmul.bf16.gmra.mxu0 %v2056
    %v2161 = vpop.f32.mrf.mxu0
    %v2162 = vadd.f32 %v2077, %v2161
    %v2163 = vpop.f32.mrf.mxu0
    %v2164 = vadd.f32 %v2077, %v2163
    %2165 = vmatmul.bf16.gmra.mxu0 %v2057
    %v2166 = vpop.f32.mrf.mxu0
    %v2167 = vadd.f32 %v2077, %v2166
    %v2168 = vpop.f32.mrf.mxu0
    %v2169 = vadd.f32 %v2077, %v2168
    %2170 = vmatmul.bf16.gmra.mxu0 %v2058
    %v2171 = vpop.f32.mrf.mxu0
    %v2172 = vadd.f32 %v2077, %v2171
    %v2173 = vpop.f32.mrf.mxu0
    %v2174 = vadd.f32 %v2077, %v2173
    %2175 = vdwg.mxu0
    %2176 = vst [vmem:[#allocation16] sm:$0xff] %v2137
    %2177 = vst [vmem:[#allocation16 + $0x8] sm:$0xff] %v2139
    %2178 = vst [vmem:[#allocation16 + $0x10] sm:$0xff] %v2142
    %2179 = vst [vmem:[#allocation16 + $0x18] sm:$0xff] %v2144
    %2180 = vst [vmem:[#allocation16 + $0x20] sm:$0xff] %v2147
    %2181 = vst [vmem:[#allocation16 + $0x28] sm:$0xff] %v2149
    %2182 = vst [vmem:[#allocation16 + $0x30] sm:$0xff] %v2152
    %2183 = vst [vmem:[#allocation16 + $0x38] sm:$0xff] %v2154
    %2184 = vst [vmem:[#allocation16 + $0x40] sm:$0xff] %v2157
    %2185 = vst [vmem:[#allocation16 + $0x48] sm:$0xff] %v2159
    %2186 = vst [vmem:[#allocation16 + $0x50] sm:$0xff] %v2162
    %2187 = vst [vmem:[#allocation16 + $0x58] sm:$0xff] %v2164
    %2188 = vst [vmem:[#allocation16 + $0x60] sm:$0xff] %v2167
    %2189 = vst [vmem:[#allocation16 + $0x68] sm:$0xff] %v2169
    %2190 = vst [vmem:[#allocation16 + $0x70] sm:$0xff] %v2172
    %2191 = vst [vmem:[#allocation16 + $0x78] sm:$0xff] %v2174
    // Predicated region
    $region82: #{tpu_custom_call.1} parent=1 // pred_check
      _
    $region83: #{tpu_custom_call.1} parent=1 // pred_check_branch
      %2193 = sbr.rel (0) target = $region85
    $region84: #{tpu_custom_call.1} parent=1 // pred_region
      %2195 = vsyncadd [#allocation4], 0
      %s2196 = sshll.u32 [#allocation16], 4
      %s2197 = int_to_ptr.vmem [resolvable:$true] %s2196
      %s2198 = sshll.u32 %s12, 4
      %s2199 = int_to_ptr.hbm [resolvable:$true] %s2198
      %2204 = dma.vmem_to_hbm [thread:$0]  %s2197, 2048, %s2199, [#allocation4], 128, 128, 8
    $region85: #{tpu_custom_call.1} parent=1 // pred_fallthru
      _
    // Predicated region
    $region86: #{tpu_custom_call.1} parent=1 // pred_check
      _
    $region87: #{tpu_custom_call.1} parent=1 // pred_check_branch
      %2206 = sbr.rel (0) target = $region89
    $region88: #{tpu_custom_call.1} parent=1 // pred_region
      %2208 = dma.done [#allocation4], 2048
    $region89: #{tpu_custom_call.1} parent=1 // pred_fallthru
      _
    %2209 = vsyncpa [#allocation3], 1
    %2210 = vsyncpa [#allocation6], 1
    %2211 = vsyncpa [#allocation9], 1
    %2212 = vsyncpa [#allocation12], 1
    %2213 = vsyncpa [#allocation15], 1
    %2214 = vsyncpa [#allocation4], 1

// kernel: tpu_custom_call.1
$region0: #{tpu_custom_call.1}
  #allocation0 [shape = 'u32[]', space=smem, size = 0x4, offset = 0x4, fixed_abs, tag = 'smem constant byte address 0x4 - core index']
  #allocation1 [shape = 'u32[72,128]{1,0:T(1,128)}', space=vmem, size = 0x9000, scoped, tag = 'internal scratch']
  %s0 = inlined_call_operand.hbm [shape: bf16[8,16,128], index: 0, kind: input, shape index: {}]
  %s1 = inlined_call_operand.hbm [shape: bf16[8,16,128], index: 1, kind: input, shape index: {}]
  %s2 = inlined_call_operand.hbm [shape: bf16[8,16,128], index: 2, kind: input, shape index: {}]
  %s3 = inlined_call_operand.hbm [shape: s8[8,1,16,16], index: 3, kind: input, shape index: {}]
  %s4 = inlined_call_operand.hbm [shape: bf16[128,256], index: 4, kind: input, shape index: {}]
  %s5 = inlined_call_operand.vmem [shape: f32[1,256], index: 5, kind: input, shape index: {}]
  %s6 = inlined_call_operand.hbm [shape: bf16[128,256], index: 6, kind: input, shape index: {}]
  %s7 = inlined_call_operand.vmem [shape: f32[1,256], index: 7, kind: input, shape index: {}]
  %s8 = inlined_call_operand.hbm [shape: bf16[128,256], index: 8, kind: input, shape index: {}]
  %s9 = inlined_call_operand.vmem [shape: f32[1,256], index: 9, kind: input, shape index: {}]
  %s10 = inlined_call_operand.hbm [shape: bf16[128,128], index: 10, kind: input, shape index: {}]
  %s11 = inlined_call_operand.vmem [shape: f32[1,128], index: 11, kind: input, shape index: {}]
  %s12 = inlined_call_operand.hbm [shape: f32[128,128], index: 12, kind: output, shape index: {}]
  %s13 = sld [smem:[#allocation0]]
  $region90: #{tpu_custom_call.1} parent=0
    _
  %s15 = ssub.s32 1, %s13
  %s16 = scalar_select 0, %s15, %s13
  $region1: #{tpu_custom_call.1} parent=0
    #allocation2 [shape = 'u8[32768]{0}', space=vmem, size = 0x8000, scoped, tag = 'input window, operand 0, single buffered']
    #allocation3 [shape = 's32[1]{0}', space=sflag, size = 0x4, scoped, tag = 'scoped memory for tpu_custom_call.1']
    #allocation4 [shape = 's32[1]{0}', space=sflag, size = 0x4, scoped, tag = 'scoped memory for tpu_custom_call.1']
    #allocation5 [shape = 'u8[32768]{0}', space=vmem, size = 0x8000, scoped, tag = 'input window, operand 1, single buffered']
    #allocation6 [shape = 's32[1]{0}', space=sflag, size = 0x4, scoped, tag = 'scoped memory for tpu_custom_call.1']
    #allocation7 [shape = 'u8[32768]{0}', space=vmem, size = 0x8000, scoped, tag = 'input window, operand 2, single buffered']
    #allocation8 [shape = 'u8[16384]{0}', space=vmem, size = 0x4000, scoped, tag = 'input window, operand 3, single buffered']
    #allocation9 [shape = 's32[1]{0}', space=sflag, size = 0x4, scoped, tag = 'scoped memory for tpu_custom_call.1']
    #allocation10 [shape = 'u8[65536]{0}', space=vmem, size = 0x10000, scoped, tag = 'input window, operand 4, single buffered']
    #allocation11 [shape = 'u8[65536]{0}', space=vmem, size = 0x10000, scoped, tag = 'input window, operand 6, single buffered']
    #allocation12 [shape = 's32[1]{0}', space=sflag, size = 0x4, scoped, tag = 'scoped memory for tpu_custom_call.1']
    #allocation13 [shape = 'u8[65536]{0}', space=vmem, size = 0x10000, scoped, tag = 'input window, operand 8, single buffered']
    #allocation14 [shape = 'u8[32768]{0}', space=vmem, size = 0x8000, scoped, tag = 'input window, operand 10, single buffered']
    #allocation15 [shape = 's32[1]{0}', space=sflag, size = 0x4, scoped, tag = 'scoped memory for tpu_custom_call.1']
    #allocation16 [shape = 'u8[65536]{0}', space=vmem, size = 0x10000, scoped, tag = 'output window, operand 0, single buffered']
    %17 = vsyncpa [#allocation3], 0
    %18 = vsyncpa [#allocation6], 0
    %19 = vsyncpa [#allocation9], 0
    %20 = vsyncpa [#allocation12], 0
    %21 = vsyncpa [#allocation15], 0
    %22 = vsyncpa [#allocation4], 0
    // Predicated region
    $region2: #{tpu_custom_call.1} parent=1 // pred_check
      _
    $region3: #{tpu_custom_call.1} parent=1 // pred_check_branch
      %24 = sbr.rel (0) target = $region5
    $region4: #{tpu_custom_call.1} parent=1 // pred_region
      %26 = vsyncadd [#allocation3], 0
      %s27 = sshll.u32 %s0, 4
      %s28 = int_to_ptr.hbm [resolvable:$true] %s27
      %s29 = sshll.u32 [#allocation2], 4
      %s30 = int_to_ptr.vmem [resolvable:$true] %s29
      %35 = dma.hbm_to_vmem [thread:$0]  %s28, 1024, %s30, [#allocation3], 64, 64, 4
    $region5: #{tpu_custom_call.1} parent=1 // pred_fallthru
      _
    // Predicated region
    $region6: #{tpu_custom_call.1} parent=1 // pred_check
      _
    $region7: #{tpu_custom_call.1} parent=1 // pred_check_branch
      %37 = sbr.rel (0) target = $region9
    $region8: #{tpu_custom_call.1} parent=1 // pred_region
      %39 = vsyncadd [#allocation6], 0
      %s40 = sshll.u32 %s1, 4
      %s41 = int_to_ptr.hbm [resolvable:$true] %s40
      %s42 = sshll.u32 [#allocation5], 4
      %s43 = int_to_ptr.vmem [resolvable:$true] %s42
      %48 = dma.hbm_to_vmem [thread:$0]  %s41, 1024, %s43, [#allocation6], 64, 64, 4
    $region9: #{tpu_custom_call.1} parent=1 // pred_fallthru
      _
    // Predicated region
    $region10: #{tpu_custom_call.1} parent=1 // pred_check
      _
    $region11: #{tpu_custom_call.1} parent=1 // pred_check_branch
      %50 = sbr.rel (0) target = $region13
    $region12: #{tpu_custom_call.1} parent=1 // pred_region
      %52 = vsyncadd [#allocation6], 0
      %s53 = sshll.u32 %s2, 4
      %s54 = int_to_ptr.hbm [resolvable:$true] %s53
      %s55 = sshll.u32 [#allocation7], 4
      %s56 = int_to_ptr.vmem [resolvable:$true] %s55
      %61 = dma.hbm_to_vmem [thread:$0]  %s54, 1024, %s56, [#allocation6], 64, 64, 4
    $region13: #{tpu_custom_call.1} parent=1 // pred_fallthru
      _
    // Predicated region
    $region14: #{tpu_custom_call.1} parent=1 // pred_check
      _
    $region15: #{tpu_custom_call.1} parent=1 // pred_check_branch
      %63 = sbr.rel (0) target = $region17
    $region16: #{tpu_custom_call.1} parent=1 // pred_region
      %65 = vsyncadd [#allocation9], 0
      %s66 = sshll.u32 %s3, 4
      %s67 = int_to_ptr.hbm [resolvable:$true] %s66
      %s68 = sshll.u32 [#allocation8], 4
      %s69 = int_to_ptr.vmem [resolvable:$true] %s68
      %74 = dma.hbm_to_vmem [thread:$0]  %s67, 512, %s69, [#allocation9], 32, 32, 2
    $region17: #{tpu_custom_call.1} parent=1 // pred_fallthru
      _
    // Predicated region
    $region18: #{tpu_custom_call.1} parent=1 // pred_check
      _
    $region19: #{tpu_custom_call.1} parent=1 // pred_check_branch
      %76 = sbr.rel (0) target = $region21
    $region20: #{tpu_custom_call.1} parent=1 // pred_region
      %78 = vsyncadd [#allocation9], 0
      %s79 = sshll.u32 %s4, 4
      %s80 = int_to_ptr.hbm [resolvable:$true] %s79
      %s81 = sshll.u32 [#allocation10], 4
      %s82 = int_to_ptr.vmem [resolvable:$true] %s81
      %87 = dma.hbm_to_vmem [thread:$0]  %s80, 2048, %s82, [#allocation9], 128, 128, 8
    $region21: #{tpu_custom_call.1} parent=1 // pred_fallthru
      _
    // Predicated region
    $region22: #{tpu_custom_call.1} parent=1 // pred_check
      _
    $region23: #{tpu_custom_call.1} parent=1 // pred_check_branch
      %89 = sbr.rel (0) target = $region25
    $region24: #{tpu_custom_call.1} parent=1 // pred_region
      _
    $region25: #{tpu_custom_call.1} parent=1 // pred_fallthru
      _
    // Predicated region
    $region26: #{tpu_custom_call.1} parent=1 // pred_check
      _
    $region27: #{tpu_custom_call.1} parent=1 // pred_check_branch
      %91 = sbr.rel (0) target = $region29
    $region28: #{tpu_custom_call.1} parent=1 // pred_region
      %93 = vsyncadd [#allocation12], 0
      %s94 = sshll.u32 %s6, 4
      %s95 = int_to_ptr.hbm [resolvable:$true] %s94
      %s96 = sshll.u32 [#allocation11], 4
      %s97 = int_to_ptr.vmem [resolvable:$true] %s96
      %102 = dma.hbm_to_vmem [thread:$0]  %s95, 2048, %s97, [#allocation12], 128, 128, 8
    $region29: #{tpu_custom_call.1} parent=1 // pred_fallthru
      _
    // Predicated region
    $region30: #{tpu_custom_call.1} parent=1 // pred_check
      _
    $region31: #{tpu_custom_call.1} parent=1 // pred_check_branch
      %104 = sbr.rel (0) target = $region33
    $region32: #{tpu_custom_call.1} parent=1 // pred_region
      _
    $region33: #{tpu_custom_call.1} parent=1 // pred_fallthru
      _
    // Predicated region
    $region34: #{tpu_custom_call.1} parent=1 // pred_check
      _
    $region35: #{tpu_custom_call.1} parent=1 // pred_check_branch
      %106 = sbr.rel (0) target = $region37
    $region36: #{tpu_custom_call.1} parent=1 // pred_region
      %108 = vsyncadd [#allocation12], 0
      %s109 = sshll.u32 %s8, 4
      %s110 = int_to_ptr.hbm [resolvable:$true] %s109
      %s111 = sshll.u32 [#allocation13], 4
      %s112 = int_to_ptr.vmem [resolvable:$true] %s111
      %117 = dma.hbm_to_vmem [thread:$0]  %s110, 2048, %s112, [#allocation12], 128, 128, 8
    $region37: #{tpu_custom_call.1} parent=1 // pred_fallthru
      _
    // Predicated region
    $region38: #{tpu_custom_call.1} parent=1 // pred_check
      _
    $region39: #{tpu_custom_call.1} parent=1 // pred_check_branch
      %119 = sbr.rel (0) target = $region41
    $region40: #{tpu_custom_call.1} parent=1 // pred_region
      _
    $region41: #{tpu_custom_call.1} parent=1 // pred_fallthru
      _
    // Predicated region
    $region42: #{tpu_custom_call.1} parent=1 // pred_check
      _
    $region43: #{tpu_custom_call.1} parent=1 // pred_check_branch
      %121 = sbr.rel (0) target = $region45
    $region44: #{tpu_custom_call.1} parent=1 // pred_region
      %123 = vsyncadd [#allocation15], 0
      %s124 = sshll.u32 %s10, 4
      %s125 = int_to_ptr.hbm [resolvable:$true] %s124
      %s126 = sshll.u32 [#allocation14], 4
      %s127 = int_to_ptr.vmem [resolvable:$true] %s126
      %132 = dma.hbm_to_vmem [thread:$0]  %s125, 1024, %s127, [#allocation15], 64, 64, 4
    $region45: #{tpu_custom_call.1} parent=1 // pred_fallthru
      _
    // Predicated region
    $region46: #{tpu_custom_call.1} parent=1 // pred_check
      _
    $region47: #{tpu_custom_call.1} parent=1 // pred_check_branch
      %134 = sbr.rel (0) target = $region49
    $region48: #{tpu_custom_call.1} parent=1 // pred_region
      _
    $region49: #{tpu_custom_call.1} parent=1 // pred_fallthru
      _
    // Predicated region
    $region50: #{tpu_custom_call.1} parent=1 // pred_check
      _
    $region51: #{tpu_custom_call.1} parent=1 // pred_check_branch
      %136 = sbr.rel (0) target = $region53
    $region52: #{tpu_custom_call.1} parent=1 // pred_region
      %138 = dma.done [#allocation3], 1024
    $region53: #{tpu_custom_call.1} parent=1 // pred_fallthru
      _
    // Predicated region
    $region54: #{tpu_custom_call.1} parent=1 // pred_check
      _
    $region55: #{tpu_custom_call.1} parent=1 // pred_check_branch
      %140 = sbr.rel (0) target = $region57
    $region56: #{tpu_custom_call.1} parent=1 // pred_region
      %142 = dma.done [#allocation6], 1024
    $region57: #{tpu_custom_call.1} parent=1 // pred_fallthru
      _
    // Predicated region
    $region58: #{tpu_custom_call.1} parent=1 // pred_check
      _
    $region59: #{tpu_custom_call.1} parent=1 // pred_check_branch
      %144 = sbr.rel (0) target = $region61
    $region60: #{tpu_custom_call.1} parent=1 // pred_region
      %146 = dma.done [#allocation6], 1024
    $region61: #{tpu_custom_call.1} parent=1 // pred_fallthru
      _
    // Predicated region
    $region62: #{tpu_custom_call.1} parent=1 // pred_check
      _
    $region63: #{tpu_custom_call.1} parent=1 // pred_check_branch
      %148 = sbr.rel (0) target = $region65
    $region64: #{tpu_custom_call.1} parent=1 // pred_region
      %150 = dma.done [#allocation9], 512
    $region65: #{tpu_custom_call.1} parent=1 // pred_fallthru
      _
    // Predicated region
    $region66: #{tpu_custom_call.1} parent=1 // pred_check
      _
    $region67: #{tpu_custom_call.1} parent=1 // pred_check_branch
      %152 = sbr.rel (0) target = $region69
    $region68: #{tpu_custom_call.1} parent=1 // pred_region
      %154 = dma.done [#allocation9], 2048
    $region69: #{tpu_custom_call.1} parent=1 // pred_fallthru
      _
    // Predicated region
    $region70: #{tpu_custom_call.1} parent=1 // pred_check
      _
    $region71: #{tpu_custom_call.1} parent=1 // pred_check_branch
      %156 = sbr.rel (0) target = $region73
    $region72: #{tpu_custom_call.1} parent=1 // pred_region
      %158 = dma.done [#allocation12], 2048
    $region73: #{tpu_custom_call.1} parent=1 // pred_fallthru
      _
    // Predicated region
    $region74: #{tpu_custom_call.1} parent=1 // pred_check
      _
    $region75: #{tpu_custom_call.1} parent=1 // pred_check_branch
      %160 = sbr.rel (0) target = $region77
    $region76: #{tpu_custom_call.1} parent=1 // pred_region
      %162 = dma.done [#allocation12], 2048
    $region77: #{tpu_custom_call.1} parent=1 // pred_fallthru
      _
    // Predicated region
    $region78: #{tpu_custom_call.1} parent=1 // pred_check
      _
    $region79: #{tpu_custom_call.1} parent=1 // pred_check_branch
      %164 = sbr.rel (0) target = $region81
    $region80: #{tpu_custom_call.1} parent=1 // pred_region
      %166 = dma.done [#allocation15], 1024
    $region81: #{tpu_custom_call.1} parent=1 // pred_fallthru
      _
    %v170 = vld [vmem:[#allocation2] sm:$0xf]
    %v171 = vld [vmem:[#allocation2 + $0x4] sm:$0xf]
    %v172 = vld [vmem:[#allocation2 + $0x8] sm:$0xf]
    %v173 = vld [vmem:[#allocation2 + $0xc] sm:$0xf]
    %v174 = vld [vmem:[#allocation2 + $0x10] sm:$0xf]
    %v175 = vld [vmem:[#allocation2 + $0x14] sm:$0xf]
    %v176 = vld [vmem:[#allocation2 + $0x18] sm:$0xf]
    %v177 = vld [vmem:[#allocation2 + $0x1c] sm:$0xf]
    %v178 = vld [vmem:[#allocation2 + $0x20] sm:$0xf]
    %v179 = vld [vmem:[#allocation2 + $0x24] sm:$0xf]
    %v180 = vld [vmem:[#allocation2 + $0x28] sm:$0xf]
    %v181 = vld [vmem:[#allocation2 + $0x2c] sm:$0xf]
    %v182 = vld [vmem:[#allocation2 + $0x30] sm:$0xf]
    %v183 = vld [vmem:[#allocation2 + $0x34] sm:$0xf]
    %v184 = vld [vmem:[#allocation2 + $0x38] sm:$0xf]
    %v185 = vld [vmem:[#allocation2 + $0x3c] sm:$0xf]
    %v186 = vld [vmem:[#allocation5] sm:$0xf]
    %v187 = vld [vmem:[#allocation5 + $0x4] sm:$0xf]
    %v188 = vld [vmem:[#allocation5 + $0x8] sm:$0xf]
    %v189 = vld [vmem:[#allocation5 + $0xc] sm:$0xf]
    %v190 = vld [vmem:[#allocation5 + $0x10] sm:$0xf]
    %v191 = vld [vmem:[#allocation5 + $0x14] sm:$0xf]
    %v192 = vld [vmem:[#allocation5 + $0x18] sm:$0xf]
    %v193 = vld [vmem:[#allocation5 + $0x1c] sm:$0xf]
    %v194 = vld [vmem:[#allocation5 + $0x20] sm:$0xf]
    %v195 = vld [vmem:[#allocation5 + $0x24] sm:$0xf]
    %v196 = vld [vmem:[#allocation5 + $0x28] sm:$0xf]
    %v197 = vld [vmem:[#allocation5 + $0x2c] sm:$0xf]
    %v198 = vld [vmem:[#allocation5 + $0x30] sm:$0xf]
    %v199 = vld [vmem:[#allocation5 + $0x34] sm:$0xf]
    %v200 = vld [vmem:[#allocation5 + $0x38] sm:$0xf]
    %v201 = vld [vmem:[#allocation5 + $0x3c] sm:$0xf]
    %v202 = vld [vmem:[#allocation7] sm:$0xf]
    %v203 = vld [vmem:[#allocation7 + $0x4] sm:$0xf]
    %v204 = vld [vmem:[#allocation7 + $0x8] sm:$0xf]
    %v205 = vld [vmem:[#allocation7 + $0xc] sm:$0xf]
    %v206 = vld [vmem:[#allocation7 + $0x10] sm:$0xf]
    %v207 = vld [vmem:[#allocation7 + $0x14] sm:$0xf]
    %v208 = vld [vmem:[#allocation7 + $0x18] sm:$0xf]
    %v209 = vld [vmem:[#allocation7 + $0x1c] sm:$0xf]
    %v210 = vld [vmem:[#allocation7 + $0x20] sm:$0xf]
    %v211 = vld [vmem:[#allocation7 + $0x24] sm:$0xf]
    %v212 = vld [vmem:[#allocation7 + $0x28] sm:$0xf]
    %v213 = vld [vmem:[#allocation7 + $0x2c] sm:$0xf]
    %v214 = vld [vmem:[#allocation7 + $0x30] sm:$0xf]
    %v215 = vld [vmem:[#allocation7 + $0x34] sm:$0xf]
    %v216 = vld [vmem:[#allocation7 + $0x38] sm:$0xf]
    %v217 = vld [vmem:[#allocation7 + $0x3c] sm:$0xf]
    %v218 = vld [vmem:[#allocation10] sm:$0xff]
    %v219 = vld [vmem:[#allocation10 + $0x8] sm:$0xff]
    %v220 = vld [vmem:[#allocation10 + $0x10] sm:$0xff]
    %v221 = vld [vmem:[#allocation10 + $0x18] sm:$0xff]
    %v222 = vld [vmem:[#allocation10 + $0x20] sm:$0xff]
    %v223 = vld [vmem:[#allocation10 + $0x28] sm:$0xff]
    %v224 = vld [vmem:[#allocation10 + $0x30] sm:$0xff]
    %v225 = vld [vmem:[#allocation10 + $0x38] sm:$0xff]
    %v226 = vld [vmem:[#allocation10 + $0x40] sm:$0xff]
    %v227 = vld [vmem:[#allocation10 + $0x48] sm:$0xff]
    %v228 = vld [vmem:[#allocation10 + $0x50] sm:$0xff]
    %v229 = vld [vmem:[#allocation10 + $0x58] sm:$0xff]
    %v230 = vld [vmem:[#allocation10 + $0x60] sm:$0xff]
    %v231 = vld [vmem:[#allocation10 + $0x68] sm:$0xff]
    %v232 = vld [vmem:[#allocation10 + $0x70] sm:$0xff]
    %v233 = vld [vmem:[#allocation10 + $0x78] sm:$0xff]
    %v234 = vld [vmem:[%s5] sm:$0x3]
    %v236 = vperm.slane %v234, 0
    %v237 = vperm.slane %v234, 1
    %v256 = vunpack.c.l.b16 %v170
    %v257 = vunpack.c.l.b16 %v171
    %v258 = vunpack.c.l.b16 %v172
    %v259 = vunpack.c.l.b16 %v173
    %v260 = vunpack.c.l.b16 %v174
    %v261 = vunpack.c.l.b16 %v175
    %v262 = vunpack.c.l.b16 %v176
    %v263 = vunpack.c.l.b16 %v177
    %v264 = vunpack.c.l.b16 %v178
    %v265 = vunpack.c.l.b16 %v179
    %v266 = vunpack.c.l.b16 %v180
    %v267 = vunpack.c.l.b16 %v181
    %v268 = vunpack.c.l.b16 %v182
    %v269 = vunpack.c.l.b16 %v183
    %v270 = vunpack.c.l.b16 %v184
    %v271 = vunpack.c.l.b16 %v185
    %v272 = vpack.c.b16 %v257, %v256
    %v273 = vpack.c.b16 %v259, %v258
    %v274 = vpack.c.b16 %v261, %v260
    %v275 = vpack.c.b16 %v263, %v262
    %v276 = vpack.c.b16 %v265, %v264
    %v277 = vpack.c.b16 %v267, %v266
    %v278 = vpack.c.b16 %v269, %v268
    %v279 = vpack.c.b16 %v271, %v270
    %v304 = vunpack.c.l.b16 %v218
    %v305 = vunpack.c.h.b16 %v218
    %v306 = vunpack.c.l.b16 %v219
    %v307 = vunpack.c.h.b16 %v219
    %v308 = vunpack.c.l.b16 %v220
    %v309 = vunpack.c.h.b16 %v220
    %v310 = vunpack.c.l.b16 %v221
    %v311 = vunpack.c.h.b16 %v221
    %v312 = vunpack.c.l.b16 %v222
    %v313 = vunpack.c.h.b16 %v222
    %v314 = vunpack.c.l.b16 %v223
    %v315 = vunpack.c.h.b16 %v223
    %v316 = vunpack.c.l.b16 %v224
    %v317 = vunpack.c.h.b16 %v224
    %v318 = vunpack.c.l.b16 %v225
    %v319 = vunpack.c.h.b16 %v225
    %v320 = vunpack.c.l.b16 %v226
    %v321 = vunpack.c.h.b16 %v226
    %v322 = vunpack.c.l.b16 %v227
    %v323 = vunpack.c.h.b16 %v227
    %v324 = vunpack.c.l.b16 %v228
    %v325 = vunpack.c.h.b16 %v228
    %v326 = vunpack.c.l.b16 %v229
    %v327 = vunpack.c.h.b16 %v229
    %v328 = vunpack.c.l.b16 %v230
    %v329 = vunpack.c.h.b16 %v230
    %v330 = vunpack.c.l.b16 %v231
    %v331 = vunpack.c.h.b16 %v231
    %v332 = vunpack.c.l.b16 %v232
    %v333 = vunpack.c.h.b16 %v232
    %v334 = vunpack.c.l.b16 %v233
    %v335 = vunpack.c.h.b16 %v233
    %v336 = vpack.c.b16 %v306, %v304
    %v337 = vpack.c.b16 %v307, %v305
    %v338 = vpack.c.b16 %v310, %v308
    %v339 = vpack.c.b16 %v311, %v309
    %v340 = vpack.c.b16 %v314, %v312
    %v341 = vpack.c.b16 %v315, %v313
    %v342 = vpack.c.b16 %v318, %v316
    %v343 = vpack.c.b16 %v319, %v317
    %v344 = vpack.c.b16 %v322, %v320
    %v345 = vpack.c.b16 %v323, %v321
    %v346 = vpack.c.b16 %v326, %v324
    %v347 = vpack.c.b16 %v327, %v325
    %v348 = vpack.c.b16 %v330, %v328
    %v349 = vpack.c.b16 %v331, %v329
    %v350 = vpack.c.b16 %v334, %v332
    %v351 = vpack.c.b16 %v335, %v333
    %368 = vmatpush.bf16.msra.mxu0 %v350
    %369 = vmatpush.bf16.msra.mxu0 %v348
    %370 = vmatpush.bf16.msra.mxu0 %v346
    %371 = vmatpush.bf16.msra.mxu0 %v344
    %372 = vmatpush.bf16.msra.mxu0 %v342
    %373 = vmatpush.bf16.msra.mxu0 %v340
    %374 = vmatpush.bf16.msra.mxu0 %v338
    %375 = vmatpush.bf16.msra.mxu0 %v336
    %376 = vmatmul.bf16.gmra.mxu0 %v272
    %v377 = vpop.f32.mrf.mxu0
    %v378 = vadd.f32 %v236, %v377
    %v379 = vpop.f32.mrf.mxu0
    %v380 = vadd.f32 %v236, %v379
    %381 = vmatmul.bf16.gmra.mxu0 %v273
    %v382 = vpop.f32.mrf.mxu0
    %v383 = vadd.f32 %v236, %v382
    %v384 = vpop.f32.mrf.mxu0
    %v385 = vadd.f32 %v236, %v384
    %386 = vmatmul.bf16.gmra.mxu0 %v274
    %v387 = vpop.f32.mrf.mxu0
    %v388 = vadd.f32 %v236, %v387
    %v389 = vpop.f32.mrf.mxu0
    %v390 = vadd.f32 %v236, %v389
    %391 = vmatmul.bf16.gmra.mxu0 %v275
    %v392 = vpop.f32.mrf.mxu0
    %v393 = vadd.f32 %v236, %v392
    %v394 = vpop.f32.mrf.mxu0
    %v395 = vadd.f32 %v236, %v394
    %396 = vmatmul.bf16.gmra.mxu0 %v276
    %v397 = vpop.f32.mrf.mxu0
    %v398 = vadd.f32 %v236, %v397
    %v399 = vpop.f32.mrf.mxu0
    %v400 = vadd.f32 %v236, %v399
    %401 = vmatmul.bf16.gmra.mxu0 %v277
    %v402 = vpop.f32.mrf.mxu0
    %v403 = vadd.f32 %v236, %v402
    %v404 = vpop.f32.mrf.mxu0
    %v405 = vadd.f32 %v236, %v404
    %406 = vmatmul.bf16.gmra.mxu0 %v278
    %v407 = vpop.f32.mrf.mxu0
    %v408 = vadd.f32 %v236, %v407
    %v409 = vpop.f32.mrf.mxu0
    %v410 = vadd.f32 %v236, %v409
    %411 = vmatmul.bf16.gmra.mxu0 %v279
    %v412 = vpop.f32.mrf.mxu0
    %v413 = vadd.f32 %v236, %v412
    %v414 = vpop.f32.mrf.mxu0
    %v415 = vadd.f32 %v236, %v414
    %416 = vdwg.mxu0
    %417 = vmatpush.bf16.msra.mxu0 %v351
    %418 = vmatpush.bf16.msra.mxu0 %v349
    %419 = vmatpush.bf16.msra.mxu0 %v347
    %420 = vmatpush.bf16.msra.mxu0 %v345
    %421 = vmatpush.bf16.msra.mxu0 %v343
    %422 = vmatpush.bf16.msra.mxu0 %v341
    %423 = vmatpush.bf16.msra.mxu0 %v339
    %424 = vmatpush.bf16.msra.mxu0 %v337
    %425 = vmatmul.bf16.gmra.mxu0 %v272
    %v426 = vpop.f32.mrf.mxu0
    %v427 = vadd.f32 %v237, %v426
    %v428 = vpop.f32.mrf.mxu0
    %v429 = vadd.f32 %v237, %v428
    %430 = vmatmul.bf16.gmra.mxu0 %v273
    %v431 = vpop.f32.mrf.mxu0
    %v432 = vadd.f32 %v237, %v431
    %v433 = vpop.f32.mrf.mxu0
    %v434 = vadd.f32 %v237, %v433
    %435 = vmatmul.bf16.gmra.mxu0 %v274
    %v436 = vpop.f32.mrf.mxu0
    %v437 = vadd.f32 %v237, %v436
    %v438 = vpop.f32.mrf.mxu0
    %v439 = vadd.f32 %v237, %v438
    %440 = vmatmul.bf16.gmra.mxu0 %v275
    %v441 = vpop.f32.mrf.mxu0
    %v442 = vadd.f32 %v237, %v441
    %v443 = vpop.f32.mrf.mxu0
    %v444 = vadd.f32 %v237, %v443
    %445 = vmatmul.bf16.gmra.mxu0 %v276
    %v446 = vpop.f32.mrf.mxu0
    %v447 = vadd.f32 %v237, %v446
    %v448 = vpop.f32.mrf.mxu0
    %v449 = vadd.f32 %v237, %v448
    %450 = vmatmul.bf16.gmra.mxu0 %v277
    %v451 = vpop.f32.mrf.mxu0
    %v452 = vadd.f32 %v237, %v451
    %v453 = vpop.f32.mrf.mxu0
    %v454 = vadd.f32 %v237, %v453
    %455 = vmatmul.bf16.gmra.mxu0 %v278
    %v456 = vpop.f32.mrf.mxu0
    %v457 = vadd.f32 %v237, %v456
    %v458 = vpop.f32.mrf.mxu0
    %v459 = vadd.f32 %v237, %v458
    %460 = vmatmul.bf16.gmra.mxu0 %v279
    %v461 = vpop.f32.mrf.mxu0
    %v462 = vadd.f32 %v237, %v461
    %v463 = vpop.f32.mrf.mxu0
    %v464 = vadd.f32 %v237, %v463
    %465 = vdwg.mxu0
    %v466 = vpack.c.bf16 %v427, %v378
    %v467 = vpack.c.bf16 %v429, %v380
    %v468 = vpack.c.bf16 %v432, %v383
    %v469 = vpack.c.bf16 %v434, %v385
    %v470 = vpack.c.bf16 %v437, %v388
    %v471 = vpack.c.bf16 %v439, %v390
    %v472 = vpack.c.bf16 %v442, %v393
    %v473 = vpack.c.bf16 %v444, %v395
    %v474 = vpack.c.bf16 %v447, %v398
    %v475 = vpack.c.bf16 %v449, %v400
    %v476 = vpack.c.bf16 %v452, %v403
    %v477 = vpack.c.bf16 %v454, %v405
    %v478 = vpack.c.bf16 %v457, %v408
    %v479 = vpack.c.bf16 %v459, %v410
    %v480 = vpack.c.bf16 %v462, %v413
    %v481 = vpack.c.bf16 %v464, %v415
    %v482 = vld [vmem:[#allocation11] sm:$0xff]
    %v483 = vld [vmem:[#allocation11 + $0x8] sm:$0xff]
    %v484 = vld [vmem:[#allocation11 + $0x10] sm:$0xff]
    %v485 = vld [vmem:[#allocation11 + $0x18] sm:$0xff]
    %v486 = vld [vmem:[#allocation11 + $0x20] sm:$0xff]
    %v487 = vld [vmem:[#allocation11 + $0x28] sm:$0xff]
    %v488 = vld [vmem:[#allocation11 + $0x30] sm:$0xff]
    %v489 = vld [vmem:[#allocation11 + $0x38] sm:$0xff]
    %v490 = vld [vmem:[#allocation11 + $0x40] sm:$0xff]
    %v491 = vld [vmem:[#allocation11 + $0x48] sm:$0xff]
    %v492 = vld [vmem:[#allocation11 + $0x50] sm:$0xff]
    %v493 = vld [vmem:[#allocation11 + $0x58] sm:$0xff]
    %v494 = vld [vmem:[#allocation11 + $0x60] sm:$0xff]
    %v495 = vld [vmem:[#allocation11 + $0x68] sm:$0xff]
    %v496 = vld [vmem:[#allocation11 + $0x70] sm:$0xff]
    %v497 = vld [vmem:[#allocation11 + $0x78] sm:$0xff]
    %v498 = vld [vmem:[%s7] sm:$0x3]
    %v500 = vperm.slane %v498, 0
    %v501 = vperm.slane %v498, 1
    %v520 = vunpack.c.l.b16 %v186
    %v521 = vunpack.c.l.b16 %v187
    %v522 = vunpack.c.l.b16 %v188
    %v523 = vunpack.c.l.b16 %v189
    %v524 = vunpack.c.l.b16 %v190
    %v525 = vunpack.c.l.b16 %v191
    %v526 = vunpack.c.l.b16 %v192
    %v527 = vunpack.c.l.b16 %v193
    %v528 = vunpack.c.l.b16 %v194
    %v529 = vunpack.c.l.b16 %v195
    %v530 = vunpack.c.l.b16 %v196
    %v531 = vunpack.c.l.b16 %v197
    %v532 = vunpack.c.l.b16 %v198
    %v533 = vunpack.c.l.b16 %v199
    %v534 = vunpack.c.l.b16 %v200
    %v535 = vunpack.c.l.b16 %v201
    %v536 = vpack.c.b16 %v521, %v520
    %v537 = vpack.c.b16 %v523, %v522
    %v538 = vpack.c.b16 %v525, %v524
    %v539 = vpack.c.b16 %v527, %v526
    %v540 = vpack.c.b16 %v529, %v528
    %v541 = vpack.c.b16 %v531, %v530
    %v542 = vpack.c.b16 %v533, %v532
    %v543 = vpack.c.b16 %v535, %v534
    %v568 = vunpack.c.l.b16 %v482
    %v569 = vunpack.c.h.b16 %v482
    %v570 = vunpack.c.l.b16 %v483
    %v571 = vunpack.c.h.b16 %v483
    %v572 = vunpack.c.l.b16 %v484
    %v573 = vunpack.c.h.b16 %v484
    %v574 = vunpack.c.l.b16 %v485
    %v575 = vunpack.c.h.b16 %v485
    %v576 = vunpack.c.l.b16 %v486
    %v577 = vunpack.c.h.b16 %v486
    %v578 = vunpack.c.l.b16 %v487
    %v579 = vunpack.c.h.b16 %v487
    %v580 = vunpack.c.l.b16 %v488
    %v581 = vunpack.c.h.b16 %v488
    %v582 = vunpack.c.l.b16 %v489
    %v583 = vunpack.c.h.b16 %v489
    %v584 = vunpack.c.l.b16 %v490
    %v585 = vunpack.c.h.b16 %v490
    %v586 = vunpack.c.l.b16 %v491
    %v587 = vunpack.c.h.b16 %v491
    %v588 = vunpack.c.l.b16 %v492
    %v589 = vunpack.c.h.b16 %v492
    %v590 = vunpack.c.l.b16 %v493
    %v591 = vunpack.c.h.b16 %v493
    %v592 = vunpack.c.l.b16 %v494
    %v593 = vunpack.c.h.b16 %v494
    %v594 = vunpack.c.l.b16 %v495
    %v595 = vunpack.c.h.b16 %v495
    %v596 = vunpack.c.l.b16 %v496
    %v597 = vunpack.c.h.b16 %v496
    %v598 = vunpack.c.l.b16 %v497
    %v599 = vunpack.c.h.b16 %v497
    %v600 = vpack.c.b16 %v570, %v568
    %v601 = vpack.c.b16 %v571, %v569
    %v602 = vpack.c.b16 %v574, %v572
    %v603 = vpack.c.b16 %v575, %v573
    %v604 = vpack.c.b16 %v578, %v576
    %v605 = vpack.c.b16 %v579, %v577
    %v606 = vpack.c.b16 %v582, %v580
    %v607 = vpack.c.b16 %v583, %v581
    %v608 = vpack.c.b16 %v586, %v584
    %v609 = vpack.c.b16 %v587, %v585
    %v610 = vpack.c.b16 %v590, %v588
    %v611 = vpack.c.b16 %v591, %v589
    %v612 = vpack.c.b16 %v594, %v592
    %v613 = vpack.c.b16 %v595, %v593
    %v614 = vpack.c.b16 %v598, %v596
    %v615 = vpack.c.b16 %v599, %v597
    %632 = vmatpush.bf16.msra.mxu0 %v614
    %633 = vmatpush.bf16.msra.mxu0 %v612
    %634 = vmatpush.bf16.msra.mxu0 %v610
    %635 = vmatpush.bf16.msra.mxu0 %v608
    %636 = vmatpush.bf16.msra.mxu0 %v606
    %637 = vmatpush.bf16.msra.mxu0 %v604
    %638 = vmatpush.bf16.msra.mxu0 %v602
    %639 = vmatpush.bf16.msra.mxu0 %v600
    %640 = vmatmul.bf16.gmra.mxu0 %v536
    %v641 = vpop.f32.mrf.mxu0
    %v642 = vadd.f32 %v500, %v641
    %v643 = vpop.f32.mrf.mxu0
    %v644 = vadd.f32 %v500, %v643
    %645 = vmatmul.bf16.gmra.mxu0 %v537
    %v646 = vpop.f32.mrf.mxu0
    %v647 = vadd.f32 %v500, %v646
    %v648 = vpop.f32.mrf.mxu0
    %v649 = vadd.f32 %v500, %v648
    %650 = vmatmul.bf16.gmra.mxu0 %v538
    %v651 = vpop.f32.mrf.mxu0
    %v652 = vadd.f32 %v500, %v651
    %v653 = vpop.f32.mrf.mxu0
    %v654 = vadd.f32 %v500, %v653
    %655 = vmatmul.bf16.gmra.mxu0 %v539
    %v656 = vpop.f32.mrf.mxu0
    %v657 = vadd.f32 %v500, %v656
    %v658 = vpop.f32.mrf.mxu0
    %v659 = vadd.f32 %v500, %v658
    %660 = vmatmul.bf16.gmra.mxu0 %v540
    %v661 = vpop.f32.mrf.mxu0
    %v662 = vadd.f32 %v500, %v661
    %v663 = vpop.f32.mrf.mxu0
    %v664 = vadd.f32 %v500, %v663
    %665 = vmatmul.bf16.gmra.mxu0 %v541
    %v666 = vpop.f32.mrf.mxu0
    %v667 = vadd.f32 %v500, %v666
    %v668 = vpop.f32.mrf.mxu0
    %v669 = vadd.f32 %v500, %v668
    %670 = vmatmul.bf16.gmra.mxu0 %v542
    %v671 = vpop.f32.mrf.mxu0
    %v672 = vadd.f32 %v500, %v671
    %v673 = vpop.f32.mrf.mxu0
    %v674 = vadd.f32 %v500, %v673
    %675 = vmatmul.bf16.gmra.mxu0 %v543
    %v676 = vpop.f32.mrf.mxu0
    %v677 = vadd.f32 %v500, %v676
    %v678 = vpop.f32.mrf.mxu0
    %v679 = vadd.f32 %v500, %v678
    %680 = vdwg.mxu0
    %681 = vmatpush.bf16.msra.mxu0 %v615
    %682 = vmatpush.bf16.msra.mxu0 %v613
    %683 = vmatpush.bf16.msra.mxu0 %v611
    %684 = vmatpush.bf16.msra.mxu0 %v609
    %685 = vmatpush.bf16.msra.mxu0 %v607
    %686 = vmatpush.bf16.msra.mxu0 %v605
    %687 = vmatpush.bf16.msra.mxu0 %v603
    %688 = vmatpush.bf16.msra.mxu0 %v601
    %689 = vmatmul.bf16.gmra.mxu0 %v536
    %v690 = vpop.f32.mrf.mxu0
    %v691 = vadd.f32 %v501, %v690
    %v692 = vpop.f32.mrf.mxu0
    %v693 = vadd.f32 %v501, %v692
    %694 = vmatmul.bf16.gmra.mxu0 %v537
    %v695 = vpop.f32.mrf.mxu0
    %v696 = vadd.f32 %v501, %v695
    %v697 = vpop.f32.mrf.mxu0
    %v698 = vadd.f32 %v501, %v697
    %699 = vmatmul.bf16.gmra.mxu0 %v538
    %v700 = vpop.f32.mrf.mxu0
    %v701 = vadd.f32 %v501, %v700
    %v702 = vpop.f32.mrf.mxu0
    %v703 = vadd.f32 %v501, %v702
    %704 = vmatmul.bf16.gmra.mxu0 %v539
    %v705 = vpop.f32.mrf.mxu0
    %v706 = vadd.f32 %v501, %v705
    %v707 = vpop.f32.mrf.mxu0
    %v708 = vadd.f32 %v501, %v707
    %709 = vmatmul.bf16.gmra.mxu0 %v540
    %v710 = vpop.f32.mrf.mxu0
    %v711 = vadd.f32 %v501, %v710
    %v712 = vpop.f32.mrf.mxu0
    %v713 = vadd.f32 %v501, %v712
    %714 = vmatmul.bf16.gmra.mxu0 %v541
    %v715 = vpop.f32.mrf.mxu0
    %v716 = vadd.f32 %v501, %v715
    %v717 = vpop.f32.mrf.mxu0
    %v718 = vadd.f32 %v501, %v717
    %719 = vmatmul.bf16.gmra.mxu0 %v542
    %v720 = vpop.f32.mrf.mxu0
    %v721 = vadd.f32 %v501, %v720
    %v722 = vpop.f32.mrf.mxu0
    %v723 = vadd.f32 %v501, %v722
    %724 = vmatmul.bf16.gmra.mxu0 %v543
    %v725 = vpop.f32.mrf.mxu0
    %v726 = vadd.f32 %v501, %v725
    %v727 = vpop.f32.mrf.mxu0
    %v728 = vadd.f32 %v501, %v727
    %729 = vdwg.mxu0
    %v730 = vpack.c.bf16 %v691, %v642
    %v731 = vpack.c.bf16 %v693, %v644
    %v732 = vpack.c.bf16 %v696, %v647
    %v733 = vpack.c.bf16 %v698, %v649
    %v734 = vpack.c.bf16 %v701, %v652
    %v735 = vpack.c.bf16 %v703, %v654
    %v736 = vpack.c.bf16 %v706, %v657
    %v737 = vpack.c.bf16 %v708, %v659
    %v738 = vpack.c.bf16 %v711, %v662
    %v739 = vpack.c.bf16 %v713, %v664
    %v740 = vpack.c.bf16 %v716, %v667
    %v741 = vpack.c.bf16 %v718, %v669
    %v742 = vpack.c.bf16 %v721, %v672
    %v743 = vpack.c.bf16 %v723, %v674
    %v744 = vpack.c.bf16 %v726, %v677
    %v745 = vpack.c.bf16 %v728, %v679
    %v746 = vld [vmem:[#allocation13] sm:$0xff]
    %v747 = vld [vmem:[#allocation13 + $0x8] sm:$0xff]
    %v748 = vld [vmem:[#allocation13 + $0x10] sm:$0xff]
    %v749 = vld [vmem:[#allocation13 + $0x18] sm:$0xff]
    %v750 = vld [vmem:[#allocation13 + $0x20] sm:$0xff]
    %v751 = vld [vmem:[#allocation13 + $0x28] sm:$0xff]
    %v752 = vld [vmem:[#allocation13 + $0x30] sm:$0xff]
    %v753 = vld [vmem:[#allocation13 + $0x38] sm:$0xff]
    %v754 = vld [vmem:[#allocation13 + $0x40] sm:$0xff]
    %v755 = vld [vmem:[#allocation13 + $0x48] sm:$0xff]
    %v756 = vld [vmem:[#allocation13 + $0x50] sm:$0xff]
    %v757 = vld [vmem:[#allocation13 + $0x58] sm:$0xff]
    %v758 = vld [vmem:[#allocation13 + $0x60] sm:$0xff]
    %v759 = vld [vmem:[#allocation13 + $0x68] sm:$0xff]
    %v760 = vld [vmem:[#allocation13 + $0x70] sm:$0xff]
    %v761 = vld [vmem:[#allocation13 + $0x78] sm:$0xff]
    %v762 = vld [vmem:[%s9] sm:$0x3]
    %v764 = vperm.slane %v762, 0
    %v765 = vperm.slane %v762, 1
    %v784 = vunpack.c.l.b16 %v202
    %v785 = vunpack.c.l.b16 %v203
    %v786 = vunpack.c.l.b16 %v204
    %v787 = vunpack.c.l.b16 %v205
    %v788 = vunpack.c.l.b16 %v206
    %v789 = vunpack.c.l.b16 %v207
    %v790 = vunpack.c.l.b16 %v208
    %v791 = vunpack.c.l.b16 %v209
    %v792 = vunpack.c.l.b16 %v210
    %v793 = vunpack.c.l.b16 %v211
    %v794 = vunpack.c.l.b16 %v212
    %v795 = vunpack.c.l.b16 %v213
    %v796 = vunpack.c.l.b16 %v214
    %v797 = vunpack.c.l.b16 %v215
    %v798 = vunpack.c.l.b16 %v216
    %v799 = vunpack.c.l.b16 %v217
    %v800 = vpack.c.b16 %v785, %v784
    %v801 = vpack.c.b16 %v787, %v786
    %v802 = vpack.c.b16 %v789, %v788
    %v803 = vpack.c.b16 %v791, %v790
    %v804 = vpack.c.b16 %v793, %v792
    %v805 = vpack.c.b16 %v795, %v794
    %v806 = vpack.c.b16 %v797, %v796
    %v807 = vpack.c.b16 %v799, %v798
    %v832 = vunpack.c.l.b16 %v746
    %v833 = vunpack.c.h.b16 %v746
    %v834 = vunpack.c.l.b16 %v747
    %v835 = vunpack.c.h.b16 %v747
    %v836 = vunpack.c.l.b16 %v748
    %v837 = vunpack.c.h.b16 %v748
    %v838 = vunpack.c.l.b16 %v749
    %v839 = vunpack.c.h.b16 %v749
    %v840 = vunpack.c.l.b16 %v750
    %v841 = vunpack.c.h.b16 %v750
    %v842 = vunpack.c.l.b16 %v751
    %v843 = vunpack.c.h.b16 %v751
    %v844 = vunpack.c.l.b16 %v752
    %v845 = vunpack.c.h.b16 %v752
    %v846 = vunpack.c.l.b16 %v753
    %v847 = vunpack.c.h.b16 %v753
    %v848 = vunpack.c.l.b16 %v754
    %v849 = vunpack.c.h.b16 %v754
    %v850 = vunpack.c.l.b16 %v755
    %v851 = vunpack.c.h.b16 %v755
    %v852 = vunpack.c.l.b16 %v756
    %v853 = vunpack.c.h.b16 %v756
    %v854 = vunpack.c.l.b16 %v757
    %v855 = vunpack.c.h.b16 %v757
    %v856 = vunpack.c.l.b16 %v758
    %v857 = vunpack.c.h.b16 %v758
    %v858 = vunpack.c.l.b16 %v759
    %v859 = vunpack.c.h.b16 %v759
    %v860 = vunpack.c.l.b16 %v760
    %v861 = vunpack.c.h.b16 %v760
    %v862 = vunpack.c.l.b16 %v761
    %v863 = vunpack.c.h.b16 %v761
    %v864 = vpack.c.b16 %v834, %v832
    %v865 = vpack.c.b16 %v835, %v833
    %v866 = vpack.c.b16 %v838, %v836
    %v867 = vpack.c.b16 %v839, %v837
    %v868 = vpack.c.b16 %v842, %v840
    %v869 = vpack.c.b16 %v843, %v841
    %v870 = vpack.c.b16 %v846, %v844
    %v871 = vpack.c.b16 %v847, %v845
    %v872 = vpack.c.b16 %v850, %v848
    %v873 = vpack.c.b16 %v851, %v849
    %v874 = vpack.c.b16 %v854, %v852
    %v875 = vpack.c.b16 %v855, %v853
    %v876 = vpack.c.b16 %v858, %v856
    %v877 = vpack.c.b16 %v859, %v857
    %v878 = vpack.c.b16 %v862, %v860
    %v879 = vpack.c.b16 %v863, %v861
    %896 = vmatpush.bf16.msra.mxu0 %v878
    %897 = vmatpush.bf16.msra.mxu0 %v876
    %898 = vmatpush.bf16.msra.mxu0 %v874
    %899 = vmatpush.bf16.msra.mxu0 %v872
    %900 = vmatpush.bf16.msra.mxu0 %v870
    %901 = vmatpush.bf16.msra.mxu0 %v868
    %902 = vmatpush.bf16.msra.mxu0 %v866
    %903 = vmatpush.bf16.msra.mxu0 %v864
    %904 = vmatmul.bf16.gmra.mxu0 %v800
    %v905 = vpop.f32.mrf.mxu0
    %v906 = vadd.f32 %v764, %v905
    %v907 = vpop.f32.mrf.mxu0
    %v908 = vadd.f32 %v764, %v907
    %909 = vmatmul.bf16.gmra.mxu0 %v801
    %v910 = vpop.f32.mrf.mxu0
    %v911 = vadd.f32 %v764, %v910
    %v912 = vpop.f32.mrf.mxu0
    %v913 = vadd.f32 %v764, %v912
    %914 = vmatmul.bf16.gmra.mxu0 %v802
    %v915 = vpop.f32.mrf.mxu0
    %v916 = vadd.f32 %v764, %v915
    %v917 = vpop.f32.mrf.mxu0
    %v918 = vadd.f32 %v764, %v917
    %919 = vmatmul.bf16.gmra.mxu0 %v803
    %v920 = vpop.f32.mrf.mxu0
    %v921 = vadd.f32 %v764, %v920
    %v922 = vpop.f32.mrf.mxu0
    %v923 = vadd.f32 %v764, %v922
    %924 = vmatmul.bf16.gmra.mxu0 %v804
    %v925 = vpop.f32.mrf.mxu0
    %v926 = vadd.f32 %v764, %v925
    %v927 = vpop.f32.mrf.mxu0
    %v928 = vadd.f32 %v764, %v927
    %929 = vmatmul.bf16.gmra.mxu0 %v805
    %v930 = vpop.f32.mrf.mxu0
    %v931 = vadd.f32 %v764, %v930
    %v932 = vpop.f32.mrf.mxu0
    %v933 = vadd.f32 %v764, %v932
    %934 = vmatmul.bf16.gmra.mxu0 %v806
    %v935 = vpop.f32.mrf.mxu0
    %v936 = vadd.f32 %v764, %v935
    %v937 = vpop.f32.mrf.mxu0
    %v938 = vadd.f32 %v764, %v937
    %939 = vmatmul.bf16.gmra.mxu0 %v807
    %v940 = vpop.f32.mrf.mxu0
    %v941 = vadd.f32 %v764, %v940
    %v942 = vpop.f32.mrf.mxu0
    %v943 = vadd.f32 %v764, %v942
    %944 = vdwg.mxu0
    %945 = vmatpush.bf16.msra.mxu0 %v879
    %946 = vmatpush.bf16.msra.mxu0 %v877
    %947 = vmatpush.bf16.msra.mxu0 %v875
    %948 = vmatpush.bf16.msra.mxu0 %v873
    %949 = vmatpush.bf16.msra.mxu0 %v871
    %950 = vmatpush.bf16.msra.mxu0 %v869
    %951 = vmatpush.bf16.msra.mxu0 %v867
    %952 = vmatpush.bf16.msra.mxu0 %v865
    %953 = vmatmul.bf16.gmra.mxu0 %v800
    %v954 = vpop.f32.mrf.mxu0
    %v955 = vadd.f32 %v765, %v954
    %v956 = vpop.f32.mrf.mxu0
    %v957 = vadd.f32 %v765, %v956
    %958 = vmatmul.bf16.gmra.mxu0 %v801
    %v959 = vpop.f32.mrf.mxu0
    %v960 = vadd.f32 %v765, %v959
    %v961 = vpop.f32.mrf.mxu0
    %v962 = vadd.f32 %v765, %v961
    %963 = vmatmul.bf16.gmra.mxu0 %v802
    %v964 = vpop.f32.mrf.mxu0
    %v965 = vadd.f32 %v765, %v964
    %v966 = vpop.f32.mrf.mxu0
    %v967 = vadd.f32 %v765, %v966
    %968 = vmatmul.bf16.gmra.mxu0 %v803
    %v969 = vpop.f32.mrf.mxu0
    %v970 = vadd.f32 %v765, %v969
    %v971 = vpop.f32.mrf.mxu0
    %v972 = vadd.f32 %v765, %v971
    %973 = vmatmul.bf16.gmra.mxu0 %v804
    %v974 = vpop.f32.mrf.mxu0
    %v975 = vadd.f32 %v765, %v974
    %v976 = vpop.f32.mrf.mxu0
    %v977 = vadd.f32 %v765, %v976
    %978 = vmatmul.bf16.gmra.mxu0 %v805
    %v979 = vpop.f32.mrf.mxu0
    %v980 = vadd.f32 %v765, %v979
    %v981 = vpop.f32.mrf.mxu0
    %v982 = vadd.f32 %v765, %v981
    %983 = vmatmul.bf16.gmra.mxu0 %v806
    %v984 = vpop.f32.mrf.mxu0
    %v985 = vadd.f32 %v765, %v984
    %v986 = vpop.f32.mrf.mxu0
    %v987 = vadd.f32 %v765, %v986
    %988 = vmatmul.bf16.gmra.mxu0 %v807
    %v989 = vpop.f32.mrf.mxu0
    %v990 = vadd.f32 %v765, %v989
    %v991 = vpop.f32.mrf.mxu0
    %v992 = vadd.f32 %v765, %v991
    %993 = vdwg.mxu0
    %v994 = vpack.c.bf16 %v955, %v906
    %v995 = vpack.c.bf16 %v957, %v908
    %v996 = vpack.c.bf16 %v960, %v911
    %v997 = vpack.c.bf16 %v962, %v913
    %v998 = vpack.c.bf16 %v965, %v916
    %v999 = vpack.c.bf16 %v967, %v918
    %v1000 = vpack.c.bf16 %v970, %v921
    %v1001 = vpack.c.bf16 %v972, %v923
    %v1002 = vpack.c.bf16 %v975, %v926
    %v1003 = vpack.c.bf16 %v977, %v928
    %v1004 = vpack.c.bf16 %v980, %v931
    %v1005 = vpack.c.bf16 %v982, %v933
    %v1006 = vpack.c.bf16 %v985, %v936
    %v1007 = vpack.c.bf16 %v987, %v938
    %v1008 = vpack.c.bf16 %v990, %v941
    %v1009 = vpack.c.bf16 %v992, %v943
    %v1010 = vld [vmem:[#allocation8] sm:$0x3]
    %v1011 = vld [vmem:[#allocation8 + $0x2] sm:$0x3]
    %v1012 = vld [vmem:[#allocation8 + $0x4] sm:$0x3]
    %v1013 = vld [vmem:[#allocation8 + $0x6] sm:$0x3]
    %v1014 = vld [vmem:[#allocation8 + $0x8] sm:$0x3]
    %v1015 = vld [vmem:[#allocation8 + $0xa] sm:$0x3]
    %v1016 = vld [vmem:[#allocation8 + $0xc] sm:$0x3]
    %v1017 = vld [vmem:[#allocation8 + $0xe] sm:$0x3]
    %v1018 = vld [vmem:[#allocation8 + $0x10] sm:$0x3]
    %v1019 = vld [vmem:[#allocation8 + $0x12] sm:$0x3]
    %v1020 = vld [vmem:[#allocation8 + $0x14] sm:$0x3]
    %v1021 = vld [vmem:[#allocation8 + $0x16] sm:$0x3]
    %v1022 = vld [vmem:[#allocation8 + $0x18] sm:$0x3]
    %v1023 = vld [vmem:[#allocation8 + $0x1a] sm:$0x3]
    %v1024 = vld [vmem:[#allocation8 + $0x1c] sm:$0x3]
    %v1025 = vld [vmem:[#allocation8 + $0x1e] sm:$0x3]
    %vm1026 = vnez %v1010
    %vm1027 = vnez %v1011
    %vm1028 = vnez %v1012
    %vm1029 = vnez %v1013
    %vm1030 = vnez %v1014
    %vm1031 = vnez %v1015
    %vm1032 = vnez %v1016
    %vm1033 = vnez %v1017
    %vm1034 = vnez %v1018
    %vm1035 = vnez %v1019
    %vm1036 = vnez %v1020
    %vm1037 = vnez %v1021
    %vm1038 = vnez %v1022
    %vm1039 = vnez %v1023
    %vm1040 = vnez %v1024
    %vm1041 = vnez %v1025
    %v1042 = vsel %vm1026, 16843009, 0
    %v1043 = vsel %vm1027, 16843009, 0
    %v1044 = vsel %vm1028, 16843009, 0
    %v1045 = vsel %vm1029, 16843009, 0
    %v1046 = vsel %vm1030, 16843009, 0
    %v1047 = vsel %vm1031, 16843009, 0
    %v1048 = vsel %vm1032, 16843009, 0
    %v1049 = vsel %vm1033, 16843009, 0
    %v1050 = vsel %vm1034, 16843009, 0
    %v1051 = vsel %vm1035, 16843009, 0
    %v1052 = vsel %vm1036, 16843009, 0
    %v1053 = vsel %vm1037, 16843009, 0
    %v1054 = vsel %vm1038, 16843009, 0
    %v1055 = vsel %vm1039, 16843009, 0
    %v1056 = vsel %vm1040, 16843009, 0
    %v1057 = vsel %vm1041, 16843009, 0
    %v1058 = vunpack.c.0.s8 %v1042
    %v1059 = vunpack.c.0.s8 %v1043
    %v1060 = vunpack.c.0.s8 %v1044
    %v1061 = vunpack.c.0.s8 %v1045
    %v1062 = vunpack.c.0.s8 %v1046
    %v1063 = vunpack.c.0.s8 %v1047
    %v1064 = vunpack.c.0.s8 %v1048
    %v1065 = vunpack.c.0.s8 %v1049
    %v1066 = vunpack.c.0.s8 %v1050
    %v1067 = vunpack.c.0.s8 %v1051
    %v1068 = vunpack.c.0.s8 %v1052
    %v1069 = vunpack.c.0.s8 %v1053
    %v1070 = vunpack.c.0.s8 %v1054
    %v1071 = vunpack.c.0.s8 %v1055
    %v1072 = vunpack.c.0.s8 %v1056
    %v1073 = vunpack.c.0.s8 %v1057
    %vm1074 = vcmp.ne.s32.totalorder %v1058, 0
    %vm1075 = vcmp.ne.s32.totalorder %v1059, 0
    %vm1076 = vcmp.ne.s32.totalorder %v1060, 0
    %vm1077 = vcmp.ne.s32.totalorder %v1061, 0
    %vm1078 = vcmp.ne.s32.totalorder %v1062, 0
    %vm1079 = vcmp.ne.s32.totalorder %v1063, 0
    %vm1080 = vcmp.ne.s32.totalorder %v1064, 0
    %vm1081 = vcmp.ne.s32.totalorder %v1065, 0
    %vm1082 = vcmp.ne.s32.totalorder %v1066, 0
    %vm1083 = vcmp.ne.s32.totalorder %v1067, 0
    %vm1084 = vcmp.ne.s32.totalorder %v1068, 0
    %vm1085 = vcmp.ne.s32.totalorder %v1069, 0
    %vm1086 = vcmp.ne.s32.totalorder %v1070, 0
    %vm1087 = vcmp.ne.s32.totalorder %v1071, 0
    %vm1088 = vcmp.ne.s32.totalorder %v1072, 0
    %vm1089 = vcmp.ne.s32.totalorder %v1073, 0
    %v1090 = vsel %vm1074, 1, 0
    %v1091 = vsel %vm1075, 1, 0
    %v1092 = vsel %vm1076, 1, 0
    %v1093 = vsel %vm1077, 1, 0
    %v1094 = vsel %vm1078, 1, 0
    %v1095 = vsel %vm1079, 1, 0
    %v1096 = vsel %vm1080, 1, 0
    %v1097 = vsel %vm1081, 1, 0
    %v1098 = vsel %vm1082, 1, 0
    %v1099 = vsel %vm1083, 1, 0
    %v1100 = vsel %vm1084, 1, 0
    %v1101 = vsel %vm1085, 1, 0
    %v1102 = vsel %vm1086, 1, 0
    %v1103 = vsel %vm1087, 1, 0
    %v1104 = vsel %vm1088, 1, 0
    %v1105 = vsel %vm1089, 1, 0
    %v1106 = vcvt.s32.f32 %v1090
    %v1107 = vcvt.s32.f32 %v1091
    %v1108 = vcvt.s32.f32 %v1092
    %v1109 = vcvt.s32.f32 %v1093
    %v1110 = vcvt.s32.f32 %v1094
    %v1111 = vcvt.s32.f32 %v1095
    %v1112 = vcvt.s32.f32 %v1096
    %v1113 = vcvt.s32.f32 %v1097
    %v1114 = vcvt.s32.f32 %v1098
    %v1115 = vcvt.s32.f32 %v1099
    %v1116 = vcvt.s32.f32 %v1100
    %v1117 = vcvt.s32.f32 %v1101
    %v1118 = vcvt.s32.f32 %v1102
    %v1119 = vcvt.s32.f32 %v1103
    %v1120 = vcvt.s32.f32 %v1104
    %v1121 = vcvt.s32.f32 %v1105
    %v1124 = vunpack.c.l.b16 %v466
    %v1125 = vunpack.c.l.b16 %v467
    %v1126 = vpack.c.b16 %v1125, %v1124
    %v1130 = vunpack.c.l.b16 %v730
    %v1131 = vunpack.c.l.b16 %v731
    %v1132 = vpack.c.b16 %v1131, %v1130
    %1134 = vmatpush.bf16.xpose.msra.mxu0 0
    %1135 = vmatpush.bf16.xpose.msra.mxu0 0
    %1136 = vmatpush.bf16.xpose.msra.mxu0 0
    %1137 = vmatpush.bf16.xpose.msra.mxu0 0
    %1138 = vmatpush.bf16.xpose.msra.mxu0 0
    %1139 = vmatpush.bf16.xpose.msra.mxu0 0
    %1140 = vmatpush.bf16.xpose.msra.mxu0 0
    %1141 = vmatpush.bf16.xpose.msra.mxu0 %v1132
    %1142 = vmatmul.bf16.gmra.mxu0 %v1126
    %v1143 = vpop.f32.mrf.mxu0
    %v1144 = vadd.f32 0.0, %v1143
    %v1145 = vpop.f32.mrf.mxu0
    %v1146 = vadd.f32 0.0, %v1145
    %1147 = vdwg.mxu0
    %v1150 = vunpack.c.l.b16 %v468
    %v1151 = vunpack.c.l.b16 %v469
    %v1152 = vpack.c.b16 %v1151, %v1150
    %v1156 = vunpack.c.l.b16 %v732
    %v1157 = vunpack.c.l.b16 %v733
    %v1158 = vpack.c.b16 %v1157, %v1156
    %1160 = vmatpush.bf16.xpose.msra.mxu0 0
    %1161 = vmatpush.bf16.xpose.msra.mxu0 0
    %1162 = vmatpush.bf16.xpose.msra.mxu0 0
    %1163 = vmatpush.bf16.xpose.msra.mxu0 0
    %1164 = vmatpush.bf16.xpose.msra.mxu0 0
    %1165 = vmatpush.bf16.xpose.msra.mxu0 0
    %1166 = vmatpush.bf16.xpose.msra.mxu0 0
    %1167 = vmatpush.bf16.xpose.msra.mxu0 %v1158
    %1168 = vmatmul.bf16.gmra.mxu0 %v1152
    %v1169 = vpop.f32.mrf.mxu0
    %v1170 = vadd.f32 0.0, %v1169
    %v1171 = vpop.f32.mrf.mxu0
    %v1172 = vadd.f32 0.0, %v1171
    %1173 = vdwg.mxu0
    %v1176 = vunpack.c.l.b16 %v470
    %v1177 = vunpack.c.l.b16 %v471
    %v1178 = vpack.c.b16 %v1177, %v1176
    %v1182 = vunpack.c.l.b16 %v734
    %v1183 = vunpack.c.l.b16 %v735
    %v1184 = vpack.c.b16 %v1183, %v1182
    %1186 = vmatpush.bf16.xpose.msra.mxu0 0
    %1187 = vmatpush.bf16.xpose.msra.mxu0 0
    %1188 = vmatpush.bf16.xpose.msra.mxu0 0
    %1189 = vmatpush.bf16.xpose.msra.mxu0 0
    %1190 = vmatpush.bf16.xpose.msra.mxu0 0
    %1191 = vmatpush.bf16.xpose.msra.mxu0 0
    %1192 = vmatpush.bf16.xpose.msra.mxu0 0
    %1193 = vmatpush.bf16.xpose.msra.mxu0 %v1184
    %1194 = vmatmul.bf16.gmra.mxu0 %v1178
    %v1195 = vpop.f32.mrf.mxu0
    %v1196 = vadd.f32 0.0, %v1195
    %v1197 = vpop.f32.mrf.mxu0
    %v1198 = vadd.f32 0.0, %v1197
    %1199 = vdwg.mxu0
    %v1202 = vunpack.c.l.b16 %v472
    %v1203 = vunpack.c.l.b16 %v473
    %v1204 = vpack.c.b16 %v1203, %v1202
    %v1208 = vunpack.c.l.b16 %v736
    %v1209 = vunpack.c.l.b16 %v737
    %v1210 = vpack.c.b16 %v1209, %v1208
    %1212 = vmatpush.bf16.xpose.msra.mxu0 0
    %1213 = vmatpush.bf16.xpose.msra.mxu0 0
    %1214 = vmatpush.bf16.xpose.msra.mxu0 0
    %1215 = vmatpush.bf16.xpose.msra.mxu0 0
    %1216 = vmatpush.bf16.xpose.msra.mxu0 0
    %1217 = vmatpush.bf16.xpose.msra.mxu0 0
    %1218 = vmatpush.bf16.xpose.msra.mxu0 0
    %1219 = vmatpush.bf16.xpose.msra.mxu0 %v1210
    %1220 = vmatmul.bf16.gmra.mxu0 %v1204
    %v1221 = vpop.f32.mrf.mxu0
    %v1222 = vadd.f32 0.0, %v1221
    %v1223 = vpop.f32.mrf.mxu0
    %v1224 = vadd.f32 0.0, %v1223
    %1225 = vdwg.mxu0
    %v1228 = vunpack.c.l.b16 %v474
    %v1229 = vunpack.c.l.b16 %v475
    %v1230 = vpack.c.b16 %v1229, %v1228
    %v1234 = vunpack.c.l.b16 %v738
    %v1235 = vunpack.c.l.b16 %v739
    %v1236 = vpack.c.b16 %v1235, %v1234
    %1238 = vmatpush.bf16.xpose.msra.mxu0 0
    %1239 = vmatpush.bf16.xpose.msra.mxu0 0
    %1240 = vmatpush.bf16.xpose.msra.mxu0 0
    %1241 = vmatpush.bf16.xpose.msra.mxu0 0
    %1242 = vmatpush.bf16.xpose.msra.mxu0 0
    %1243 = vmatpush.bf16.xpose.msra.mxu0 0
    %1244 = vmatpush.bf16.xpose.msra.mxu0 0
    %1245 = vmatpush.bf16.xpose.msra.mxu0 %v1236
    %1246 = vmatmul.bf16.gmra.mxu0 %v1230
    %v1247 = vpop.f32.mrf.mxu0
    %v1248 = vadd.f32 0.0, %v1247
    %v1249 = vpop.f32.mrf.mxu0
    %v1250 = vadd.f32 0.0, %v1249
    %1251 = vdwg.mxu0
    %v1254 = vunpack.c.l.b16 %v476
    %v1255 = vunpack.c.l.b16 %v477
    %v1256 = vpack.c.b16 %v1255, %v1254
    %v1260 = vunpack.c.l.b16 %v740
    %v1261 = vunpack.c.l.b16 %v741
    %v1262 = vpack.c.b16 %v1261, %v1260
    %1264 = vmatpush.bf16.xpose.msra.mxu0 0
    %1265 = vmatpush.bf16.xpose.msra.mxu0 0
    %1266 = vmatpush.bf16.xpose.msra.mxu0 0
    %1267 = vmatpush.bf16.xpose.msra.mxu0 0
    %1268 = vmatpush.bf16.xpose.msra.mxu0 0
    %1269 = vmatpush.bf16.xpose.msra.mxu0 0
    %1270 = vmatpush.bf16.xpose.msra.mxu0 0
    %1271 = vmatpush.bf16.xpose.msra.mxu0 %v1262
    %1272 = vmatmul.bf16.gmra.mxu0 %v1256
    %v1273 = vpop.f32.mrf.mxu0
    %v1274 = vadd.f32 0.0, %v1273
    %v1275 = vpop.f32.mrf.mxu0
    %v1276 = vadd.f32 0.0, %v1275
    %1277 = vdwg.mxu0
    %v1280 = vunpack.c.l.b16 %v478
    %v1281 = vunpack.c.l.b16 %v479
    %v1282 = vpack.c.b16 %v1281, %v1280
    %v1286 = vunpack.c.l.b16 %v742
    %v1287 = vunpack.c.l.b16 %v743
    %v1288 = vpack.c.b16 %v1287, %v1286
    %1290 = vmatpush.bf16.xpose.msra.mxu0 0
    %1291 = vmatpush.bf16.xpose.msra.mxu0 0
    %1292 = vmatpush.bf16.xpose.msra.mxu0 0
    %1293 = vmatpush.bf16.xpose.msra.mxu0 0
    %1294 = vmatpush.bf16.xpose.msra.mxu0 0
    %1295 = vmatpush.bf16.xpose.msra.mxu0 0
    %1296 = vmatpush.bf16.xpose.msra.mxu0 0
    %1297 = vmatpush.bf16.xpose.msra.mxu0 %v1288
    %1298 = vmatmul.bf16.gmra.mxu0 %v1282
    %v1299 = vpop.f32.mrf.mxu0
    %v1300 = vadd.f32 0.0, %v1299
    %v1301 = vpop.f32.mrf.mxu0
    %v1302 = vadd.f32 0.0, %v1301
    %1303 = vdwg.mxu0
    %v1306 = vunpack.c.l.b16 %v480
    %v1307 = vunpack.c.l.b16 %v481
    %v1308 = vpack.c.b16 %v1307, %v1306
    %v1312 = vunpack.c.l.b16 %v744
    %v1313 = vunpack.c.l.b16 %v745
    %v1314 = vpack.c.b16 %v1313, %v1312
    %1316 = vmatpush.bf16.xpose.msra.mxu0 0
    %1317 = vmatpush.bf16.xpose.msra.mxu0 0
    %1318 = vmatpush.bf16.xpose.msra.mxu0 0
    %1319 = vmatpush.bf16.xpose.msra.mxu0 0
    %1320 = vmatpush.bf16.xpose.msra.mxu0 0
    %1321 = vmatpush.bf16.xpose.msra.mxu0 0
    %1322 = vmatpush.bf16.xpose.msra.mxu0 0
    %1323 = vmatpush.bf16.xpose.msra.mxu0 %v1314
    %1324 = vmatmul.bf16.gmra.mxu0 %v1308
    %v1325 = vpop.f32.mrf.mxu0
    %v1326 = vadd.f32 0.0, %v1325
    %v1327 = vpop.f32.mrf.mxu0
    %v1328 = vadd.f32 0.0, %v1327
    %1329 = vdwg.mxu0
    %v1330 = vmul.f32 %v1144, %v1106
    %v1331 = vmul.f32 %v1146, %v1107
    %v1332 = vmul.f32 %v1170, %v1108
    %v1333 = vmul.f32 %v1172, %v1109
    %v1334 = vmul.f32 %v1196, %v1110
    %v1335 = vmul.f32 %v1198, %v1111
    %v1336 = vmul.f32 %v1222, %v1112
    %v1337 = vmul.f32 %v1224, %v1113
    %v1338 = vmul.f32 %v1248, %v1114
    %v1339 = vmul.f32 %v1250, %v1115
    %v1340 = vmul.f32 %v1274, %v1116
    %v1341 = vmul.f32 %v1276, %v1117
    %v1342 = vmul.f32 %v1300, %v1118
    %v1343 = vmul.f32 %v1302, %v1119
    %v1344 = vmul.f32 %v1326, %v1120
    %v1345 = vmul.f32 %v1328, %v1121
    %v1346 = vpack.c.bf16 %v1330, %v1330
    %v1347 = vpack.c.bf16 %v1331, %v1331
    %v1348 = vpack.c.bf16 %v1332, %v1332
    %v1349 = vpack.c.bf16 %v1333, %v1333
    %v1350 = vpack.c.bf16 %v1334, %v1334
    %v1351 = vpack.c.bf16 %v1335, %v1335
    %v1352 = vpack.c.bf16 %v1336, %v1336
    %v1353 = vpack.c.bf16 %v1337, %v1337
    %v1354 = vpack.c.bf16 %v1338, %v1338
    %v1355 = vpack.c.bf16 %v1339, %v1339
    %v1356 = vpack.c.bf16 %v1340, %v1340
    %v1357 = vpack.c.bf16 %v1341, %v1341
    %v1358 = vpack.c.bf16 %v1342, %v1342
    %v1359 = vpack.c.bf16 %v1343, %v1343
    %v1360 = vpack.c.bf16 %v1344, %v1344
    %v1361 = vpack.c.bf16 %v1345, %v1345
    %v1362 = vrot.slane %v466, 4
    %v1363 = vrot.slane %v467, 4
    %v1364 = vrot.slane %v730, 4
    %v1365 = vrot.slane %v731, 4
    %v1366 = vunpack.c.l.b16 %v1362
    %v1367 = vunpack.c.l.b16 %v1363
    %v1368 = vpack.c.b16 %v1367, %v1366
    %v1370 = vunpack.c.l.b16 %v1364
    %v1371 = vunpack.c.l.b16 %v1365
    %v1372 = vpack.c.b16 %v1371, %v1370
    %1374 = vmatpush.bf16.xpose.msra.mxu0 0
    %1375 = vmatpush.bf16.xpose.msra.mxu0 0
    %1376 = vmatpush.bf16.xpose.msra.mxu0 0
    %1377 = vmatpush.bf16.xpose.msra.mxu0 0
    %1378 = vmatpush.bf16.xpose.msra.mxu0 0
    %1379 = vmatpush.bf16.xpose.msra.mxu0 0
    %1380 = vmatpush.bf16.xpose.msra.mxu0 0
    %1381 = vmatpush.bf16.xpose.msra.mxu0 %v1372
    %1382 = vmatmul.bf16.gmra.mxu0 %v1368
    %v1383 = vpop.f32.mrf.mxu0
    %v1384 = vadd.f32 0.0, %v1383
    %v1385 = vpop.f32.mrf.mxu0
    %v1386 = vadd.f32 0.0, %v1385
    %1387 = vdwg.mxu0
    %v1388 = vrot.slane %v468, 4
    %v1389 = vrot.slane %v469, 4
    %v1390 = vrot.slane %v732, 4
    %v1391 = vrot.slane %v733, 4
    %v1392 = vunpack.c.l.b16 %v1388
    %v1393 = vunpack.c.l.b16 %v1389
    %v1394 = vpack.c.b16 %v1393, %v1392
    %v1396 = vunpack.c.l.b16 %v1390
    %v1397 = vunpack.c.l.b16 %v1391
    %v1398 = vpack.c.b16 %v1397, %v1396
    %1400 = vmatpush.bf16.xpose.msra.mxu0 0
    %1401 = vmatpush.bf16.xpose.msra.mxu0 0
    %1402 = vmatpush.bf16.xpose.msra.mxu0 0
    %1403 = vmatpush.bf16.xpose.msra.mxu0 0
    %1404 = vmatpush.bf16.xpose.msra.mxu0 0
    %1405 = vmatpush.bf16.xpose.msra.mxu0 0
    %1406 = vmatpush.bf16.xpose.msra.mxu0 0
    %1407 = vmatpush.bf16.xpose.msra.mxu0 %v1398
    %1408 = vmatmul.bf16.gmra.mxu0 %v1394
    %v1409 = vpop.f32.mrf.mxu0
    %v1410 = vadd.f32 0.0, %v1409
    %v1411 = vpop.f32.mrf.mxu0
    %v1412 = vadd.f32 0.0, %v1411
    %1413 = vdwg.mxu0
    %v1414 = vrot.slane %v470, 4
    %v1415 = vrot.slane %v471, 4
    %v1416 = vrot.slane %v734, 4
    %v1417 = vrot.slane %v735, 4
    %v1418 = vunpack.c.l.b16 %v1414
    %v1419 = vunpack.c.l.b16 %v1415
    %v1420 = vpack.c.b16 %v1419, %v1418
    %v1422 = vunpack.c.l.b16 %v1416
    %v1423 = vunpack.c.l.b16 %v1417
    %v1424 = vpack.c.b16 %v1423, %v1422
    %1426 = vmatpush.bf16.xpose.msra.mxu0 0
    %1427 = vmatpush.bf16.xpose.msra.mxu0 0
    %1428 = vmatpush.bf16.xpose.msra.mxu0 0
    %1429 = vmatpush.bf16.xpose.msra.mxu0 0
    %1430 = vmatpush.bf16.xpose.msra.mxu0 0
    %1431 = vmatpush.bf16.xpose.msra.mxu0 0
    %1432 = vmatpush.bf16.xpose.msra.mxu0 0
    %1433 = vmatpush.bf16.xpose.msra.mxu0 %v1424
    %1434 = vmatmul.bf16.gmra.mxu0 %v1420
    %v1435 = vpop.f32.mrf.mxu0
    %v1436 = vadd.f32 0.0, %v1435
    %v1437 = vpop.f32.mrf.mxu0
    %v1438 = vadd.f32 0.0, %v1437
    %1439 = vdwg.mxu0
    %v1440 = vrot.slane %v472, 4
    %v1441 = vrot.slane %v473, 4
    %v1442 = vrot.slane %v736, 4
    %v1443 = vrot.slane %v737, 4
    %v1444 = vunpack.c.l.b16 %v1440
    %v1445 = vunpack.c.l.b16 %v1441
    %v1446 = vpack.c.b16 %v1445, %v1444
    %v1448 = vunpack.c.l.b16 %v1442
    %v1449 = vunpack.c.l.b16 %v1443
    %v1450 = vpack.c.b16 %v1449, %v1448
    %1452 = vmatpush.bf16.xpose.msra.mxu0 0
    %1453 = vmatpush.bf16.xpose.msra.mxu0 0
    %1454 = vmatpush.bf16.xpose.msra.mxu0 0
    %1455 = vmatpush.bf16.xpose.msra.mxu0 0
    %1456 = vmatpush.bf16.xpose.msra.mxu0 0
    %1457 = vmatpush.bf16.xpose.msra.mxu0 0
    %1458 = vmatpush.bf16.xpose.msra.mxu0 0
    %1459 = vmatpush.bf16.xpose.msra.mxu0 %v1450
    %1460 = vmatmul.bf16.gmra.mxu0 %v1446
    %v1461 = vpop.f32.mrf.mxu0
    %v1462 = vadd.f32 0.0, %v1461
    %v1463 = vpop.f32.mrf.mxu0
    %v1464 = vadd.f32 0.0, %v1463
    %1465 = vdwg.mxu0
    %v1466 = vrot.slane %v474, 4
    %v1467 = vrot.slane %v475, 4
    %v1468 = vrot.slane %v738, 4
    %v1469 = vrot.slane %v739, 4
    %v1470 = vunpack.c.l.b16 %v1466
    %v1471 = vunpack.c.l.b16 %v1467
    %v1472 = vpack.c.b16 %v1471, %v1470
    %v1474 = vunpack.c.l.b16 %v1468
    %v1475 = vunpack.c.l.b16 %v1469
    %v1476 = vpack.c.b16 %v1475, %v1474
    %1478 = vmatpush.bf16.xpose.msra.mxu0 0
    %1479 = vmatpush.bf16.xpose.msra.mxu0 0
    %1480 = vmatpush.bf16.xpose.msra.mxu0 0
    %1481 = vmatpush.bf16.xpose.msra.mxu0 0
    %1482 = vmatpush.bf16.xpose.msra.mxu0 0
    %1483 = vmatpush.bf16.xpose.msra.mxu0 0
    %1484 = vmatpush.bf16.xpose.msra.mxu0 0
    %1485 = vmatpush.bf16.xpose.msra.mxu0 %v1476
    %1486 = vmatmul.bf16.gmra.mxu0 %v1472
    %v1487 = vpop.f32.mrf.mxu0
    %v1488 = vadd.f32 0.0, %v1487
    %v1489 = vpop.f32.mrf.mxu0
    %v1490 = vadd.f32 0.0, %v1489
    %1491 = vdwg.mxu0
    %v1492 = vrot.slane %v476, 4
    %v1493 = vrot.slane %v477, 4
    %v1494 = vrot.slane %v740, 4
    %v1495 = vrot.slane %v741, 4
    %v1496 = vunpack.c.l.b16 %v1492
    %v1497 = vunpack.c.l.b16 %v1493
    %v1498 = vpack.c.b16 %v1497, %v1496
    %v1500 = vunpack.c.l.b16 %v1494
    %v1501 = vunpack.c.l.b16 %v1495
    %v1502 = vpack.c.b16 %v1501, %v1500
    %1504 = vmatpush.bf16.xpose.msra.mxu0 0
    %1505 = vmatpush.bf16.xpose.msra.mxu0 0
    %1506 = vmatpush.bf16.xpose.msra.mxu0 0
    %1507 = vmatpush.bf16.xpose.msra.mxu0 0
    %1508 = vmatpush.bf16.xpose.msra.mxu0 0
    %1509 = vmatpush.bf16.xpose.msra.mxu0 0
    %1510 = vmatpush.bf16.xpose.msra.mxu0 0
    %1511 = vmatpush.bf16.xpose.msra.mxu0 %v1502
    %1512 = vmatmul.bf16.gmra.mxu0 %v1498
    %v1513 = vpop.f32.mrf.mxu0
    %v1514 = vadd.f32 0.0, %v1513
    %v1515 = vpop.f32.mrf.mxu0
    %v1516 = vadd.f32 0.0, %v1515
    %1517 = vdwg.mxu0
    %v1518 = vrot.slane %v478, 4
    %v1519 = vrot.slane %v479, 4
    %v1520 = vrot.slane %v742, 4
    %v1521 = vrot.slane %v743, 4
    %v1522 = vunpack.c.l.b16 %v1518
    %v1523 = vunpack.c.l.b16 %v1519
    %v1524 = vpack.c.b16 %v1523, %v1522
    %v1526 = vunpack.c.l.b16 %v1520
    %v1527 = vunpack.c.l.b16 %v1521
    %v1528 = vpack.c.b16 %v1527, %v1526
    %1530 = vmatpush.bf16.xpose.msra.mxu0 0
    %1531 = vmatpush.bf16.xpose.msra.mxu0 0
    %1532 = vmatpush.bf16.xpose.msra.mxu0 0
    %1533 = vmatpush.bf16.xpose.msra.mxu0 0
    %1534 = vmatpush.bf16.xpose.msra.mxu0 0
    %1535 = vmatpush.bf16.xpose.msra.mxu0 0
    %1536 = vmatpush.bf16.xpose.msra.mxu0 0
    %1537 = vmatpush.bf16.xpose.msra.mxu0 %v1528
    %1538 = vmatmul.bf16.gmra.mxu0 %v1524
    %v1539 = vpop.f32.mrf.mxu0
    %v1540 = vadd.f32 0.0, %v1539
    %v1541 = vpop.f32.mrf.mxu0
    %v1542 = vadd.f32 0.0, %v1541
    %1543 = vdwg.mxu0
    %v1544 = vrot.slane %v480, 4
    %v1545 = vrot.slane %v481, 4
    %v1546 = vrot.slane %v744, 4
    %v1547 = vrot.slane %v745, 4
    %v1548 = vunpack.c.l.b16 %v1544
    %v1549 = vunpack.c.l.b16 %v1545
    %v1550 = vpack.c.b16 %v1549, %v1548
    %v1552 = vunpack.c.l.b16 %v1546
    %v1553 = vunpack.c.l.b16 %v1547
    %v1554 = vpack.c.b16 %v1553, %v1552
    %1556 = vmatpush.bf16.xpose.msra.mxu0 0
    %1557 = vmatpush.bf16.xpose.msra.mxu0 0
    %1558 = vmatpush.bf16.xpose.msra.mxu0 0
    %1559 = vmatpush.bf16.xpose.msra.mxu0 0
    %1560 = vmatpush.bf16.xpose.msra.mxu0 0
    %1561 = vmatpush.bf16.xpose.msra.mxu0 0
    %1562 = vmatpush.bf16.xpose.msra.mxu0 0
    %1563 = vmatpush.bf16.xpose.msra.mxu0 %v1554
    %1564 = vmatmul.bf16.gmra.mxu0 %v1550
    %v1565 = vpop.f32.mrf.mxu0
    %v1566 = vadd.f32 0.0, %v1565
    %v1567 = vpop.f32.mrf.mxu0
    %v1568 = vadd.f32 0.0, %v1567
    %1569 = vdwg.mxu0
    %v1570 = vmul.f32 %v1384, %v1106
    %v1571 = vmul.f32 %v1386, %v1107
    %v1572 = vmul.f32 %v1410, %v1108
    %v1573 = vmul.f32 %v1412, %v1109
    %v1574 = vmul.f32 %v1436, %v1110
    %v1575 = vmul.f32 %v1438, %v1111
    %v1576 = vmul.f32 %v1462, %v1112
    %v1577 = vmul.f32 %v1464, %v1113
    %v1578 = vmul.f32 %v1488, %v1114
    %v1579 = vmul.f32 %v1490, %v1115
    %v1580 = vmul.f32 %v1514, %v1116
    %v1581 = vmul.f32 %v1516, %v1117
    %v1582 = vmul.f32 %v1540, %v1118
    %v1583 = vmul.f32 %v1542, %v1119
    %v1584 = vmul.f32 %v1566, %v1120
    %v1585 = vmul.f32 %v1568, %v1121
    %v1586 = vpack.c.bf16 %v1570, %v1570
    %v1587 = vpack.c.bf16 %v1571, %v1571
    %v1588 = vpack.c.bf16 %v1572, %v1572
    %v1589 = vpack.c.bf16 %v1573, %v1573
    %v1590 = vpack.c.bf16 %v1574, %v1574
    %v1591 = vpack.c.bf16 %v1575, %v1575
    %v1592 = vpack.c.bf16 %v1576, %v1576
    %v1593 = vpack.c.bf16 %v1577, %v1577
    %v1594 = vpack.c.bf16 %v1578, %v1578
    %v1595 = vpack.c.bf16 %v1579, %v1579
    %v1596 = vpack.c.bf16 %v1580, %v1580
    %v1597 = vpack.c.bf16 %v1581, %v1581
    %v1598 = vpack.c.bf16 %v1582, %v1582
    %v1599 = vpack.c.bf16 %v1583, %v1583
    %v1600 = vpack.c.bf16 %v1584, %v1584
    %v1601 = vpack.c.bf16 %v1585, %v1585
    %v1604 = vrot.slane %v994, 4
    %v1605 = vrot.slane %v995, 4
    %v1608 = vunpack.c.l.b16 %v1586
    %v1609 = vunpack.c.l.b16 %v1587
    %v1610 = vpack.c.b16 %v1609, %v1608
    %v1611 = vunpack.c.l.b16 %v1604
    %v1612 = vunpack.c.l.b16 %v1605
    %v1613 = vpack.c.b16 %v1612, %v1611
    %vm1615 = vcmask 130048
    %v1617 = vsel %vm1615, %v1610, 0
    %1619 = vmatpush.bf16.msra.mxu0 0
    %1620 = vmatpush.bf16.msra.mxu0 0
    %1621 = vmatpush.bf16.msra.mxu0 0
    %1622 = vmatpush.bf16.msra.mxu0 0
    %1623 = vmatpush.bf16.msra.mxu0 0
    %1624 = vmatpush.bf16.msra.mxu0 0
    %1625 = vmatpush.bf16.msra.mxu0 0
    %1626 = vmatpush.bf16.msra.mxu0 %v1613
    %1627 = vmatmul.bf16.gmra.mxu0 %v1617
    %v1628 = vpop.f32.mrf.mxu0
    %v1629 = vadd.f32 0.0, %v1628
    %v1630 = vpop.f32.mrf.mxu0
    %v1631 = vadd.f32 0.0, %v1630
    %1632 = vdwg.mxu0
    %v1635 = vrot.slane %v996, 4
    %v1636 = vrot.slane %v997, 4
    %v1639 = vunpack.c.l.b16 %v1588
    %v1640 = vunpack.c.l.b16 %v1589
    %v1641 = vpack.c.b16 %v1640, %v1639
    %v1642 = vunpack.c.l.b16 %v1635
    %v1643 = vunpack.c.l.b16 %v1636
    %v1644 = vpack.c.b16 %v1643, %v1642
    %v1647 = vsel %vm1615, %v1641, 0
    %1649 = vmatpush.bf16.msra.mxu0 0
    %1650 = vmatpush.bf16.msra.mxu0 0
    %1651 = vmatpush.bf16.msra.mxu0 0
    %1652 = vmatpush.bf16.msra.mxu0 0
    %1653 = vmatpush.bf16.msra.mxu0 0
    %1654 = vmatpush.bf16.msra.mxu0 0
    %1655 = vmatpush.bf16.msra.mxu0 0
    %1656 = vmatpush.bf16.msra.mxu0 %v1644
    %1657 = vmatmul.bf16.gmra.mxu0 %v1647
    %v1658 = vpop.f32.mrf.mxu0
    %v1659 = vadd.f32 0.0, %v1658
    %v1660 = vpop.f32.mrf.mxu0
    %v1661 = vadd.f32 0.0, %v1660
    %1662 = vdwg.mxu0
    %v1665 = vrot.slane %v998, 4
    %v1666 = vrot.slane %v999, 4
    %v1669 = vunpack.c.l.b16 %v1590
    %v1670 = vunpack.c.l.b16 %v1591
    %v1671 = vpack.c.b16 %v1670, %v1669
    %v1672 = vunpack.c.l.b16 %v1665
    %v1673 = vunpack.c.l.b16 %v1666
    %v1674 = vpack.c.b16 %v1673, %v1672
    %v1677 = vsel %vm1615, %v1671, 0
    %1679 = vmatpush.bf16.msra.mxu0 0
    %1680 = vmatpush.bf16.msra.mxu0 0
    %1681 = vmatpush.bf16.msra.mxu0 0
    %1682 = vmatpush.bf16.msra.mxu0 0
    %1683 = vmatpush.bf16.msra.mxu0 0
    %1684 = vmatpush.bf16.msra.mxu0 0
    %1685 = vmatpush.bf16.msra.mxu0 0
    %1686 = vmatpush.bf16.msra.mxu0 %v1674
    %1687 = vmatmul.bf16.gmra.mxu0 %v1677
    %v1688 = vpop.f32.mrf.mxu0
    %v1689 = vadd.f32 0.0, %v1688
    %v1690 = vpop.f32.mrf.mxu0
    %v1691 = vadd.f32 0.0, %v1690
    %1692 = vdwg.mxu0
    %v1695 = vrot.slane %v1000, 4
    %v1696 = vrot.slane %v1001, 4
    %v1699 = vunpack.c.l.b16 %v1592
    %v1700 = vunpack.c.l.b16 %v1593
    %v1701 = vpack.c.b16 %v1700, %v1699
    %v1702 = vunpack.c.l.b16 %v1695
    %v1703 = vunpack.c.l.b16 %v1696
    %v1704 = vpack.c.b16 %v1703, %v1702
    %v1707 = vsel %vm1615, %v1701, 0
    %1709 = vmatpush.bf16.msra.mxu0 0
    %1710 = vmatpush.bf16.msra.mxu0 0
    %1711 = vmatpush.bf16.msra.mxu0 0
    %1712 = vmatpush.bf16.msra.mxu0 0
    %1713 = vmatpush.bf16.msra.mxu0 0
    %1714 = vmatpush.bf16.msra.mxu0 0
    %1715 = vmatpush.bf16.msra.mxu0 0
    %1716 = vmatpush.bf16.msra.mxu0 %v1704
    %1717 = vmatmul.bf16.gmra.mxu0 %v1707
    %v1718 = vpop.f32.mrf.mxu0
    %v1719 = vadd.f32 0.0, %v1718
    %v1720 = vpop.f32.mrf.mxu0
    %v1721 = vadd.f32 0.0, %v1720
    %1722 = vdwg.mxu0
    %v1725 = vrot.slane %v1002, 4
    %v1726 = vrot.slane %v1003, 4
    %v1729 = vunpack.c.l.b16 %v1594
    %v1730 = vunpack.c.l.b16 %v1595
    %v1731 = vpack.c.b16 %v1730, %v1729
    %v1732 = vunpack.c.l.b16 %v1725
    %v1733 = vunpack.c.l.b16 %v1726
    %v1734 = vpack.c.b16 %v1733, %v1732
    %v1737 = vsel %vm1615, %v1731, 0
    %1739 = vmatpush.bf16.msra.mxu0 0
    %1740 = vmatpush.bf16.msra.mxu0 0
    %1741 = vmatpush.bf16.msra.mxu0 0
    %1742 = vmatpush.bf16.msra.mxu0 0
    %1743 = vmatpush.bf16.msra.mxu0 0
    %1744 = vmatpush.bf16.msra.mxu0 0
    %1745 = vmatpush.bf16.msra.mxu0 0
    %1746 = vmatpush.bf16.msra.mxu0 %v1734
    %1747 = vmatmul.bf16.gmra.mxu0 %v1737
    %v1748 = vpop.f32.mrf.mxu0
    %v1749 = vadd.f32 0.0, %v1748
    %v1750 = vpop.f32.mrf.mxu0
    %v1751 = vadd.f32 0.0, %v1750
    %1752 = vdwg.mxu0
    %v1755 = vrot.slane %v1004, 4
    %v1756 = vrot.slane %v1005, 4
    %v1759 = vunpack.c.l.b16 %v1596
    %v1760 = vunpack.c.l.b16 %v1597
    %v1761 = vpack.c.b16 %v1760, %v1759
    %v1762 = vunpack.c.l.b16 %v1755
    %v1763 = vunpack.c.l.b16 %v1756
    %v1764 = vpack.c.b16 %v1763, %v1762
    %v1767 = vsel %vm1615, %v1761, 0
    %1769 = vmatpush.bf16.msra.mxu0 0
    %1770 = vmatpush.bf16.msra.mxu0 0
    %1771 = vmatpush.bf16.msra.mxu0 0
    %1772 = vmatpush.bf16.msra.mxu0 0
    %1773 = vmatpush.bf16.msra.mxu0 0
    %1774 = vmatpush.bf16.msra.mxu0 0
    %1775 = vmatpush.bf16.msra.mxu0 0
    %1776 = vmatpush.bf16.msra.mxu0 %v1764
    %1777 = vmatmul.bf16.gmra.mxu0 %v1767
    %v1778 = vpop.f32.mrf.mxu0
    %v1779 = vadd.f32 0.0, %v1778
    %v1780 = vpop.f32.mrf.mxu0
    %v1781 = vadd.f32 0.0, %v1780
    %1782 = vdwg.mxu0
    %v1785 = vrot.slane %v1006, 4
    %v1786 = vrot.slane %v1007, 4
    %v1789 = vunpack.c.l.b16 %v1598
    %v1790 = vunpack.c.l.b16 %v1599
    %v1791 = vpack.c.b16 %v1790, %v1789
    %v1792 = vunpack.c.l.b16 %v1785
    %v1793 = vunpack.c.l.b16 %v1786
    %v1794 = vpack.c.b16 %v1793, %v1792
    %v1797 = vsel %vm1615, %v1791, 0
    %1799 = vmatpush.bf16.msra.mxu0 0
    %1800 = vmatpush.bf16.msra.mxu0 0
    %1801 = vmatpush.bf16.msra.mxu0 0
    %1802 = vmatpush.bf16.msra.mxu0 0
    %1803 = vmatpush.bf16.msra.mxu0 0
    %1804 = vmatpush.bf16.msra.mxu0 0
    %1805 = vmatpush.bf16.msra.mxu0 0
    %1806 = vmatpush.bf16.msra.mxu0 %v1794
    %1807 = vmatmul.bf16.gmra.mxu0 %v1797
    %v1808 = vpop.f32.mrf.mxu0
    %v1809 = vadd.f32 0.0, %v1808
    %v1810 = vpop.f32.mrf.mxu0
    %v1811 = vadd.f32 0.0, %v1810
    %1812 = vdwg.mxu0
    %v1815 = vrot.slane %v1008, 4
    %v1816 = vrot.slane %v1009, 4
    %v1819 = vunpack.c.l.b16 %v1600
    %v1820 = vunpack.c.l.b16 %v1601
    %v1821 = vpack.c.b16 %v1820, %v1819
    %v1822 = vunpack.c.l.b16 %v1815
    %v1823 = vunpack.c.l.b16 %v1816
    %v1824 = vpack.c.b16 %v1823, %v1822
    %v1827 = vsel %vm1615, %v1821, 0
    %1829 = vmatpush.bf16.msra.mxu0 0
    %1830 = vmatpush.bf16.msra.mxu0 0
    %1831 = vmatpush.bf16.msra.mxu0 0
    %1832 = vmatpush.bf16.msra.mxu0 0
    %1833 = vmatpush.bf16.msra.mxu0 0
    %1834 = vmatpush.bf16.msra.mxu0 0
    %1835 = vmatpush.bf16.msra.mxu0 0
    %1836 = vmatpush.bf16.msra.mxu0 %v1824
    %1837 = vmatmul.bf16.gmra.mxu0 %v1827
    %v1838 = vpop.f32.mrf.mxu0
    %v1839 = vadd.f32 0.0, %v1838
    %v1840 = vpop.f32.mrf.mxu0
    %v1841 = vadd.f32 0.0, %v1840
    %1842 = vdwg.mxu0
    %v1845 = vunpack.c.l.b16 %v1346
    %v1846 = vunpack.c.l.b16 %v1347
    %v1847 = vpack.c.b16 %v1846, %v1845
    %v1848 = vunpack.c.l.b16 %v994
    %v1849 = vunpack.c.l.b16 %v995
    %v1850 = vpack.c.b16 %v1849, %v1848
    %v1853 = vsel %vm1615, %v1847, 0
    %1855 = vmatpush.bf16.msra.mxu0 0
    %1856 = vmatpush.bf16.msra.mxu0 0
    %1857 = vmatpush.bf16.msra.mxu0 0
    %1858 = vmatpush.bf16.msra.mxu0 0
    %1859 = vmatpush.bf16.msra.mxu0 0
    %1860 = vmatpush.bf16.msra.mxu0 0
    %1861 = vmatpush.bf16.msra.mxu0 0
    %1862 = vmatpush.bf16.msra.mxu0 %v1850
    %1863 = vmatmul.bf16.gmra.mxu0 %v1853
    %v1864 = vpop.f32.mrf.mxu0
    %v1865 = vadd.f32 %v1629, %v1864
    %v1866 = vpop.f32.mrf.mxu0
    %v1867 = vadd.f32 %v1631, %v1866
    %1868 = vdwg.mxu0
    %v1871 = vunpack.c.l.b16 %v1348
    %v1872 = vunpack.c.l.b16 %v1349
    %v1873 = vpack.c.b16 %v1872, %v1871
    %v1874 = vunpack.c.l.b16 %v996
    %v1875 = vunpack.c.l.b16 %v997
    %v1876 = vpack.c.b16 %v1875, %v1874
    %v1879 = vsel %vm1615, %v1873, 0
    %1881 = vmatpush.bf16.msra.mxu0 0
    %1882 = vmatpush.bf16.msra.mxu0 0
    %1883 = vmatpush.bf16.msra.mxu0 0
    %1884 = vmatpush.bf16.msra.mxu0 0
    %1885 = vmatpush.bf16.msra.mxu0 0
    %1886 = vmatpush.bf16.msra.mxu0 0
    %1887 = vmatpush.bf16.msra.mxu0 0
    %1888 = vmatpush.bf16.msra.mxu0 %v1876
    %1889 = vmatmul.bf16.gmra.mxu0 %v1879
    %v1890 = vpop.f32.mrf.mxu0
    %v1891 = vadd.f32 %v1659, %v1890
    %v1892 = vpop.f32.mrf.mxu0
    %v1893 = vadd.f32 %v1661, %v1892
    %1894 = vdwg.mxu0
    %v1897 = vunpack.c.l.b16 %v1350
    %v1898 = vunpack.c.l.b16 %v1351
    %v1899 = vpack.c.b16 %v1898, %v1897
    %v1900 = vunpack.c.l.b16 %v998
    %v1901 = vunpack.c.l.b16 %v999
    %v1902 = vpack.c.b16 %v1901, %v1900
    %v1905 = vsel %vm1615, %v1899, 0
    %1907 = vmatpush.bf16.msra.mxu0 0
    %1908 = vmatpush.bf16.msra.mxu0 0
    %1909 = vmatpush.bf16.msra.mxu0 0
    %1910 = vmatpush.bf16.msra.mxu0 0
    %1911 = vmatpush.bf16.msra.mxu0 0
    %1912 = vmatpush.bf16.msra.mxu0 0
    %1913 = vmatpush.bf16.msra.mxu0 0
    %1914 = vmatpush.bf16.msra.mxu0 %v1902
    %1915 = vmatmul.bf16.gmra.mxu0 %v1905
    %v1916 = vpop.f32.mrf.mxu0
    %v1917 = vadd.f32 %v1689, %v1916
    %v1918 = vpop.f32.mrf.mxu0
    %v1919 = vadd.f32 %v1691, %v1918
    %1920 = vdwg.mxu0
    %v1923 = vunpack.c.l.b16 %v1352
    %v1924 = vunpack.c.l.b16 %v1353
    %v1925 = vpack.c.b16 %v1924, %v1923
    %v1926 = vunpack.c.l.b16 %v1000
    %v1927 = vunpack.c.l.b16 %v1001
    %v1928 = vpack.c.b16 %v1927, %v1926
    %v1931 = vsel %vm1615, %v1925, 0
    %1933 = vmatpush.bf16.msra.mxu0 0
    %1934 = vmatpush.bf16.msra.mxu0 0
    %1935 = vmatpush.bf16.msra.mxu0 0
    %1936 = vmatpush.bf16.msra.mxu0 0
    %1937 = vmatpush.bf16.msra.mxu0 0
    %1938 = vmatpush.bf16.msra.mxu0 0
    %1939 = vmatpush.bf16.msra.mxu0 0
    %1940 = vmatpush.bf16.msra.mxu0 %v1928
    %1941 = vmatmul.bf16.gmra.mxu0 %v1931
    %v1942 = vpop.f32.mrf.mxu0
    %v1943 = vadd.f32 %v1719, %v1942
    %v1944 = vpop.f32.mrf.mxu0
    %v1945 = vadd.f32 %v1721, %v1944
    %1946 = vdwg.mxu0
    %v1949 = vunpack.c.l.b16 %v1354
    %v1950 = vunpack.c.l.b16 %v1355
    %v1951 = vpack.c.b16 %v1950, %v1949
    %v1952 = vunpack.c.l.b16 %v1002
    %v1953 = vunpack.c.l.b16 %v1003
    %v1954 = vpack.c.b16 %v1953, %v1952
    %v1957 = vsel %vm1615, %v1951, 0
    %1959 = vmatpush.bf16.msra.mxu0 0
    %1960 = vmatpush.bf16.msra.mxu0 0
    %1961 = vmatpush.bf16.msra.mxu0 0
    %1962 = vmatpush.bf16.msra.mxu0 0
    %1963 = vmatpush.bf16.msra.mxu0 0
    %1964 = vmatpush.bf16.msra.mxu0 0
    %1965 = vmatpush.bf16.msra.mxu0 0
    %1966 = vmatpush.bf16.msra.mxu0 %v1954
    %1967 = vmatmul.bf16.gmra.mxu0 %v1957
    %v1968 = vpop.f32.mrf.mxu0
    %v1969 = vadd.f32 %v1749, %v1968
    %v1970 = vpop.f32.mrf.mxu0
    %v1971 = vadd.f32 %v1751, %v1970
    %1972 = vdwg.mxu0
    %v1975 = vunpack.c.l.b16 %v1356
    %v1976 = vunpack.c.l.b16 %v1357
    %v1977 = vpack.c.b16 %v1976, %v1975
    %v1978 = vunpack.c.l.b16 %v1004
    %v1979 = vunpack.c.l.b16 %v1005
    %v1980 = vpack.c.b16 %v1979, %v1978
    %v1983 = vsel %vm1615, %v1977, 0
    %1985 = vmatpush.bf16.msra.mxu0 0
    %1986 = vmatpush.bf16.msra.mxu0 0
    %1987 = vmatpush.bf16.msra.mxu0 0
    %1988 = vmatpush.bf16.msra.mxu0 0
    %1989 = vmatpush.bf16.msra.mxu0 0
    %1990 = vmatpush.bf16.msra.mxu0 0
    %1991 = vmatpush.bf16.msra.mxu0 0
    %1992 = vmatpush.bf16.msra.mxu0 %v1980
    %1993 = vmatmul.bf16.gmra.mxu0 %v1983
    %v1994 = vpop.f32.mrf.mxu0
    %v1995 = vadd.f32 %v1779, %v1994
    %v1996 = vpop.f32.mrf.mxu0
    %v1997 = vadd.f32 %v1781, %v1996
    %1998 = vdwg.mxu0
    %v2001 = vunpack.c.l.b16 %v1358
    %v2002 = vunpack.c.l.b16 %v1359
    %v2003 = vpack.c.b16 %v2002, %v2001
    %v2004 = vunpack.c.l.b16 %v1006
    %v2005 = vunpack.c.l.b16 %v1007
    %v2006 = vpack.c.b16 %v2005, %v2004
    %v2009 = vsel %vm1615, %v2003, 0
    %2011 = vmatpush.bf16.msra.mxu0 0
    %2012 = vmatpush.bf16.msra.mxu0 0
    %2013 = vmatpush.bf16.msra.mxu0 0
    %2014 = vmatpush.bf16.msra.mxu0 0
    %2015 = vmatpush.bf16.msra.mxu0 0
    %2016 = vmatpush.bf16.msra.mxu0 0
    %2017 = vmatpush.bf16.msra.mxu0 0
    %2018 = vmatpush.bf16.msra.mxu0 %v2006
    %2019 = vmatmul.bf16.gmra.mxu0 %v2009
    %v2020 = vpop.f32.mrf.mxu0
    %v2021 = vadd.f32 %v1809, %v2020
    %v2022 = vpop.f32.mrf.mxu0
    %v2023 = vadd.f32 %v1811, %v2022
    %2024 = vdwg.mxu0
    %v2027 = vunpack.c.l.b16 %v1360
    %v2028 = vunpack.c.l.b16 %v1361
    %v2029 = vpack.c.b16 %v2028, %v2027
    %v2030 = vunpack.c.l.b16 %v1008
    %v2031 = vunpack.c.l.b16 %v1009
    %v2032 = vpack.c.b16 %v2031, %v2030
    %v2035 = vsel %vm1615, %v2029, 0
    %2037 = vmatpush.bf16.msra.mxu0 0
    %2038 = vmatpush.bf16.msra.mxu0 0
    %2039 = vmatpush.bf16.msra.mxu0 0
    %2040 = vmatpush.bf16.msra.mxu0 0
    %2041 = vmatpush.bf16.msra.mxu0 0
    %2042 = vmatpush.bf16.msra.mxu0 0
    %2043 = vmatpush.bf16.msra.mxu0 0
    %2044 = vmatpush.bf16.msra.mxu0 %v2032
    %2045 = vmatmul.bf16.gmra.mxu0 %v2035
    %v2046 = vpop.f32.mrf.mxu0
    %v2047 = vadd.f32 %v1839, %v2046
    %v2048 = vpop.f32.mrf.mxu0
    %v2049 = vadd.f32 %v1841, %v2048
    %2050 = vdwg.mxu0
    %v2051 = vpack.c.bf16 %v1867, %v1865
    %v2052 = vpack.c.bf16 %v1893, %v1891
    %v2053 = vpack.c.bf16 %v1919, %v1917
    %v2054 = vpack.c.bf16 %v1945, %v1943
    %v2055 = vpack.c.bf16 %v1971, %v1969
    %v2056 = vpack.c.bf16 %v1997, %v1995
    %v2057 = vpack.c.bf16 %v2023, %v2021
    %v2058 = vpack.c.bf16 %v2049, %v2047
    %v2059 = vld [vmem:[#allocation14] sm:$0xf]
    %v2060 = vld [vmem:[#allocation14 + $0x4] sm:$0xf]
    %v2061 = vld [vmem:[#allocation14 + $0x8] sm:$0xf]
    %v2062 = vld [vmem:[#allocation14 + $0xc] sm:$0xf]
    %v2063 = vld [vmem:[#allocation14 + $0x10] sm:$0xf]
    %v2064 = vld [vmem:[#allocation14 + $0x14] sm:$0xf]
    %v2065 = vld [vmem:[#allocation14 + $0x18] sm:$0xf]
    %v2066 = vld [vmem:[#allocation14 + $0x1c] sm:$0xf]
    %v2067 = vld [vmem:[#allocation14 + $0x20] sm:$0xf]
    %v2068 = vld [vmem:[#allocation14 + $0x24] sm:$0xf]
    %v2069 = vld [vmem:[#allocation14 + $0x28] sm:$0xf]
    %v2070 = vld [vmem:[#allocation14 + $0x2c] sm:$0xf]
    %v2071 = vld [vmem:[#allocation14 + $0x30] sm:$0xf]
    %v2072 = vld [vmem:[#allocation14 + $0x34] sm:$0xf]
    %v2073 = vld [vmem:[#allocation14 + $0x38] sm:$0xf]
    %v2074 = vld [vmem:[#allocation14 + $0x3c] sm:$0xf]
    %v2075 = vld [vmem:[%s11] sm:$0x1]
    %v2077 = vperm.slane %v2075, 0
    %v2095 = vunpack.c.l.b16 %v2059
    %v2096 = vunpack.c.l.b16 %v2060
    %v2097 = vunpack.c.l.b16 %v2061
    %v2098 = vunpack.c.l.b16 %v2062
    %v2099 = vunpack.c.l.b16 %v2063
    %v2100 = vunpack.c.l.b16 %v2064
    %v2101 = vunpack.c.l.b16 %v2065
    %v2102 = vunpack.c.l.b16 %v2066
    %v2103 = vunpack.c.l.b16 %v2067
    %v2104 = vunpack.c.l.b16 %v2068
    %v2105 = vunpack.c.l.b16 %v2069
    %v2106 = vunpack.c.l.b16 %v2070
    %v2107 = vunpack.c.l.b16 %v2071
    %v2108 = vunpack.c.l.b16 %v2072
    %v2109 = vunpack.c.l.b16 %v2073
    %v2110 = vunpack.c.l.b16 %v2074
    %v2111 = vpack.c.b16 %v2096, %v2095
    %v2112 = vpack.c.b16 %v2098, %v2097
    %v2113 = vpack.c.b16 %v2100, %v2099
    %v2114 = vpack.c.b16 %v2102, %v2101
    %v2115 = vpack.c.b16 %v2104, %v2103
    %v2116 = vpack.c.b16 %v2106, %v2105
    %v2117 = vpack.c.b16 %v2108, %v2107
    %v2118 = vpack.c.b16 %v2110, %v2109
    %2127 = vmatpush.bf16.msra.mxu0 %v2118
    %2128 = vmatpush.bf16.msra.mxu0 %v2117
    %2129 = vmatpush.bf16.msra.mxu0 %v2116
    %2130 = vmatpush.bf16.msra.mxu0 %v2115
    %2131 = vmatpush.bf16.msra.mxu0 %v2114
    %2132 = vmatpush.bf16.msra.mxu0 %v2113
    %2133 = vmatpush.bf16.msra.mxu0 %v2112
    %2134 = vmatpush.bf16.msra.mxu0 %v2111
    %2135 = vmatmul.bf16.gmra.mxu0 %v2051
    %v2136 = vpop.f32.mrf.mxu0
    %v2137 = vadd.f32 %v2077, %v2136
    %v2138 = vpop.f32.mrf.mxu0
    %v2139 = vadd.f32 %v2077, %v2138
    %2140 = vmatmul.bf16.gmra.mxu0 %v2052
    %v2141 = vpop.f32.mrf.mxu0
    %v2142 = vadd.f32 %v2077, %v2141
    %v2143 = vpop.f32.mrf.mxu0
    %v2144 = vadd.f32 %v2077, %v2143
    %2145 = vmatmul.bf16.gmra.mxu0 %v2053
    %v2146 = vpop.f32.mrf.mxu0
    %v2147 = vadd.f32 %v2077, %v2146
    %v2148 = vpop.f32.mrf.mxu0
    %v2149 = vadd.f32 %v2077, %v2148
    %2150 = vmatmul.bf16.gmra.mxu0 %v2054
    %v2151 = vpop.f32.mrf.mxu0
    %v2152 = vadd.f32 %v2077, %v2151
    %v2153 = vpop.f32.mrf.mxu0
    %v2154 = vadd.f32 %v2077, %v2153
    %2155 = vmatmul.bf16.gmra.mxu0 %v2055
    %v2156 = vpop.f32.mrf.mxu0
    %v2157 = vadd.f32 %v2077, %v2156
    %v2158 = vpop.f32.mrf.mxu0
    %v2159 = vadd.f32 %v2077, %v2158
    %2160 = vmatmul.bf16.gmra.mxu0 %v2056
    %v2161 = vpop.f32.mrf.mxu0
    %v2162 = vadd.f32 %v2077, %v2161
    %v2163 = vpop.f32.mrf.mxu0
    %v2164 = vadd.f32 %v2077, %v2163
    %2165 = vmatmul.bf16.gmra.mxu0 %v2057
    %v2166 = vpop.f32.mrf.mxu0
    %v2167 = vadd.f32 %v2077, %v2166
    %v2168 = vpop.f32.mrf.mxu0
    %v2169 = vadd.f32 %v2077, %v2168
    %2170 = vmatmul.bf16.gmra.mxu0 %v2058
    %v2171 = vpop.f32.mrf.mxu0
    %v2172 = vadd.f32 %v2077, %v2171
    %v2173 = vpop.f32.mrf.mxu0
    %v2174 = vadd.f32 %v2077, %v2173
    %2175 = vdwg.mxu0
    %2176 = vst [vmem:[#allocation16] sm:$0xff] %v2137
    %2177 = vst [vmem:[#allocation16 + $0x8] sm:$0xff] %v2139
    %2178 = vst [vmem:[#allocation16 + $0x10] sm:$0xff] %v2142
    %2179 = vst [vmem:[#allocation16 + $0x18] sm:$0xff] %v2144
    %2180 = vst [vmem:[#allocation16 + $0x20] sm:$0xff] %v2147
    %2181 = vst [vmem:[#allocation16 + $0x28] sm:$0xff] %v2149
    %2182 = vst [vmem:[#allocation16 + $0x30] sm:$0xff] %v2152
    %2183 = vst [vmem:[#allocation16 + $0x38] sm:$0xff] %v2154
    %2184 = vst [vmem:[#allocation16 + $0x40] sm:$0xff] %v2157
    %2185 = vst [vmem:[#allocation16 + $0x48] sm:$0xff] %v2159
    %2186 = vst [vmem:[#allocation16 + $0x50] sm:$0xff] %v2162
    %2187 = vst [vmem:[#allocation16 + $0x58] sm:$0xff] %v2164
    %2188 = vst [vmem:[#allocation16 + $0x60] sm:$0xff] %v2167
    %2189 = vst [vmem:[#allocation16 + $0x68] sm:$0xff] %v2169
    %2190 = vst [vmem:[#allocation16 + $0x70] sm:$0xff] %v2172
    %2191 = vst [vmem:[#allocation16 + $0x78] sm:$0xff] %v2174
    // Predicated region
    $region82: #{tpu_custom_call.1} parent=1 // pred_check
      _
    $region83: #{tpu_custom_call.1} parent=1 // pred_check_branch
      %2193 = sbr.rel (0) target = $region85
    $region84: #{tpu_custom_call.1} parent=1 // pred_region
      %2195 = vsyncadd [#allocation4], 0
      %s2196 = sshll.u32 [#allocation16], 4
      %s2197 = int_to_ptr.vmem [resolvable:$true] %s2196
      %s2198 = sshll.u32 %s12, 4
      %s2199 = int_to_ptr.hbm [resolvable:$true] %s2198
      %2204 = dma.vmem_to_hbm [thread:$0]  %s2197, 2048, %s2199, [#allocation4], 128, 128, 8
    $region85: #{tpu_custom_call.1} parent=1 // pred_fallthru
      _
    // Predicated region
    $region86: #{tpu_custom_call.1} parent=1 // pred_check
      _
    $region87: #{tpu_custom_call.1} parent=1 // pred_check_branch
      %2206 = sbr.rel (0) target = $region89
    $region88: #{tpu_custom_call.1} parent=1 // pred_region
      %2208 = dma.done [#allocation4], 2048
    $region89: #{tpu_custom_call.1} parent=1 // pred_fallthru
      _
    %2209 = vsyncpa [#allocation3], 1
    %2210 = vsyncpa [#allocation6], 1
    %2211 = vsyncpa [#allocation9], 1
    %2212 = vsyncpa [#allocation12], 1
    %2213 = vsyncpa [#allocation15], 1
    %2214 = vsyncpa [#allocation4], 1

</llo_original>
